<compile_context>
chip_gen: v7x
topology: tpu7x:2x2x1
jax: 0.10.0
libtpu: 0.0.40
codegen_flags: <defaults>
</compile_context>

<pallas_src>
import jax
import jax.numpy as jnp
from jax.experimental import pallas as pl
from jax.experimental.pallas import tpu as pltpu

LEN_SEQ = 16
N_CAT = 25
LEN_PRED = 8
HIDDEN = 1000


# ---------------------------------------------------------------------------
# Fused kernel: fc1 -> ReLU -> fc2 -> ReLU -> fc3 -> grouped softmax
# ---------------------------------------------------------------------------
def make_mlp_kernel(len_pred, n_cat):
    def mlp_kernel(x_ref, w1_ref, b1_ref, w2_ref, b2_ref, w3_ref, b3_ref,
                   out_ref):
        # fc1 + ReLU  (bf16 MXU operands, f32 accumulation)
        x = x_ref[...].astype(jnp.bfloat16)
        h = jnp.dot(x, w1_ref[...], preferred_element_type=jnp.float32)
        h = jnp.maximum(h + b1_ref[...], 0.0)
        # fc2 + ReLU
        h = jnp.dot(h.astype(jnp.bfloat16), w2_ref[...],
                    preferred_element_type=jnp.float32)
        h = jnp.maximum(h + b2_ref[...], 0.0)
        # fc3
        logits = jnp.dot(h.astype(jnp.bfloat16), w3_ref[...],
                         preferred_element_type=jnp.float32) + b3_ref[...]
        # Softmax over each contiguous group of n_cat logits; identical to
        # view(-1, len_pred, n_cat) + Softmax(dim=2). len_pred is small, so a
        # statically unrolled loop of lane-slices is cheap (XLU max/sum + EUP exp).
        for p in range(len_pred):
            sl = logits[:, p * n_cat:(p + 1) * n_cat]
            m = jnp.max(sl, axis=-1, keepdims=True)
            e = jnp.exp(sl - m)
            s = jnp.sum(e, axis=-1, keepdims=True)
            out_ref[:, p * n_cat:(p + 1) * n_cat] = (e / s).astype(out_ref.dtype)

    return mlp_kernel


# ---------------------------------------------------------------------------
# Wrapper: batch-tiled grid, weights resident in VMEM
# ---------------------------------------------------------------------------
def mlp_forward(x, params, *, len_pred=LEN_PRED, n_cat=N_CAT, tile_b=8):
    w1, b1, w2, b2, w3, b3 = params
    B = x.shape[0]
    x2 = x.reshape(B, -1)                      # == x.view(-1, 16*25)
    d_in = x2.shape[1]
    d_out = len_pred * n_cat
    assert B % tile_b == 0

    const = lambda shape: pl.BlockSpec(shape, lambda i: tuple(0 for _ in shape))

    flat = pl.pallas_call(
        make_mlp_kernel(len_pred, n_cat),
        out_shape=jax.ShapeDtypeStruct((B, d_out), jnp.float32),
        grid_spec=pltpu.PrefetchScalarGridSpec(
            num_scalar_prefetch=0,
            grid=(B // tile_b,),
            in_specs=[
                pl.BlockSpec((tile_b, d_in), lambda i: (i, 0)),   # x tile
                const(w1.shape), const(b1.shape),                 # fc1
                const(w2.shape), const(b2.shape),                 # fc2
                const(w3.shape), const(b3.shape),                 # fc3
            ],
            out_specs=pl.BlockSpec((tile_b, d_out), lambda i: (i, 0)),
        ),
        compiler_params=pltpu.CompilerParams(
            dimension_semantics=("parallel",)),                   # megacore on v7x
    )(x2, w1, b1, w2, b2, w3, b3)

    return flat.reshape(B, len_pred, n_cat)    # == .view(-1, lenPred, n_cat)


# ---------------------------------------------------------------------------
# Deterministic parameters (weights stored as bf16 for MXU / half HBM bytes)
# ---------------------------------------------------------------------------
def init_params(key, d_in, hidden, d_out):
    k = jax.random.split(key, 6)
    s = lambda fan_in: 1.0 / jnp.sqrt(fan_in)
    w1 = (jax.random.normal(k[0], (d_in, hidden), jnp.float32) * s(d_in)).astype(jnp.bfloat16)
    b1 = jax.random.normal(k[1], (1, hidden), jnp.float32) * 0.01
    w2 = (jax.random.normal(k[2], (hidden, hidden), jnp.float32) * s(hidden)).astype(jnp.bfloat16)
    b2 = jax.random.normal(k[3], (1, hidden), jnp.float32) * 0.01
    w3 = (jax.random.normal(k[4], (hidden, d_out), jnp.float32) * s(hidden)).astype(jnp.bfloat16)
    b3 = jax.random.normal(k[5], (1, d_out), jnp.float32) * 0.01
    return (w1, b1, w2, b2, w3, b3)


if __name__ == "__main__":
    key = jax.random.PRNGKey(0)
    kx, kp = jax.random.split(key)

    B = 16
    x = jax.random.normal(kx, (B, LEN_SEQ, N_CAT), jnp.float32)
    params = init_params(kp, LEN_SEQ * N_CAT, HIDDEN, LEN_PRED * N_CAT)

    y = mlp_forward(x, params)
    y = jax.block_until_ready(y)
    assert y.shape == (B, LEN_PRED, N_CAT)

    # Pure-JAX reference with identical bf16-operand / f32-accumulate math.
    def ref_forward(x, params):
        w1, b1, w2, b2, w3, b3 = params
        xb = x.reshape(x.shape[0], -1)
        h = jnp.maximum(jnp.dot(xb.astype(jnp.bfloat16), w1,
                                preferred_element_type=jnp.float32) + b1, 0.0)
        h = jnp.maximum(jnp.dot(h.astype(jnp.bfloat16), w2,
                                preferred_element_type=jnp.float32) + b2, 0.0)
        logits = jnp.dot(h.astype(jnp.bfloat16), w3,
                         preferred_element_type=jnp.float32) + b3
        logits = logits.reshape(x.shape[0], LEN_PRED, N_CAT)
        return jax.nn.softmax(logits, axis=2)

    ref = ref_forward(x, params)
    assert jnp.allclose(y, ref, atol=1e-4, rtol=1e-3)
    # softmax rows must sum to 1
    assert jnp.allclose(jnp.sum(y, axis=2), 1.0, atol=1e-5)

    print("KERNEL_OK")
</pallas_src>

<mosaic_0001>
module attributes {stable_mosaic.version = 11 : i64} {
  func.func @mlp_kernel(%arg0: i32, %arg1: memref<8x400xf32, #tpu.memory_space<vmem>>, %arg2: memref<400x1000xbf16, #tpu.memory_space<vmem>>, %arg3: memref<1x1000xf32, #tpu.memory_space<vmem>>, %arg4: memref<1000x1000xbf16, #tpu.memory_space<vmem>>, %arg5: memref<1x1000xf32, #tpu.memory_space<vmem>>, %arg6: memref<1000x200xbf16, #tpu.memory_space<vmem>>, %arg7: memref<1x200xf32, #tpu.memory_space<vmem>>, %arg8: memref<8x200xf32, #tpu.memory_space<vmem>>) attributes {dimension_semantics = [#tpu.dimension_semantics<parallel>], iteration_bounds = array<i64: 2>, scalar_prefetch = 0 : i64, scratch_operands = 0 : i64, tpu.core_type = #tpu.core_type<tc>, window_params = [{transform_indices = @transform_0, window_bounds = array<i64: 8, 400>}, {pipeline_mode = #tpu.pipeline_mode<synchronous>, transform_indices = @transform_1, window_bounds = array<i64: 400, 1000>}, {pipeline_mode = #tpu.pipeline_mode<synchronous>, transform_indices = @transform_2, window_bounds = array<i64: 1, 1000>}, {pipeline_mode = #tpu.pipeline_mode<synchronous>, transform_indices = @transform_3, window_bounds = array<i64: 1000, 1000>}, {pipeline_mode = #tpu.pipeline_mode<synchronous>, transform_indices = @transform_4, window_bounds = array<i64: 1, 1000>}, {pipeline_mode = #tpu.pipeline_mode<synchronous>, transform_indices = @transform_5, window_bounds = array<i64: 1000, 200>}, {pipeline_mode = #tpu.pipeline_mode<synchronous>, transform_indices = @transform_6, window_bounds = array<i64: 1, 200>}, {transform_indices = @transform_7, window_bounds = array<i64: 8, 200>}]} {
    %c0 = arith.constant 0 : index
    %c0_0 = arith.constant 0 : index
    %0 = vector.load %arg1[%c0, %c0_0] : memref<8x400xf32, #tpu.memory_space<vmem>>, vector<8x400xf32>
    %1 = arith.truncf %0 : vector<8x400xf32> to vector<8x400xbf16>
    %c0_1 = arith.constant 0 : index
    %c0_2 = arith.constant 0 : index
    %2 = vector.load %arg2[%c0_1, %c0_2] : memref<400x1000xbf16, #tpu.memory_space<vmem>>, vector<400x1000xbf16>
    %cst = arith.constant dense<0.000000e+00> : vector<8x1000xf32>
    %3 = tpu.matmul %1, %2, %cst {dimension_numbers = #tpu.dot_dimension_numbers<[1], [0], [0], [1], [0, 0, 1, 1], [], []>} : vector<8x400xbf16>, vector<400x1000xbf16>, vector<8x1000xf32> -> vector<8x1000xf32>
    %c0_3 = arith.constant 0 : index
    %c0_4 = arith.constant 0 : index
    %4 = vector.load %arg3[%c0_3, %c0_4] : memref<1x1000xf32, #tpu.memory_space<vmem>>, vector<1x1000xf32>
    %5 = vector.broadcast %4 : vector<1x1000xf32> to vector<8x1000xf32>
    %6 = arith.addf %3, %5 : vector<8x1000xf32>
    %cst_5 = arith.constant 0.000000e+00 : f32
    %7 = vector.broadcast %cst_5 : f32 to vector<8x1000xf32>
    %8 = arith.maximumf %6, %7 : vector<8x1000xf32>
    %9 = arith.truncf %8 : vector<8x1000xf32> to vector<8x1000xbf16>
    %c0_6 = arith.constant 0 : index
    %c0_7 = arith.constant 0 : index
    %10 = vector.load %arg4[%c0_6, %c0_7] : memref<1000x1000xbf16, #tpu.memory_space<vmem>>, vector<1000x1000xbf16>
    %cst_8 = arith.constant dense<0.000000e+00> : vector<8x1000xf32>
    %11 = tpu.matmul %9, %10, %cst_8 {dimension_numbers = #tpu.dot_dimension_numbers<[1], [0], [0], [1], [0, 0, 1, 1], [], []>} : vector<8x1000xbf16>, vector<1000x1000xbf16>, vector<8x1000xf32> -> vector<8x1000xf32>
    %c0_9 = arith.constant 0 : index
    %c0_10 = arith.constant 0 : index
    %12 = vector.load %arg5[%c0_9, %c0_10] : memref<1x1000xf32, #tpu.memory_space<vmem>>, vector<1x1000xf32>
    %13 = vector.broadcast %12 : vector<1x1000xf32> to vector<8x1000xf32>
    %14 = arith.addf %11, %13 : vector<8x1000xf32>
    %cst_11 = arith.constant 0.000000e+00 : f32
    %15 = vector.broadcast %cst_11 : f32 to vector<8x1000xf32>
    %16 = arith.maximumf %14, %15 : vector<8x1000xf32>
    %17 = arith.truncf %16 : vector<8x1000xf32> to vector<8x1000xbf16>
    %c0_12 = arith.constant 0 : index
    %c0_13 = arith.constant 0 : index
    %18 = vector.load %arg6[%c0_12, %c0_13] : memref<1000x200xbf16, #tpu.memory_space<vmem>>, vector<1000x200xbf16>
    %cst_14 = arith.constant dense<0.000000e+00> : vector<8x200xf32>
    %19 = tpu.matmul %17, %18, %cst_14 {dimension_numbers = #tpu.dot_dimension_numbers<[1], [0], [0], [1], [0, 0, 1, 1], [], []>} : vector<8x1000xbf16>, vector<1000x200xbf16>, vector<8x200xf32> -> vector<8x200xf32>
    %c0_15 = arith.constant 0 : index
    %c0_16 = arith.constant 0 : index
    %20 = vector.load %arg7[%c0_15, %c0_16] : memref<1x200xf32, #tpu.memory_space<vmem>>, vector<1x200xf32>
    %21 = vector.broadcast %20 : vector<1x200xf32> to vector<8x200xf32>
    %22 = arith.addf %19, %21 : vector<8x200xf32>
    %23 = vector.extract_strided_slice %22 {offsets = [0, 0], sizes = [8, 25], strides = [1, 1]} : vector<8x200xf32> to vector<8x25xf32>
    %cst_17 = arith.constant dense<0xFF800000> : vector<8xf32>
    %24 = vector.multi_reduction <maximumf>, %23, %cst_17 [1] : vector<8x25xf32> to vector<8xf32>
    %25 = vector.shape_cast %24 : vector<8xf32> to vector<8x1xf32>
    %26 = vector.broadcast %25 : vector<8x1xf32> to vector<8x25xf32>
    %27 = arith.subf %23, %26 : vector<8x25xf32>
    %28 = math.exp %27 : vector<8x25xf32>
    %cst_18 = arith.constant dense<0.000000e+00> : vector<8xf32>
    %29 = vector.multi_reduction <add>, %28, %cst_18 [1] : vector<8x25xf32> to vector<8xf32>
    %30 = vector.shape_cast %29 : vector<8xf32> to vector<8x1xf32>
    %31 = vector.broadcast %30 : vector<8x1xf32> to vector<8x25xf32>
    %32 = arith.divf %28, %31 : vector<8x25xf32>
    %c0_19 = arith.constant 0 : index
    %c0_20 = arith.constant 0 : index
    %33 = vector.load %arg8[%c0_19, %c0_20] : memref<8x200xf32, #tpu.memory_space<vmem>>, vector<8x25xf32>
    tpu.vector_store %arg8[%c0_19, %c0_20], %32 {strides = array<i32>} : memref<8x200xf32, #tpu.memory_space<vmem>>, vector<8x25xf32>,
    %34 = vector.extract_strided_slice %22 {offsets = [0, 25], sizes = [8, 25], strides = [1, 1]} : vector<8x200xf32> to vector<8x25xf32>
    %cst_21 = arith.constant dense<0xFF800000> : vector<8xf32>
    %35 = vector.multi_reduction <maximumf>, %34, %cst_21 [1] : vector<8x25xf32> to vector<8xf32>
    %36 = vector.shape_cast %35 : vector<8xf32> to vector<8x1xf32>
    %37 = vector.broadcast %36 : vector<8x1xf32> to vector<8x25xf32>
    %38 = arith.subf %34, %37 : vector<8x25xf32>
    %39 = math.exp %38 : vector<8x25xf32>
    %cst_22 = arith.constant dense<0.000000e+00> : vector<8xf32>
    %40 = vector.multi_reduction <add>, %39, %cst_22 [1] : vector<8x25xf32> to vector<8xf32>
    %41 = vector.shape_cast %40 : vector<8xf32> to vector<8x1xf32>
    %42 = vector.broadcast %41 : vector<8x1xf32> to vector<8x25xf32>
    %43 = arith.divf %39, %42 : vector<8x25xf32>
    %c0_23 = arith.constant 0 : index
    %c25 = arith.constant 25 : index
    %44 = vector.load %arg8[%c0_23, %c25] : memref<8x200xf32, #tpu.memory_space<vmem>>, vector<8x25xf32>
    tpu.vector_store %arg8[%c0_23, %c25], %43 {strides = array<i32>} : memref<8x200xf32, #tpu.memory_space<vmem>>, vector<8x25xf32>,
    %45 = vector.extract_strided_slice %22 {offsets = [0, 50], sizes = [8, 25], strides = [1, 1]} : vector<8x200xf32> to vector<8x25xf32>
    %cst_24 = arith.constant dense<0xFF800000> : vector<8xf32>
    %46 = vector.multi_reduction <maximumf>, %45, %cst_24 [1] : vector<8x25xf32> to vector<8xf32>
    %47 = vector.shape_cast %46 : vector<8xf32> to vector<8x1xf32>
    %48 = vector.broadcast %47 : vector<8x1xf32> to vector<8x25xf32>
    %49 = arith.subf %45, %48 : vector<8x25xf32>
    %50 = math.exp %49 : vector<8x25xf32>
    %cst_25 = arith.constant dense<0.000000e+00> : vector<8xf32>
    %51 = vector.multi_reduction <add>, %50, %cst_25 [1] : vector<8x25xf32> to vector<8xf32>
    %52 = vector.shape_cast %51 : vector<8xf32> to vector<8x1xf32>
    %53 = vector.broadcast %52 : vector<8x1xf32> to vector<8x25xf32>
    %54 = arith.divf %50, %53 : vector<8x25xf32>
    %c0_26 = arith.constant 0 : index
    %c50 = arith.constant 50 : index
    %55 = vector.load %arg8[%c0_26, %c50] : memref<8x200xf32, #tpu.memory_space<vmem>>, vector<8x25xf32>
    tpu.vector_store %arg8[%c0_26, %c50], %54 {strides = array<i32>} : memref<8x200xf32, #tpu.memory_space<vmem>>, vector<8x25xf32>,
    %56 = vector.extract_strided_slice %22 {offsets = [0, 75], sizes = [8, 25], strides = [1, 1]} : vector<8x200xf32> to vector<8x25xf32>
    %cst_27 = arith.constant dense<0xFF800000> : vector<8xf32>
    %57 = vector.multi_reduction <maximumf>, %56, %cst_27 [1] : vector<8x25xf32> to vector<8xf32>
    %58 = vector.shape_cast %57 : vector<8xf32> to vector<8x1xf32>
    %59 = vector.broadcast %58 : vector<8x1xf32> to vector<8x25xf32>
    %60 = arith.subf %56, %59 : vector<8x25xf32>
    %61 = math.exp %60 : vector<8x25xf32>
    %cst_28 = arith.constant dense<0.000000e+00> : vector<8xf32>
    %62 = vector.multi_reduction <add>, %61, %cst_28 [1] : vector<8x25xf32> to vector<8xf32>
    %63 = vector.shape_cast %62 : vector<8xf32> to vector<8x1xf32>
    %64 = vector.broadcast %63 : vector<8x1xf32> to vector<8x25xf32>
    %65 = arith.divf %61, %64 : vector<8x25xf32>
    %c0_29 = arith.constant 0 : index
    %c75 = arith.constant 75 : index
    %66 = vector.load %arg8[%c0_29, %c75] : memref<8x200xf32, #tpu.memory_space<vmem>>, vector<8x25xf32>
    tpu.vector_store %arg8[%c0_29, %c75], %65 {strides = array<i32>} : memref<8x200xf32, #tpu.memory_space<vmem>>, vector<8x25xf32>,
    %67 = vector.extract_strided_slice %22 {offsets = [0, 100], sizes = [8, 25], strides = [1, 1]} : vector<8x200xf32> to vector<8x25xf32>
    %cst_30 = arith.constant dense<0xFF800000> : vector<8xf32>
    %68 = vector.multi_reduction <maximumf>, %67, %cst_30 [1] : vector<8x25xf32> to vector<8xf32>
    %69 = vector.shape_cast %68 : vector<8xf32> to vector<8x1xf32>
    %70 = vector.broadcast %69 : vector<8x1xf32> to vector<8x25xf32>
    %71 = arith.subf %67, %70 : vector<8x25xf32>
    %72 = math.exp %71 : vector<8x25xf32>
    %cst_31 = arith.constant dense<0.000000e+00> : vector<8xf32>
    %73 = vector.multi_reduction <add>, %72, %cst_31 [1] : vector<8x25xf32> to vector<8xf32>
    %74 = vector.shape_cast %73 : vector<8xf32> to vector<8x1xf32>
    %75 = vector.broadcast %74 : vector<8x1xf32> to vector<8x25xf32>
    %76 = arith.divf %72, %75 : vector<8x25xf32>
    %c0_32 = arith.constant 0 : index
    %c100 = arith.constant 100 : index
    %77 = vector.load %arg8[%c0_32, %c100] : memref<8x200xf32, #tpu.memory_space<vmem>>, vector<8x25xf32>
    tpu.vector_store %arg8[%c0_32, %c100], %76 {strides = array<i32>} : memref<8x200xf32, #tpu.memory_space<vmem>>, vector<8x25xf32>,
    %78 = vector.extract_strided_slice %22 {offsets = [0, 125], sizes = [8, 25], strides = [1, 1]} : vector<8x200xf32> to vector<8x25xf32>
    %cst_33 = arith.constant dense<0xFF800000> : vector<8xf32>
    %79 = vector.multi_reduction <maximumf>, %78, %cst_33 [1] : vector<8x25xf32> to vector<8xf32>
    %80 = vector.shape_cast %79 : vector<8xf32> to vector<8x1xf32>
    %81 = vector.broadcast %80 : vector<8x1xf32> to vector<8x25xf32>
    %82 = arith.subf %78, %81 : vector<8x25xf32>
    %83 = math.exp %82 : vector<8x25xf32>
    %cst_34 = arith.constant dense<0.000000e+00> : vector<8xf32>
    %84 = vector.multi_reduction <add>, %83, %cst_34 [1] : vector<8x25xf32> to vector<8xf32>
    %85 = vector.shape_cast %84 : vector<8xf32> to vector<8x1xf32>
    %86 = vector.broadcast %85 : vector<8x1xf32> to vector<8x25xf32>
    %87 = arith.divf %83, %86 : vector<8x25xf32>
    %c0_35 = arith.constant 0 : index
    %c125 = arith.constant 125 : index
    %88 = vector.load %arg8[%c0_35, %c125] : memref<8x200xf32, #tpu.memory_space<vmem>>, vector<8x25xf32>
    tpu.vector_store %arg8[%c0_35, %c125], %87 {strides = array<i32>} : memref<8x200xf32, #tpu.memory_space<vmem>>, vector<8x25xf32>,
    %89 = vector.extract_strided_slice %22 {offsets = [0, 150], sizes = [8, 25], strides = [1, 1]} : vector<8x200xf32> to vector<8x25xf32>
    %cst_36 = arith.constant dense<0xFF800000> : vector<8xf32>
    %90 = vector.multi_reduction <maximumf>, %89, %cst_36 [1] : vector<8x25xf32> to vector<8xf32>
    %91 = vector.shape_cast %90 : vector<8xf32> to vector<8x1xf32>
    %92 = vector.broadcast %91 : vector<8x1xf32> to vector<8x25xf32>
    %93 = arith.subf %89, %92 : vector<8x25xf32>
    %94 = math.exp %93 : vector<8x25xf32>
    %cst_37 = arith.constant dense<0.000000e+00> : vector<8xf32>
    %95 = vector.multi_reduction <add>, %94, %cst_37 [1] : vector<8x25xf32> to vector<8xf32>
    %96 = vector.shape_cast %95 : vector<8xf32> to vector<8x1xf32>
    %97 = vector.broadcast %96 : vector<8x1xf32> to vector<8x25xf32>
    %98 = arith.divf %94, %97 : vector<8x25xf32>
    %c0_38 = arith.constant 0 : index
    %c150 = arith.constant 150 : index
    %99 = vector.load %arg8[%c0_38, %c150] : memref<8x200xf32, #tpu.memory_space<vmem>>, vector<8x25xf32>
    tpu.vector_store %arg8[%c0_38, %c150], %98 {strides = array<i32>} : memref<8x200xf32, #tpu.memory_space<vmem>>, vector<8x25xf32>,
    %100 = vector.extract_strided_slice %22 {offsets = [0, 175], sizes = [8, 25], strides = [1, 1]} : vector<8x200xf32> to vector<8x25xf32>
    %cst_39 = arith.constant dense<0xFF800000> : vector<8xf32>
    %101 = vector.multi_reduction <maximumf>, %100, %cst_39 [1] : vector<8x25xf32> to vector<8xf32>
    %102 = vector.shape_cast %101 : vector<8xf32> to vector<8x1xf32>
    %103 = vector.broadcast %102 : vector<8x1xf32> to vector<8x25xf32>
    %104 = arith.subf %100, %103 : vector<8x25xf32>
    %105 = math.exp %104 : vector<8x25xf32>
    %cst_40 = arith.constant dense<0.000000e+00> : vector<8xf32>
    %106 = vector.multi_reduction <add>, %105, %cst_40 [1] : vector<8x25xf32> to vector<8xf32>
    %107 = vector.shape_cast %106 : vector<8xf32> to vector<8x1xf32>
    %108 = vector.broadcast %107 : vector<8x1xf32> to vector<8x25xf32>
    %109 = arith.divf %105, %108 : vector<8x25xf32>
    %c0_41 = arith.constant 0 : index
    %c175 = arith.constant 175 : index
    %110 = vector.load %arg8[%c0_41, %c175] : memref<8x200xf32, #tpu.memory_space<vmem>>, vector<8x25xf32>
    tpu.vector_store %arg8[%c0_41, %c175], %109 {strides = array<i32>} : memref<8x200xf32, #tpu.memory_space<vmem>>, vector<8x25xf32>,
    return
  }
  func.func @transform_0(%arg0: i32) -> (i32, i32) {
    %c0_i32 = arith.constant 0 : i32
    %c0_i32_0 = arith.constant 0 : i32
    return %arg0, %c0_i32 : i32, i32
  }
  func.func @transform_1(%arg0: i32) -> (i32, i32) {
    %c0_i32 = arith.constant 0 : i32
    %c0_i32_0 = arith.constant 0 : i32
    %c0_i32_1 = arith.constant 0 : i32
    return %c0_i32, %c0_i32_0 : i32, i32
  }
  func.func @transform_2(%arg0: i32) -> (i32, i32) {
    %c0_i32 = arith.constant 0 : i32
    %c0_i32_0 = arith.constant 0 : i32
    %c0_i32_1 = arith.constant 0 : i32
    return %c0_i32, %c0_i32_0 : i32, i32
  }
  func.func @transform_3(%arg0: i32) -> (i32, i32) {
    %c0_i32 = arith.constant 0 : i32
    %c0_i32_0 = arith.constant 0 : i32
    %c0_i32_1 = arith.constant 0 : i32
    return %c0_i32, %c0_i32_0 : i32, i32
  }
  func.func @transform_4(%arg0: i32) -> (i32, i32) {
    %c0_i32 = arith.constant 0 : i32
    %c0_i32_0 = arith.constant 0 : i32
    %c0_i32_1 = arith.constant 0 : i32
    return %c0_i32, %c0_i32_0 : i32, i32
  }
  func.func @transform_5(%arg0: i32) -> (i32, i32) {
    %c0_i32 = arith.constant 0 : i32
    %c0_i32_0 = arith.constant 0 : i32
    %c0_i32_1 = arith.constant 0 : i32
    return %c0_i32, %c0_i32_0 : i32, i32
  }
  func.func @transform_6(%arg0: i32) -> (i32, i32) {
    %c0_i32 = arith.constant 0 : i32
    %c0_i32_0 = arith.constant 0 : i32
    %c0_i32_1 = arith.constant 0 : i32
    return %c0_i32, %c0_i32_0 : i32, i32
  }
  func.func @transform_7(%arg0: i32) -> (i32, i32) {
    %c0_i32 = arith.constant 0 : i32
    %c0_i32_0 = arith.constant 0 : i32
    return %arg0, %c0_i32 : i32, i32
  }
}

</mosaic_0001>

<llo_original>
// kernel: tpu_custom_call.1
$region0: #{tpu_custom_call.1}
  #allocation0 [shape = 'u32[]', space=smem, size = 0x4, offset = 0x4, fixed_abs, tag = 'smem constant byte address 0x4 - core index']
  #allocation1 [shape = 'u32[144,128]{1,0:T(1,128)}', space=vmem, size = 0x12000, scoped, tag = 'internal scratch']
  %s0 = inlined_call_operand.hbm [shape: f32[16,400], index: 0, kind: input, shape index: {}]
  %s1 = inlined_call_operand.hbm [shape: bf16[400,1000], index: 1, kind: input, shape index: {}]
  %s2 = inlined_call_operand.hbm [shape: f32[1,1000], index: 2, kind: input, shape index: {}]
  %s3 = inlined_call_operand.hbm [shape: bf16[1000,1000], index: 3, kind: input, shape index: {}]
  %s4 = inlined_call_operand.hbm [shape: f32[1,1000], index: 4, kind: input, shape index: {}]
  %s5 = inlined_call_operand.vmem [shape: bf16[1000,200], index: 5, kind: input, shape index: {}]
  %s6 = inlined_call_operand.hbm [shape: f32[1,200], index: 6, kind: input, shape index: {}]
  %s7 = inlined_call_operand.hbm [shape: f32[16,200], index: 7, kind: output, shape index: {}]
  %s8 = sld [smem:[#allocation0]]
  $region85: #{tpu_custom_call.1} parent=0
    _
  %s10 = ssub.s32 1, %s8
  %s11 = scalar_select 0, %s10, %s8
  $region1: #{tpu_custom_call.1} parent=0
    #allocation2 [shape = 'u8[32768]{0}', space=vmem, size = 0x8000, scoped, tag = 'input window, operand 0']
    #allocation3 [shape = 's32[2]{0}', space=sflag, size = 0x8, scoped, tag = 'scoped memory for tpu_custom_call.1']
    #allocation4 [shape = 's32[2]{0}', space=sflag, size = 0x8, scoped, tag = 'scoped memory for tpu_custom_call.1']
    #allocation5 [shape = 'u8[819200]{0}', space=vmem, size = 0xc8000, scoped, tag = 'input window, operand 1, single buffered']
    #allocation6 [shape = 's32[1]{0}', space=sflag, size = 0x4, scoped, tag = 'scoped memory for tpu_custom_call.1']
    #allocation7 [shape = 'u8[4096]{0}', space=vmem, size = 0x1000, scoped, tag = 'input window, operand 2, single buffered']
    #allocation8 [shape = 'u8[2048000]{0}', space=vmem, size = 0x1f4000, scoped, tag = 'input window, operand 3, single buffered']
    #allocation9 [shape = 's32[1]{0}', space=sflag, size = 0x4, scoped, tag = 'scoped memory for tpu_custom_call.1']
    #allocation10 [shape = 'u8[4096]{0}', space=vmem, size = 0x1000, scoped, tag = 'input window, operand 4, single buffered']
    #allocation11 [shape = 'u8[1024]{0}', space=vmem, size = 0x400, scoped, tag = 'input window, operand 6, single buffered']
    #allocation12 [shape = 's32[1]{0}', space=sflag, size = 0x4, scoped, tag = 'scoped memory for tpu_custom_call.1']
    #allocation13 [shape = 'u8[16384]{0}', space=vmem, size = 0x4000, scoped, tag = 'output window, operand 0']
    %12 = vsyncpa [#allocation3], 0
    %s13 = scalar_lea.sflag [#allocation3], 1
    %14 = vsyncpa %s13, 0
    %15 = vsyncpa [#allocation6], 0
    %16 = vsyncpa [#allocation9], 0
    %17 = vsyncpa [#allocation12], 0
    %18 = vsyncpa [#allocation4], 0
    %s19 = scalar_lea.sflag [#allocation4], 1
    %20 = vsyncpa %s19, 0
    loop: start=0, step=1, limit=4
    $region2: #{tpu_custom_call.1} parent=1 // loop_pre_header
      _
    $region3: #{tpu_custom_call.1} parent=1 // loop_header
      %s22 = sphi 0, %s26
      %p23 = scmp.ge.s32.totalorder %s22, 4
      %s32 = sphi 0, %s34
      %s35 = sphi 0, %s32
      %s36 = sphi 0, %s35
      %s52 = sphi 0, %s36
      %s56 = sphi 0, %s56
      %s58 = sphi 0, %s56
      %s59 = sphi 0, %s58
      %s73 = sphi 0, %s59
      %s77 = sphi 0, %s77
      %s79 = sphi 0, %s77
      %s80 = sphi 0, %s79
      %s94 = sphi 0, %s80
      %s98 = sphi 0, %s98
      %s100 = sphi 0, %s98
      %s101 = sphi 0, %s100
      %s115 = sphi 0, %s101
      %s119 = sphi 0, %s119
      %s121 = sphi 0, %s119
      %s122 = sphi 0, %s121
      %s136 = sphi 0, %s122
      %s140 = sphi 0, %s140
      %s142 = sphi 0, %s140
      %s143 = sphi 0, %s142
      %s157 = sphi 0, %s143
      %s161 = sphi 0, %s161
      %s163 = sphi 0, %s161
      %s164 = sphi 0, %s163
      %s178 = sphi 0, %s164
      %s184 = sphi 0, %s186
      %s187 = sphi 0, %s184
      %s188 = sphi 0, %s187
      %s204 = sphi 0, %s188
    $region4: #{tpu_custom_call.1} parent=1 // loop_header_branch
      %25 = sbr.rel (%p23) target = $region8
    $region5: #{tpu_custom_call.1} parent=1 // loop_body
      %s27 = ssub.s32 %s22, 1
      %s28 = ssub.s32 %s22, 2
      %s29 = sadd.s32 %s22, 1
      %s30 = ssub.s32 %s22, %s29
      %p31 = scmp.eq.s32.totalorder %s30, 0
      %s33 = sadd.s32 %s32, 1
      %s34 = scalar_select %p31, %s32, %s33
      %p37 = pneg %p31
      %p38 = scmp.eq.s32.totalorder %s22, 1
      %p39 = por %p37, %p38
      %p40 = scmp.ne.s32.totalorder %s32, %s35
      %p41 = scmp.eq.s32.totalorder %s22, 0
      %p42 = por %p40, %p41
      %p43 = scmp.ne.s32.totalorder %s32, %s35
      %p44 = scmp.eq.s32.totalorder %s27, 1
      %p45 = por %p43, %p44
      %p46 = scmp.ne.s32.totalorder %s35, %s36
      %p47 = scmp.eq.s32.totalorder %s27, 0
      %p48 = por %p46, %p47
      %p49 = scmp.ne.s32.totalorder %s35, %s36
      %p50 = scmp.eq.s32.totalorder %s28, 1
      %p51 = por %p49, %p50
      %p53 = scmp.ne.s32.totalorder %s36, %s52
      %p54 = scmp.eq.s32.totalorder %s28, 0
      %p55 = por %p53, %p54
      %s57 = sadd.s32 %s56, 1
      %p60 = scmp.eq.s32.totalorder %s22, 1
      %p61 = scmp.ne.s32.totalorder %s56, %s58
      %p62 = scmp.eq.s32.totalorder %s22, 0
      %p63 = por %p61, %p62
      %p64 = scmp.ne.s32.totalorder %s56, %s58
      %p65 = scmp.eq.s32.totalorder %s27, 1
      %p66 = por %p64, %p65
      %p67 = scmp.ne.s32.totalorder %s58, %s59
      %p68 = scmp.eq.s32.totalorder %s27, 0
      %p69 = por %p67, %p68
      %p70 = scmp.ne.s32.totalorder %s58, %s59
      %p71 = scmp.eq.s32.totalorder %s28, 1
      %p72 = por %p70, %p71
      %p74 = scmp.ne.s32.totalorder %s59, %s73
      %p75 = scmp.eq.s32.totalorder %s28, 0
      %p76 = por %p74, %p75
      %s78 = sadd.s32 %s77, 1
      %p81 = scmp.eq.s32.totalorder %s22, 1
      %p82 = scmp.ne.s32.totalorder %s77, %s79
      %p83 = scmp.eq.s32.totalorder %s22, 0
      %p84 = por %p82, %p83
      %p85 = scmp.ne.s32.totalorder %s77, %s79
      %p86 = scmp.eq.s32.totalorder %s27, 1
      %p87 = por %p85, %p86
      %p88 = scmp.ne.s32.totalorder %s79, %s80
      %p89 = scmp.eq.s32.totalorder %s27, 0
      %p90 = por %p88, %p89
      %p91 = scmp.ne.s32.totalorder %s79, %s80
      %p92 = scmp.eq.s32.totalorder %s28, 1
      %p93 = por %p91, %p92
      %p95 = scmp.ne.s32.totalorder %s80, %s94
      %p96 = scmp.eq.s32.totalorder %s28, 0
      %p97 = por %p95, %p96
      %s99 = sadd.s32 %s98, 1
      %p102 = scmp.eq.s32.totalorder %s22, 1
      %p103 = scmp.ne.s32.totalorder %s98, %s100
      %p104 = scmp.eq.s32.totalorder %s22, 0
      %p105 = por %p103, %p104
      %p106 = scmp.ne.s32.totalorder %s98, %s100
      %p107 = scmp.eq.s32.totalorder %s27, 1
      %p108 = por %p106, %p107
      %p109 = scmp.ne.s32.totalorder %s100, %s101
      %p110 = scmp.eq.s32.totalorder %s27, 0
      %p111 = por %p109, %p110
      %p112 = scmp.ne.s32.totalorder %s100, %s101
      %p113 = scmp.eq.s32.totalorder %s28, 1
      %p114 = por %p112, %p113
      %p116 = scmp.ne.s32.totalorder %s101, %s115
      %p117 = scmp.eq.s32.totalorder %s28, 0
      %p118 = por %p116, %p117
      %s120 = sadd.s32 %s119, 1
      %p123 = scmp.eq.s32.totalorder %s22, 1
      %p124 = scmp.ne.s32.totalorder %s119, %s121
      %p125 = scmp.eq.s32.totalorder %s22, 0
      %p126 = por %p124, %p125
      %p127 = scmp.ne.s32.totalorder %s119, %s121
      %p128 = scmp.eq.s32.totalorder %s27, 1
      %p129 = por %p127, %p128
      %p130 = scmp.ne.s32.totalorder %s121, %s122
      %p131 = scmp.eq.s32.totalorder %s27, 0
      %p132 = por %p130, %p131
      %p133 = scmp.ne.s32.totalorder %s121, %s122
      %p134 = scmp.eq.s32.totalorder %s28, 1
      %p135 = por %p133, %p134
      %p137 = scmp.ne.s32.totalorder %s122, %s136
      %p138 = scmp.eq.s32.totalorder %s28, 0
      %p139 = por %p137, %p138
      %s141 = sadd.s32 %s140, 1
      %p144 = scmp.eq.s32.totalorder %s22, 1
      %p145 = scmp.ne.s32.totalorder %s140, %s142
      %p146 = scmp.eq.s32.totalorder %s22, 0
      %p147 = por %p145, %p146
      %p148 = scmp.ne.s32.totalorder %s140, %s142
      %p149 = scmp.eq.s32.totalorder %s27, 1
      %p150 = por %p148, %p149
      %p151 = scmp.ne.s32.totalorder %s142, %s143
      %p152 = scmp.eq.s32.totalorder %s27, 0
      %p153 = por %p151, %p152
      %p154 = scmp.ne.s32.totalorder %s142, %s143
      %p155 = scmp.eq.s32.totalorder %s28, 1
      %p156 = por %p154, %p155
      %p158 = scmp.ne.s32.totalorder %s143, %s157
      %p159 = scmp.eq.s32.totalorder %s28, 0
      %p160 = por %p158, %p159
      %s162 = sadd.s32 %s161, 1
      %p165 = scmp.eq.s32.totalorder %s22, 1
      %p166 = scmp.ne.s32.totalorder %s161, %s163
      %p167 = scmp.eq.s32.totalorder %s22, 0
      %p168 = por %p166, %p167
      %p169 = scmp.ne.s32.totalorder %s161, %s163
      %p170 = scmp.eq.s32.totalorder %s27, 1
      %p171 = por %p169, %p170
      %p172 = scmp.ne.s32.totalorder %s163, %s164
      %p173 = scmp.eq.s32.totalorder %s27, 0
      %p174 = por %p172, %p173
      %p175 = scmp.ne.s32.totalorder %s163, %s164
      %p176 = scmp.eq.s32.totalorder %s28, 1
      %p177 = por %p175, %p176
      %p179 = scmp.ne.s32.totalorder %s164, %s178
      %p180 = scmp.eq.s32.totalorder %s28, 0
      %p181 = por %p179, %p180
      %s182 = ssub.s32 %s22, %s29
      %p183 = scmp.eq.s32.totalorder %s182, 0
      %s185 = sadd.s32 %s184, 1
      %s186 = scalar_select %p183, %s184, %s185
      %p189 = pneg %p183
      %p190 = scmp.eq.s32.totalorder %s22, 1
      %p191 = por %p189, %p190
      %p192 = scmp.ne.s32.totalorder %s184, %s187
      %p193 = scmp.eq.s32.totalorder %s22, 0
      %p194 = por %p192, %p193
      %p195 = scmp.ne.s32.totalorder %s184, %s187
      %p196 = scmp.eq.s32.totalorder %s27, 1
      %p197 = por %p195, %p196
      %p198 = scmp.ne.s32.totalorder %s187, %s188
      %p199 = scmp.eq.s32.totalorder %s27, 0
      %p200 = por %p198, %p199
      %p201 = scmp.ne.s32.totalorder %s187, %s188
      %p202 = scmp.eq.s32.totalorder %s28, 1
      %p203 = por %p201, %p202
      %p205 = scmp.ne.s32.totalorder %s188, %s204
      %p206 = scmp.eq.s32.totalorder %s28, 0
      %p207 = por %p205, %p206
      %p208 = scmp.le.s32.totalorder 1, %s22
      %p209 = scmp.lt.s32.totalorder %s22, 3
      %p210 = pnand %p208, %p209
      %p211 = pneg %p210
      // Predicated region
      $region9: #{tpu_custom_call.1} parent=5 // pred_check
        _
      $region10: #{tpu_custom_call.1} parent=5 // pred_check_branch
        %213 = sbr.rel (%p210) target = $region12
      $region11: #{tpu_custom_call.1} parent=5 // pred_region
        %s214 = ssub.s32 %s22, 1
        // Predicated region
        $region13: #{tpu_custom_call.1} parent=11 // pred_check
          %p215 = pneg %p69
        $region14: #{tpu_custom_call.1} parent=11 // pred_check_branch
          %217 = sbr.rel (%p215) target = $region16
        $region15: #{tpu_custom_call.1} parent=11 // pred_region
          %s219 = ssub.s32 25600, 25600
          %220 = vsyncadd [#allocation6], %s219
          %s221 = sshll.u32 [#allocation5], 4
          %s222 = int_to_ptr.vmem [resolvable:$true] %s221
          %227 = dma.hbm_to_vmem [thread:$0]  %s1, 25600, %s222, [#allocation6], 512, 512, 32
        $region16: #{tpu_custom_call.1} parent=11 // pred_fallthru
          _
        // Predicated region
        $region17: #{tpu_custom_call.1} parent=11 // pred_check
          %p228 = pneg %p90
        $region18: #{tpu_custom_call.1} parent=11 // pred_check_branch
          %230 = sbr.rel (%p228) target = $region20
        $region19: #{tpu_custom_call.1} parent=11 // pred_region
          %s232 = ssub.s32 128, 128
          %233 = vsyncadd [#allocation6], %s232
          %s235 = sshll.u32 [#allocation7], 4
          %s236 = int_to_ptr.vmem [resolvable:$true] %s235
          %238 = dma.hbm_to_vmem [thread:$0]  %s2, 128, %s236, [#allocation6]
        $region20: #{tpu_custom_call.1} parent=11 // pred_fallthru
          _
        // Predicated region
        $region21: #{tpu_custom_call.1} parent=11 // pred_check
          %p239 = pneg %p111
        $region22: #{tpu_custom_call.1} parent=11 // pred_check_branch
          %241 = sbr.rel (%p239) target = $region24
        $region23: #{tpu_custom_call.1} parent=11 // pred_region
          %s243 = ssub.s32 64000, 64000
          %244 = vsyncadd [#allocation9], %s243
          %s245 = sshll.u32 [#allocation8], 4
          %s246 = int_to_ptr.vmem [resolvable:$true] %s245
          %251 = dma.hbm_to_vmem [thread:$0]  %s3, 64000, %s246, [#allocation9], 512, 512, 32
        $region24: #{tpu_custom_call.1} parent=11 // pred_fallthru
          _
        // Predicated region
        $region25: #{tpu_custom_call.1} parent=11 // pred_check
          %p252 = pneg %p132
        $region26: #{tpu_custom_call.1} parent=11 // pred_check_branch
          %254 = sbr.rel (%p252) target = $region28
        $region27: #{tpu_custom_call.1} parent=11 // pred_region
          %s256 = ssub.s32 128, 128
          %257 = vsyncadd [#allocation9], %s256
          %s259 = sshll.u32 [#allocation10], 4
          %s260 = int_to_ptr.vmem [resolvable:$true] %s259
          %262 = dma.hbm_to_vmem [thread:$0]  %s4, 128, %s260, [#allocation9]
        $region28: #{tpu_custom_call.1} parent=11 // pred_fallthru
          _
        // Predicated region
        $region29: #{tpu_custom_call.1} parent=11 // pred_check
          %p263 = pneg %p153
        $region30: #{tpu_custom_call.1} parent=11 // pred_check_branch
          %265 = sbr.rel (%p263) target = $region32
        $region31: #{tpu_custom_call.1} parent=11 // pred_region
          _
        $region32: #{tpu_custom_call.1} parent=11 // pred_fallthru
          _
        // Predicated region
        $region33: #{tpu_custom_call.1} parent=11 // pred_check
          %p266 = pneg %p174
        $region34: #{tpu_custom_call.1} parent=11 // pred_check_branch
          %268 = sbr.rel (%p266) target = $region36
        $region35: #{tpu_custom_call.1} parent=11 // pred_region
          %s270 = ssub.s32 32, 32
          %271 = vsyncadd [#allocation12], %s270
          %s273 = sshll.u32 [#allocation11], 4
          %s274 = int_to_ptr.vmem [resolvable:$true] %s273
          %276 = dma.hbm_to_vmem [thread:$0]  %s6, 32, %s274, [#allocation12]
        $region36: #{tpu_custom_call.1} parent=11 // pred_fallthru
          _
      $region12: #{tpu_custom_call.1} parent=5 // pred_fallthru
        _
      %p277 = scmp.lt.s32.totalorder %s22, 2
      // Predicated region
      $region37: #{tpu_custom_call.1} parent=5 // pred_check
        %p278 = pneg %p277
      $region38: #{tpu_custom_call.1} parent=5 // pred_check_branch
        %280 = sbr.rel (%p278) target = $region40
      $region39: #{tpu_custom_call.1} parent=5 // pred_region
        // Predicated region
        $region41: #{tpu_custom_call.1} parent=39 // pred_check
          %p281 = pneg %p42
        $region42: #{tpu_custom_call.1} parent=39 // pred_check_branch
          %283 = sbr.rel (%p281) target = $region44
        $region43: #{tpu_custom_call.1} parent=39 // pred_region
          %s284 = sand.u32 %s32, 1
          %s285 = scalar_lea.sflag [#allocation3], %s284
          %s286 = sand.u32 %s32, 1
          %s287 = smul.addr %s286, 32
          %s288 = scalar_lea.vmem [#allocation2], %s287
          %s290 = ssub.s32 512, 512
          %291 = vsyncadd %s285, %s290
          %s292 = smul.addr %s22, 4
          %s293 = smul.addr %s292, 128
          %s294 = scalar_lea.hbm %s0, %s293
          %s296 = sshll.u32 %s288, 4
          %s297 = int_to_ptr.vmem [resolvable:$true] %s296
          %299 = dma.hbm_to_vmem [thread:$0]  %s294, 512, %s297, %s285
        $region44: #{tpu_custom_call.1} parent=39 // pred_fallthru
          _
      $region40: #{tpu_custom_call.1} parent=5 // pred_fallthru
        _
      %p300 = scmp.le.s32.totalorder 1, %s22
      %p301 = scmp.lt.s32.totalorder %s22, 3
      %p302 = pnand %p300, %p301
      %p303 = pneg %p302
      // Predicated region
      $region45: #{tpu_custom_call.1} parent=5 // pred_check
        _
      $region46: #{tpu_custom_call.1} parent=5 // pred_check_branch
        %305 = sbr.rel (%p302) target = $region48
      $region47: #{tpu_custom_call.1} parent=5 // pred_region
        %s306 = ssub.s32 %s22, 1
        %s307 = sand.u32 %s35, 1
        %s308 = scalar_lea.sflag [#allocation3], %s307
        %s309 = sand.u32 %s35, 1
        %s310 = smul.addr %s309, 32
        %s311 = scalar_lea.vmem [#allocation2], %s310
        // Predicated region
        $region49: #{tpu_custom_call.1} parent=47 // pred_check
          %p312 = pneg %p48
        $region50: #{tpu_custom_call.1} parent=47 // pred_check_branch
          %314 = sbr.rel (%p312) target = $region52
        $region51: #{tpu_custom_call.1} parent=47 // pred_region
          %315 = dma.done %s308, 512
        $region52: #{tpu_custom_call.1} parent=47 // pred_fallthru
          _
        // Predicated region
        $region53: #{tpu_custom_call.1} parent=47 // pred_check
          %p316 = pneg %p69
        $region54: #{tpu_custom_call.1} parent=47 // pred_check_branch
          %318 = sbr.rel (%p316) target = $region56
        $region55: #{tpu_custom_call.1} parent=47 // pred_region
          %319 = dma.done [#allocation6], 25600
        $region56: #{tpu_custom_call.1} parent=47 // pred_fallthru
          _
        // Predicated region
        $region57: #{tpu_custom_call.1} parent=47 // pred_check
          %p320 = pneg %p90
        $region58: #{tpu_custom_call.1} parent=47 // pred_check_branch
          %322 = sbr.rel (%p320) target = $region60
        $region59: #{tpu_custom_call.1} parent=47 // pred_region
          %323 = dma.done [#allocation6], 128
        $region60: #{tpu_custom_call.1} parent=47 // pred_fallthru
          _
        // Predicated region
        $region61: #{tpu_custom_call.1} parent=47 // pred_check
          %p324 = pneg %p111
        $region62: #{tpu_custom_call.1} parent=47 // pred_check_branch
          %326 = sbr.rel (%p324) target = $region64
        $region63: #{tpu_custom_call.1} parent=47 // pred_region
          %327 = dma.done [#allocation9], 64000
        $region64: #{tpu_custom_call.1} parent=47 // pred_fallthru
          _
        // Predicated region
        $region65: #{tpu_custom_call.1} parent=47 // pred_check
          %p328 = pneg %p132
        $region66: #{tpu_custom_call.1} parent=47 // pred_check_branch
          %330 = sbr.rel (%p328) target = $region68
        $region67: #{tpu_custom_call.1} parent=47 // pred_region
          %331 = dma.done [#allocation9], 128
        $region68: #{tpu_custom_call.1} parent=47 // pred_fallthru
          _
        // Predicated region
        $region69: #{tpu_custom_call.1} parent=47 // pred_check
          %p332 = pneg %p174
        $region70: #{tpu_custom_call.1} parent=47 // pred_check_branch
          %334 = sbr.rel (%p332) target = $region72
        $region71: #{tpu_custom_call.1} parent=47 // pred_region
          %335 = dma.done [#allocation12], 32
        $region72: #{tpu_custom_call.1} parent=47 // pred_fallthru
          _
        %s336 = sand.u32 %s35, 1
        %s337 = scalar_lea.sflag [#allocation3], %s336
        %s338 = sand.u32 %s35, 1
        %s339 = smul.addr %s338, 32
        %s340 = scalar_lea.vmem [#allocation2], %s339
        %p341 = pneg %p48
        %p342 = pneg %p45
        %p343 = pneg %p69
        %p344 = pneg %p66
        %p345 = pneg %p90
        %p346 = pneg %p87
        %p347 = pneg %p111
        %p348 = pneg %p108
        %p349 = pneg %p132
        %p350 = pneg %p129
        %p351 = pneg %p153
        %p352 = pneg %p150
        %p353 = pneg %p174
        %p354 = pneg %p171
        %p355 = pneg %p200
        %p356 = pneg %p197
        %s357 = sand.u32 %s187, 1
        %s358 = scalar_lea.sflag [#allocation4], %s357
        %s359 = sand.u32 %s187, 1
        %s360 = smul.addr %s359, 16
        %s361 = scalar_lea.vmem [#allocation13], %s360
        %v363 = vld [vmem:[%s311] sm:$0xff]
        %v364 = vld [vmem:[%s311 + $0x8] sm:$0xff]
        %v365 = vld [vmem:[%s311 + $0x10] sm:$0xff]
        %v366 = vld [vmem:[%s311 + $0x18] sm:$0xff]
        %v367 = vpack.c.bf16 %v363, %v363
        %v368 = vpack.c.bf16 %v364, %v364
        %v369 = vpack.c.bf16 %v365, %v365
        %v370 = vpack.c.bf16 %v366, %v366
        %v371 = vld [vmem:[#allocation5] sm:$0xff]
        %v372 = vld [vmem:[#allocation5 + $0x8] sm:$0xff]
        %v373 = vld [vmem:[#allocation5 + $0x10] sm:$0xff]
        %v374 = vld [vmem:[#allocation5 + $0x18] sm:$0xff]
        %v375 = vld [vmem:[#allocation5 + $0x20] sm:$0xff]
        %v376 = vld [vmem:[#allocation5 + $0x28] sm:$0xff]
        %v377 = vld [vmem:[#allocation5 + $0x30] sm:$0xff]
        %v378 = vld [vmem:[#allocation5 + $0x38] sm:$0xff]
        %v379 = vld [vmem:[#allocation5 + $0x40] sm:$0xff]
        %v380 = vld [vmem:[#allocation5 + $0x48] sm:$0xff]
        %v381 = vld [vmem:[#allocation5 + $0x50] sm:$0xff]
        %v382 = vld [vmem:[#allocation5 + $0x58] sm:$0xff]
        %v383 = vld [vmem:[#allocation5 + $0x60] sm:$0xff]
        %v384 = vld [vmem:[#allocation5 + $0x68] sm:$0xff]
        %v385 = vld [vmem:[#allocation5 + $0x70] sm:$0xff]
        %v386 = vld [vmem:[#allocation5 + $0x78] sm:$0xff]
        %v387 = vld [vmem:[#allocation5 + $0x80] sm:$0xff]
        %v388 = vld [vmem:[#allocation5 + $0x88] sm:$0xff]
        %v389 = vld [vmem:[#allocation5 + $0x90] sm:$0xff]
        %v390 = vld [vmem:[#allocation5 + $0x98] sm:$0xff]
        %v391 = vld [vmem:[#allocation5 + $0xa0] sm:$0xff]
        %v392 = vld [vmem:[#allocation5 + $0xa8] sm:$0xff]
        %v393 = vld [vmem:[#allocation5 + $0xb0] sm:$0xff]
        %v394 = vld [vmem:[#allocation5 + $0xb8] sm:$0xff]
        %v395 = vld [vmem:[#allocation5 + $0xc0] sm:$0xff]
        %v396 = vld [vmem:[#allocation5 + $0xc8] sm:$0xff]
        %v397 = vld [vmem:[#allocation5 + $0xd0] sm:$0xff]
        %v398 = vld [vmem:[#allocation5 + $0xd8] sm:$0xff]
        %v399 = vld [vmem:[#allocation5 + $0xe0] sm:$0xff]
        %v400 = vld [vmem:[#allocation5 + $0xe8] sm:$0xff]
        %v401 = vld [vmem:[#allocation5 + $0xf0] sm:$0xff]
        %v402 = vld [vmem:[#allocation5 + $0xf8] sm:$0xff]
        %v403 = vld [vmem:[#allocation5 + $0x100] sm:$0xff]
        %v404 = vld [vmem:[#allocation5 + $0x108] sm:$0xff]
        %v405 = vld [vmem:[#allocation5 + $0x110] sm:$0xff]
        %v406 = vld [vmem:[#allocation5 + $0x118] sm:$0xff]
        %v407 = vld [vmem:[#allocation5 + $0x120] sm:$0xff]
        %v408 = vld [vmem:[#allocation5 + $0x128] sm:$0xff]
        %v409 = vld [vmem:[#allocation5 + $0x130] sm:$0xff]
        %v410 = vld [vmem:[#allocation5 + $0x138] sm:$0xff]
        %v411 = vld [vmem:[#allocation5 + $0x140] sm:$0xff]
        %v412 = vld [vmem:[#allocation5 + $0x148] sm:$0xff]
        %v413 = vld [vmem:[#allocation5 + $0x150] sm:$0xff]
        %v414 = vld [vmem:[#allocation5 + $0x158] sm:$0xff]
        %v415 = vld [vmem:[#allocation5 + $0x160] sm:$0xff]
        %v416 = vld [vmem:[#allocation5 + $0x168] sm:$0xff]
        %v417 = vld [vmem:[#allocation5 + $0x170] sm:$0xff]
        %v418 = vld [vmem:[#allocation5 + $0x178] sm:$0xff]
        %v419 = vld [vmem:[#allocation5 + $0x180] sm:$0xff]
        %v420 = vld [vmem:[#allocation5 + $0x188] sm:$0xff]
        %v421 = vld [vmem:[#allocation5 + $0x190] sm:$0xff]
        %v422 = vld [vmem:[#allocation5 + $0x198] sm:$0xff]
        %v423 = vld [vmem:[#allocation5 + $0x1a0] sm:$0xff]
        %v424 = vld [vmem:[#allocation5 + $0x1a8] sm:$0xff]
        %v425 = vld [vmem:[#allocation5 + $0x1b0] sm:$0xff]
        %v426 = vld [vmem:[#allocation5 + $0x1b8] sm:$0xff]
        %v427 = vld [vmem:[#allocation5 + $0x1c0] sm:$0xff]
        %v428 = vld [vmem:[#allocation5 + $0x1c8] sm:$0xff]
        %v429 = vld [vmem:[#allocation5 + $0x1d0] sm:$0xff]
        %v430 = vld [vmem:[#allocation5 + $0x1d8] sm:$0xff]
        %v431 = vld [vmem:[#allocation5 + $0x1e0] sm:$0xff]
        %v432 = vld [vmem:[#allocation5 + $0x1e8] sm:$0xff]
        %v433 = vld [vmem:[#allocation5 + $0x1f0] sm:$0xff]
        %v434 = vld [vmem:[#allocation5 + $0x1f8] sm:$0xff]
        %v435 = vld [vmem:[#allocation5 + $0x200] sm:$0xff]
        %v436 = vld [vmem:[#allocation5 + $0x208] sm:$0xff]
        %v437 = vld [vmem:[#allocation5 + $0x210] sm:$0xff]
        %v438 = vld [vmem:[#allocation5 + $0x218] sm:$0xff]
        %v439 = vld [vmem:[#allocation5 + $0x220] sm:$0xff]
        %v440 = vld [vmem:[#allocation5 + $0x228] sm:$0xff]
        %v441 = vld [vmem:[#allocation5 + $0x230] sm:$0xff]
        %v442 = vld [vmem:[#allocation5 + $0x238] sm:$0xff]
        %v443 = vld [vmem:[#allocation5 + $0x240] sm:$0xff]
        %v444 = vld [vmem:[#allocation5 + $0x248] sm:$0xff]
        %v445 = vld [vmem:[#allocation5 + $0x250] sm:$0xff]
        %v446 = vld [vmem:[#allocation5 + $0x258] sm:$0xff]
        %v447 = vld [vmem:[#allocation5 + $0x260] sm:$0xff]
        %v448 = vld [vmem:[#allocation5 + $0x268] sm:$0xff]
        %v449 = vld [vmem:[#allocation5 + $0x270] sm:$0xff]
        %v450 = vld [vmem:[#allocation5 + $0x278] sm:$0xff]
        %v451 = vld [vmem:[#allocation5 + $0x280] sm:$0xff]
        %v452 = vld [vmem:[#allocation5 + $0x288] sm:$0xff]
        %v453 = vld [vmem:[#allocation5 + $0x290] sm:$0xff]
        %v454 = vld [vmem:[#allocation5 + $0x298] sm:$0xff]
        %v455 = vld [vmem:[#allocation5 + $0x2a0] sm:$0xff]
        %v456 = vld [vmem:[#allocation5 + $0x2a8] sm:$0xff]
        %v457 = vld [vmem:[#allocation5 + $0x2b0] sm:$0xff]
        %v458 = vld [vmem:[#allocation5 + $0x2b8] sm:$0xff]
        %v459 = vld [vmem:[#allocation5 + $0x2c0] sm:$0xff]
        %v460 = vld [vmem:[#allocation5 + $0x2c8] sm:$0xff]
        %v461 = vld [vmem:[#allocation5 + $0x2d0] sm:$0xff]
        %v462 = vld [vmem:[#allocation5 + $0x2d8] sm:$0xff]
        %v463 = vld [vmem:[#allocation5 + $0x2e0] sm:$0xff]
        %v464 = vld [vmem:[#allocation5 + $0x2e8] sm:$0xff]
        %v465 = vld [vmem:[#allocation5 + $0x2f0] sm:$0xff]
        %v466 = vld [vmem:[#allocation5 + $0x2f8] sm:$0xff]
        %v467 = vld [vmem:[#allocation5 + $0x300] sm:$0xff]
        %v468 = vld [vmem:[#allocation5 + $0x308] sm:$0xff]
        %v469 = vld [vmem:[#allocation5 + $0x310] sm:$0xff]
        %v470 = vld [vmem:[#allocation5 + $0x318] sm:$0xff]
        %v471 = vld [vmem:[#allocation5 + $0x320] sm:$0xff]
        %v472 = vld [vmem:[#allocation5 + $0x328] sm:$0xff]
        %v473 = vld [vmem:[#allocation5 + $0x330] sm:$0xff]
        %v474 = vld [vmem:[#allocation5 + $0x338] sm:$0xff]
        %v475 = vld [vmem:[#allocation5 + $0x340] sm:$0xff]
        %v476 = vld [vmem:[#allocation5 + $0x348] sm:$0xff]
        %v477 = vld [vmem:[#allocation5 + $0x350] sm:$0xff]
        %v478 = vld [vmem:[#allocation5 + $0x358] sm:$0xff]
        %v479 = vld [vmem:[#allocation5 + $0x360] sm:$0xff]
        %v480 = vld [vmem:[#allocation5 + $0x368] sm:$0xff]
        %v481 = vld [vmem:[#allocation5 + $0x370] sm:$0xff]
        %v482 = vld [vmem:[#allocation5 + $0x378] sm:$0xff]
        %v483 = vld [vmem:[#allocation5 + $0x380] sm:$0xff]
        %v484 = vld [vmem:[#allocation5 + $0x388] sm:$0xff]
        %v485 = vld [vmem:[#allocation5 + $0x390] sm:$0xff]
        %v486 = vld [vmem:[#allocation5 + $0x398] sm:$0xff]
        %v487 = vld [vmem:[#allocation5 + $0x3a0] sm:$0xff]
        %v488 = vld [vmem:[#allocation5 + $0x3a8] sm:$0xff]
        %v489 = vld [vmem:[#allocation5 + $0x3b0] sm:$0xff]
        %v490 = vld [vmem:[#allocation5 + $0x3b8] sm:$0xff]
        %v491 = vld [vmem:[#allocation5 + $0x3c0] sm:$0xff]
        %v492 = vld [vmem:[#allocation5 + $0x3c8] sm:$0xff]
        %v493 = vld [vmem:[#allocation5 + $0x3d0] sm:$0xff]
        %v494 = vld [vmem:[#allocation5 + $0x3d8] sm:$0xff]
        %v495 = vld [vmem:[#allocation5 + $0x3e0] sm:$0xff]
        %v496 = vld [vmem:[#allocation5 + $0x3e8] sm:$0xff]
        %v497 = vld [vmem:[#allocation5 + $0x3f0] sm:$0xff]
        %v498 = vld [vmem:[#allocation5 + $0x3f8] sm:$0xff]
        %v499 = vld [vmem:[#allocation5 + $0x400] sm:$0xff]
        %v500 = vld [vmem:[#allocation5 + $0x408] sm:$0xff]
        %v501 = vld [vmem:[#allocation5 + $0x410] sm:$0xff]
        %v502 = vld [vmem:[#allocation5 + $0x418] sm:$0xff]
        %v503 = vld [vmem:[#allocation5 + $0x420] sm:$0xff]
        %v504 = vld [vmem:[#allocation5 + $0x428] sm:$0xff]
        %v505 = vld [vmem:[#allocation5 + $0x430] sm:$0xff]
        %v506 = vld [vmem:[#allocation5 + $0x438] sm:$0xff]
        %v507 = vld [vmem:[#allocation5 + $0x440] sm:$0xff]
        %v508 = vld [vmem:[#allocation5 + $0x448] sm:$0xff]
        %v509 = vld [vmem:[#allocation5 + $0x450] sm:$0xff]
        %v510 = vld [vmem:[#allocation5 + $0x458] sm:$0xff]
        %v511 = vld [vmem:[#allocation5 + $0x460] sm:$0xff]
        %v512 = vld [vmem:[#allocation5 + $0x468] sm:$0xff]
        %v513 = vld [vmem:[#allocation5 + $0x470] sm:$0xff]
        %v514 = vld [vmem:[#allocation5 + $0x478] sm:$0xff]
        %v515 = vld [vmem:[#allocation5 + $0x480] sm:$0xff]
        %v516 = vld [vmem:[#allocation5 + $0x488] sm:$0xff]
        %v517 = vld [vmem:[#allocation5 + $0x490] sm:$0xff]
        %v518 = vld [vmem:[#allocation5 + $0x498] sm:$0xff]
        %v519 = vld [vmem:[#allocation5 + $0x4a0] sm:$0xff]
        %v520 = vld [vmem:[#allocation5 + $0x4a8] sm:$0xff]
        %v521 = vld [vmem:[#allocation5 + $0x4b0] sm:$0xff]
        %v522 = vld [vmem:[#allocation5 + $0x4b8] sm:$0xff]
        %v523 = vld [vmem:[#allocation5 + $0x4c0] sm:$0xff]
        %v524 = vld [vmem:[#allocation5 + $0x4c8] sm:$0xff]
        %v525 = vld [vmem:[#allocation5 + $0x4d0] sm:$0xff]
        %v526 = vld [vmem:[#allocation5 + $0x4d8] sm:$0xff]
        %v527 = vld [vmem:[#allocation5 + $0x4e0] sm:$0xff]
        %v528 = vld [vmem:[#allocation5 + $0x4e8] sm:$0xff]
        %v529 = vld [vmem:[#allocation5 + $0x4f0] sm:$0xff]
        %v530 = vld [vmem:[#allocation5 + $0x4f8] sm:$0xff]
        %v531 = vld [vmem:[#allocation5 + $0x500] sm:$0xff]
        %v532 = vld [vmem:[#allocation5 + $0x508] sm:$0xff]
        %v533 = vld [vmem:[#allocation5 + $0x510] sm:$0xff]
        %v534 = vld [vmem:[#allocation5 + $0x518] sm:$0xff]
        %v535 = vld [vmem:[#allocation5 + $0x520] sm:$0xff]
        %v536 = vld [vmem:[#allocation5 + $0x528] sm:$0xff]
        %v537 = vld [vmem:[#allocation5 + $0x530] sm:$0xff]
        %v538 = vld [vmem:[#allocation5 + $0x538] sm:$0xff]
        %v539 = vld [vmem:[#allocation5 + $0x540] sm:$0xff]
        %v540 = vld [vmem:[#allocation5 + $0x548] sm:$0xff]
        %v541 = vld [vmem:[#allocation5 + $0x550] sm:$0xff]
        %v542 = vld [vmem:[#allocation5 + $0x558] sm:$0xff]
        %v543 = vld [vmem:[#allocation5 + $0x560] sm:$0xff]
        %v544 = vld [vmem:[#allocation5 + $0x568] sm:$0xff]
        %v545 = vld [vmem:[#allocation5 + $0x570] sm:$0xff]
        %v546 = vld [vmem:[#allocation5 + $0x578] sm:$0xff]
        %v547 = vld [vmem:[#allocation5 + $0x580] sm:$0xff]
        %v548 = vld [vmem:[#allocation5 + $0x588] sm:$0xff]
        %v549 = vld [vmem:[#allocation5 + $0x590] sm:$0xff]
        %v550 = vld [vmem:[#allocation5 + $0x598] sm:$0xff]
        %v551 = vld [vmem:[#allocation5 + $0x5a0] sm:$0xff]
        %v552 = vld [vmem:[#allocation5 + $0x5a8] sm:$0xff]
        %v553 = vld [vmem:[#allocation5 + $0x5b0] sm:$0xff]
        %v554 = vld [vmem:[#allocation5 + $0x5b8] sm:$0xff]
        %v555 = vld [vmem:[#allocation5 + $0x5c0] sm:$0xff]
        %v556 = vld [vmem:[#allocation5 + $0x5c8] sm:$0xff]
        %v557 = vld [vmem:[#allocation5 + $0x5d0] sm:$0xff]
        %v558 = vld [vmem:[#allocation5 + $0x5d8] sm:$0xff]
        %v559 = vld [vmem:[#allocation5 + $0x5e0] sm:$0xff]
        %v560 = vld [vmem:[#allocation5 + $0x5e8] sm:$0xff]
        %v561 = vld [vmem:[#allocation5 + $0x5f0] sm:$0xff]
        %v562 = vld [vmem:[#allocation5 + $0x5f8] sm:$0xff]
        %v563 = vld [vmem:[#allocation5 + $0x600] sm:$0xff]
        %v564 = vld [vmem:[#allocation5 + $0x608] sm:$0xff]
        %v565 = vld [vmem:[#allocation5 + $0x610] sm:$0xff]
        %v566 = vld [vmem:[#allocation5 + $0x618] sm:$0xff]
        %v567 = vld [vmem:[#allocation5 + $0x620] sm:$0xff]
        %v568 = vld [vmem:[#allocation5 + $0x628] sm:$0xff]
        %v569 = vld [vmem:[#allocation5 + $0x630] sm:$0xff]
        %v570 = vld [vmem:[#allocation5 + $0x638] sm:$0xff]
        %v571 = vld [vmem:[#allocation7] sm:$0xff]
        %v573 = vlaneseq
        %v574 = vshrl.u32 %v573, 7
        %v575 = vsub.s32 0, %v574
        %v576 = vrot.slane %v571, %v575
        %v577 = vlaneseq
        %v578 = vshrl.u32 %v577, 7
        %v579 = vsub.s32 1, %v578
        %v580 = vrot.slane %v571, %v579
        %v581 = vlaneseq
        %v582 = vshrl.u32 %v581, 7
        %v583 = vsub.s32 2, %v582
        %v584 = vrot.slane %v571, %v583
        %v585 = vlaneseq
        %v586 = vshrl.u32 %v585, 7
        %v587 = vsub.s32 3, %v586
        %v588 = vrot.slane %v571, %v587
        %v589 = vlaneseq
        %v590 = vshrl.u32 %v589, 7
        %v591 = vsub.s32 4, %v590
        %v592 = vrot.slane %v571, %v591
        %v593 = vlaneseq
        %v594 = vshrl.u32 %v593, 7
        %v595 = vsub.s32 5, %v594
        %v596 = vrot.slane %v571, %v595
        %v597 = vlaneseq
        %v598 = vshrl.u32 %v597, 7
        %v599 = vsub.s32 6, %v598
        %v600 = vrot.slane %v571, %v599
        %v601 = vlaneseq
        %v602 = vshrl.u32 %v601, 7
        %v603 = vsub.s32 7, %v602
        %v604 = vrot.slane %v571, %v603
        %v813 = vunpack.c.l.b16 %v371
        %v814 = vunpack.c.h.b16 %v371
        %v815 = vunpack.c.l.b16 %v372
        %v816 = vunpack.c.h.b16 %v372
        %v817 = vunpack.c.l.b16 %v373
        %v818 = vunpack.c.h.b16 %v373
        %v819 = vunpack.c.l.b16 %v374
        %v820 = vunpack.c.h.b16 %v374
        %v821 = vunpack.c.l.b16 %v375
        %v822 = vunpack.c.h.b16 %v375
        %v823 = vunpack.c.l.b16 %v376
        %v824 = vunpack.c.h.b16 %v376
        %v825 = vunpack.c.l.b16 %v377
        %v826 = vunpack.c.h.b16 %v377
        %v827 = vunpack.c.l.b16 %v378
        %v828 = vunpack.c.h.b16 %v378
        %v829 = vunpack.c.l.b16 %v379
        %v830 = vunpack.c.h.b16 %v379
        %v831 = vunpack.c.l.b16 %v380
        %v832 = vunpack.c.h.b16 %v380
        %v833 = vunpack.c.l.b16 %v381
        %v834 = vunpack.c.h.b16 %v381
        %v835 = vunpack.c.l.b16 %v382
        %v836 = vunpack.c.h.b16 %v382
        %v837 = vunpack.c.l.b16 %v383
        %v838 = vunpack.c.h.b16 %v383
        %v839 = vunpack.c.l.b16 %v384
        %v840 = vunpack.c.h.b16 %v384
        %v841 = vunpack.c.l.b16 %v385
        %v842 = vunpack.c.h.b16 %v385
        %v843 = vunpack.c.l.b16 %v386
        %v844 = vunpack.c.h.b16 %v386
        %v845 = vunpack.c.l.b16 %v387
        %v846 = vunpack.c.h.b16 %v387
        %v847 = vunpack.c.l.b16 %v388
        %v848 = vunpack.c.h.b16 %v388
        %v849 = vunpack.c.l.b16 %v389
        %v850 = vunpack.c.h.b16 %v389
        %v851 = vunpack.c.l.b16 %v390
        %v852 = vunpack.c.h.b16 %v390
        %v853 = vunpack.c.l.b16 %v391
        %v854 = vunpack.c.h.b16 %v391
        %v855 = vunpack.c.l.b16 %v392
        %v856 = vunpack.c.h.b16 %v392
        %v857 = vunpack.c.l.b16 %v393
        %v858 = vunpack.c.h.b16 %v393
        %v859 = vunpack.c.l.b16 %v394
        %v860 = vunpack.c.h.b16 %v394
        %v861 = vunpack.c.l.b16 %v395
        %v862 = vunpack.c.h.b16 %v395
        %v863 = vunpack.c.l.b16 %v396
        %v864 = vunpack.c.h.b16 %v396
        %v865 = vunpack.c.l.b16 %v397
        %v866 = vunpack.c.h.b16 %v397
        %v867 = vunpack.c.l.b16 %v398
        %v868 = vunpack.c.h.b16 %v398
        %v869 = vunpack.c.l.b16 %v399
        %v870 = vunpack.c.h.b16 %v399
        %v871 = vunpack.c.l.b16 %v400
        %v872 = vunpack.c.h.b16 %v400
        %v873 = vunpack.c.l.b16 %v401
        %v874 = vunpack.c.h.b16 %v401
        %v875 = vunpack.c.l.b16 %v402
        %v876 = vunpack.c.h.b16 %v402
        %v877 = vunpack.c.l.b16 %v403
        %v878 = vunpack.c.h.b16 %v403
        %v879 = vunpack.c.l.b16 %v404
        %v880 = vunpack.c.h.b16 %v404
        %v881 = vunpack.c.l.b16 %v405
        %v882 = vunpack.c.h.b16 %v405
        %v883 = vunpack.c.l.b16 %v406
        %v884 = vunpack.c.h.b16 %v406
        %v885 = vunpack.c.l.b16 %v407
        %v886 = vunpack.c.h.b16 %v407
        %v887 = vunpack.c.l.b16 %v408
        %v888 = vunpack.c.h.b16 %v408
        %v889 = vunpack.c.l.b16 %v409
        %v890 = vunpack.c.h.b16 %v409
        %v891 = vunpack.c.l.b16 %v410
        %v892 = vunpack.c.h.b16 %v410
        %v893 = vunpack.c.l.b16 %v411
        %v894 = vunpack.c.h.b16 %v411
        %v895 = vunpack.c.l.b16 %v412
        %v896 = vunpack.c.h.b16 %v412
        %v897 = vunpack.c.l.b16 %v413
        %v898 = vunpack.c.h.b16 %v413
        %v899 = vunpack.c.l.b16 %v414
        %v900 = vunpack.c.h.b16 %v414
        %v901 = vunpack.c.l.b16 %v415
        %v902 = vunpack.c.h.b16 %v415
        %v903 = vunpack.c.l.b16 %v416
        %v904 = vunpack.c.h.b16 %v416
        %v905 = vunpack.c.l.b16 %v417
        %v906 = vunpack.c.h.b16 %v417
        %v907 = vunpack.c.l.b16 %v418
        %v908 = vunpack.c.h.b16 %v418
        %v909 = vunpack.c.l.b16 %v419
        %v910 = vunpack.c.h.b16 %v419
        %v911 = vunpack.c.l.b16 %v420
        %v912 = vunpack.c.h.b16 %v420
        %v913 = vunpack.c.l.b16 %v421
        %v914 = vunpack.c.h.b16 %v421
        %v915 = vunpack.c.l.b16 %v422
        %v916 = vunpack.c.h.b16 %v422
        %v917 = vunpack.c.l.b16 %v423
        %v918 = vunpack.c.h.b16 %v423
        %v919 = vunpack.c.l.b16 %v424
        %v920 = vunpack.c.h.b16 %v424
        %v921 = vunpack.c.l.b16 %v425
        %v922 = vunpack.c.h.b16 %v425
        %v923 = vunpack.c.l.b16 %v426
        %v924 = vunpack.c.h.b16 %v426
        %v925 = vunpack.c.l.b16 %v427
        %v926 = vunpack.c.h.b16 %v427
        %v927 = vunpack.c.l.b16 %v428
        %v928 = vunpack.c.h.b16 %v428
        %v929 = vunpack.c.l.b16 %v429
        %v930 = vunpack.c.h.b16 %v429
        %v931 = vunpack.c.l.b16 %v430
        %v932 = vunpack.c.h.b16 %v430
        %v933 = vunpack.c.l.b16 %v431
        %v934 = vunpack.c.h.b16 %v431
        %v935 = vunpack.c.l.b16 %v432
        %v936 = vunpack.c.h.b16 %v432
        %v937 = vunpack.c.l.b16 %v433
        %v938 = vunpack.c.h.b16 %v433
        %v939 = vunpack.c.l.b16 %v434
        %v940 = vunpack.c.h.b16 %v434
        %v941 = vunpack.c.l.b16 %v435
        %v942 = vunpack.c.h.b16 %v435
        %v943 = vunpack.c.l.b16 %v436
        %v944 = vunpack.c.h.b16 %v436
        %v945 = vunpack.c.l.b16 %v437
        %v946 = vunpack.c.h.b16 %v437
        %v947 = vunpack.c.l.b16 %v438
        %v948 = vunpack.c.h.b16 %v438
        %v949 = vunpack.c.l.b16 %v439
        %v950 = vunpack.c.h.b16 %v439
        %v951 = vunpack.c.l.b16 %v440
        %v952 = vunpack.c.h.b16 %v440
        %v953 = vunpack.c.l.b16 %v441
        %v954 = vunpack.c.h.b16 %v441
        %v955 = vunpack.c.l.b16 %v442
        %v956 = vunpack.c.h.b16 %v442
        %v957 = vunpack.c.l.b16 %v443
        %v958 = vunpack.c.h.b16 %v443
        %v959 = vunpack.c.l.b16 %v444
        %v960 = vunpack.c.h.b16 %v444
        %v961 = vunpack.c.l.b16 %v445
        %v962 = vunpack.c.h.b16 %v445
        %v963 = vunpack.c.l.b16 %v446
        %v964 = vunpack.c.h.b16 %v446
        %v965 = vunpack.c.l.b16 %v447
        %v966 = vunpack.c.h.b16 %v447
        %v967 = vunpack.c.l.b16 %v448
        %v968 = vunpack.c.h.b16 %v448
        %v969 = vunpack.c.l.b16 %v449
        %v970 = vunpack.c.h.b16 %v449
        %v971 = vunpack.c.l.b16 %v450
        %v972 = vunpack.c.h.b16 %v450
        %v973 = vunpack.c.l.b16 %v451
        %v974 = vunpack.c.h.b16 %v451
        %v975 = vunpack.c.l.b16 %v452
        %v976 = vunpack.c.h.b16 %v452
        %v977 = vunpack.c.l.b16 %v453
        %v978 = vunpack.c.h.b16 %v453
        %v979 = vunpack.c.l.b16 %v454
        %v980 = vunpack.c.h.b16 %v454
        %v981 = vunpack.c.l.b16 %v455
        %v982 = vunpack.c.h.b16 %v455
        %v983 = vunpack.c.l.b16 %v456
        %v984 = vunpack.c.h.b16 %v456
        %v985 = vunpack.c.l.b16 %v457
        %v986 = vunpack.c.h.b16 %v457
        %v987 = vunpack.c.l.b16 %v458
        %v988 = vunpack.c.h.b16 %v458
        %v989 = vunpack.c.l.b16 %v459
        %v990 = vunpack.c.h.b16 %v459
        %v991 = vunpack.c.l.b16 %v460
        %v992 = vunpack.c.h.b16 %v460
        %v993 = vunpack.c.l.b16 %v461
        %v994 = vunpack.c.h.b16 %v461
        %v995 = vunpack.c.l.b16 %v462
        %v996 = vunpack.c.h.b16 %v462
        %v997 = vunpack.c.l.b16 %v463
        %v998 = vunpack.c.h.b16 %v463
        %v999 = vunpack.c.l.b16 %v464
        %v1000 = vunpack.c.h.b16 %v464
        %v1001 = vunpack.c.l.b16 %v465
        %v1002 = vunpack.c.h.b16 %v465
        %v1003 = vunpack.c.l.b16 %v466
        %v1004 = vunpack.c.h.b16 %v466
        %v1005 = vunpack.c.l.b16 %v467
        %v1006 = vunpack.c.h.b16 %v467
        %v1007 = vunpack.c.l.b16 %v468
        %v1008 = vunpack.c.h.b16 %v468
        %v1009 = vunpack.c.l.b16 %v469
        %v1010 = vunpack.c.h.b16 %v469
        %v1011 = vunpack.c.l.b16 %v470
        %v1012 = vunpack.c.h.b16 %v470
        %v1013 = vunpack.c.l.b16 %v471
        %v1014 = vunpack.c.h.b16 %v471
        %v1015 = vunpack.c.l.b16 %v472
        %v1016 = vunpack.c.h.b16 %v472
        %v1017 = vunpack.c.l.b16 %v473
        %v1018 = vunpack.c.h.b16 %v473
        %v1019 = vunpack.c.l.b16 %v474
        %v1020 = vunpack.c.h.b16 %v474
        %v1021 = vunpack.c.l.b16 %v475
        %v1022 = vunpack.c.h.b16 %v475
        %v1023 = vunpack.c.l.b16 %v476
        %v1024 = vunpack.c.h.b16 %v476
        %v1025 = vunpack.c.l.b16 %v477
        %v1026 = vunpack.c.h.b16 %v477
        %v1027 = vunpack.c.l.b16 %v478
        %v1028 = vunpack.c.h.b16 %v478
        %v1029 = vunpack.c.l.b16 %v479
        %v1030 = vunpack.c.h.b16 %v479
        %v1031 = vunpack.c.l.b16 %v480
        %v1032 = vunpack.c.h.b16 %v480
        %v1033 = vunpack.c.l.b16 %v481
        %v1034 = vunpack.c.h.b16 %v481
        %v1035 = vunpack.c.l.b16 %v482
        %v1036 = vunpack.c.h.b16 %v482
        %v1037 = vunpack.c.l.b16 %v483
        %v1038 = vunpack.c.h.b16 %v483
        %v1039 = vunpack.c.l.b16 %v484
        %v1040 = vunpack.c.h.b16 %v484
        %v1041 = vunpack.c.l.b16 %v485
        %v1042 = vunpack.c.h.b16 %v485
        %v1043 = vunpack.c.l.b16 %v486
        %v1044 = vunpack.c.h.b16 %v486
        %v1045 = vunpack.c.l.b16 %v487
        %v1046 = vunpack.c.h.b16 %v487
        %v1047 = vunpack.c.l.b16 %v488
        %v1048 = vunpack.c.h.b16 %v488
        %v1049 = vunpack.c.l.b16 %v489
        %v1050 = vunpack.c.h.b16 %v489
        %v1051 = vunpack.c.l.b16 %v490
        %v1052 = vunpack.c.h.b16 %v490
        %v1053 = vunpack.c.l.b16 %v491
        %v1054 = vunpack.c.h.b16 %v491
        %v1055 = vunpack.c.l.b16 %v492
        %v1056 = vunpack.c.h.b16 %v492
        %v1057 = vunpack.c.l.b16 %v493
        %v1058 = vunpack.c.h.b16 %v493
        %v1059 = vunpack.c.l.b16 %v494
        %v1060 = vunpack.c.h.b16 %v494
        %v1061 = vunpack.c.l.b16 %v495
        %v1062 = vunpack.c.h.b16 %v495
        %v1063 = vunpack.c.l.b16 %v496
        %v1064 = vunpack.c.h.b16 %v496
        %v1065 = vunpack.c.l.b16 %v497
        %v1066 = vunpack.c.h.b16 %v497
        %v1067 = vunpack.c.l.b16 %v498
        %v1068 = vunpack.c.h.b16 %v498
        %v1069 = vunpack.c.l.b16 %v499
        %v1070 = vunpack.c.h.b16 %v499
        %v1071 = vunpack.c.l.b16 %v500
        %v1072 = vunpack.c.h.b16 %v500
        %v1073 = vunpack.c.l.b16 %v501
        %v1074 = vunpack.c.h.b16 %v501
        %v1075 = vunpack.c.l.b16 %v502
        %v1076 = vunpack.c.h.b16 %v502
        %v1077 = vunpack.c.l.b16 %v503
        %v1078 = vunpack.c.h.b16 %v503
        %v1079 = vunpack.c.l.b16 %v504
        %v1080 = vunpack.c.h.b16 %v504
        %v1081 = vunpack.c.l.b16 %v505
        %v1082 = vunpack.c.h.b16 %v505
        %v1083 = vunpack.c.l.b16 %v506
        %v1084 = vunpack.c.h.b16 %v506
        %v1085 = vunpack.c.l.b16 %v507
        %v1086 = vunpack.c.h.b16 %v507
        %v1087 = vunpack.c.l.b16 %v508
        %v1088 = vunpack.c.h.b16 %v508
        %v1089 = vunpack.c.l.b16 %v509
        %v1090 = vunpack.c.h.b16 %v509
        %v1091 = vunpack.c.l.b16 %v510
        %v1092 = vunpack.c.h.b16 %v510
        %v1093 = vunpack.c.l.b16 %v511
        %v1094 = vunpack.c.h.b16 %v511
        %v1095 = vunpack.c.l.b16 %v512
        %v1096 = vunpack.c.h.b16 %v512
        %v1097 = vunpack.c.l.b16 %v513
        %v1098 = vunpack.c.h.b16 %v513
        %v1099 = vunpack.c.l.b16 %v514
        %v1100 = vunpack.c.h.b16 %v514
        %v1101 = vunpack.c.l.b16 %v515
        %v1102 = vunpack.c.h.b16 %v515
        %v1103 = vunpack.c.l.b16 %v516
        %v1104 = vunpack.c.h.b16 %v516
        %v1105 = vunpack.c.l.b16 %v517
        %v1106 = vunpack.c.h.b16 %v517
        %v1107 = vunpack.c.l.b16 %v518
        %v1108 = vunpack.c.h.b16 %v518
        %v1109 = vunpack.c.l.b16 %v519
        %v1110 = vunpack.c.h.b16 %v519
        %v1111 = vunpack.c.l.b16 %v520
        %v1112 = vunpack.c.h.b16 %v520
        %v1113 = vunpack.c.l.b16 %v521
        %v1114 = vunpack.c.h.b16 %v521
        %v1115 = vunpack.c.l.b16 %v522
        %v1116 = vunpack.c.h.b16 %v522
        %v1117 = vunpack.c.l.b16 %v523
        %v1118 = vunpack.c.h.b16 %v523
        %v1119 = vunpack.c.l.b16 %v524
        %v1120 = vunpack.c.h.b16 %v524
        %v1121 = vunpack.c.l.b16 %v525
        %v1122 = vunpack.c.h.b16 %v525
        %v1123 = vunpack.c.l.b16 %v526
        %v1124 = vunpack.c.h.b16 %v526
        %v1125 = vunpack.c.l.b16 %v527
        %v1126 = vunpack.c.h.b16 %v527
        %v1127 = vunpack.c.l.b16 %v528
        %v1128 = vunpack.c.h.b16 %v528
        %v1129 = vunpack.c.l.b16 %v529
        %v1130 = vunpack.c.h.b16 %v529
        %v1131 = vunpack.c.l.b16 %v530
        %v1132 = vunpack.c.h.b16 %v530
        %v1133 = vunpack.c.l.b16 %v531
        %v1134 = vunpack.c.h.b16 %v531
        %v1135 = vunpack.c.l.b16 %v532
        %v1136 = vunpack.c.h.b16 %v532
        %v1137 = vunpack.c.l.b16 %v533
        %v1138 = vunpack.c.h.b16 %v533
        %v1139 = vunpack.c.l.b16 %v534
        %v1140 = vunpack.c.h.b16 %v534
        %v1141 = vunpack.c.l.b16 %v535
        %v1142 = vunpack.c.h.b16 %v535
        %v1143 = vunpack.c.l.b16 %v536
        %v1144 = vunpack.c.h.b16 %v536
        %v1145 = vunpack.c.l.b16 %v537
        %v1146 = vunpack.c.h.b16 %v537
        %v1147 = vunpack.c.l.b16 %v538
        %v1148 = vunpack.c.h.b16 %v538
        %v1149 = vunpack.c.l.b16 %v539
        %v1150 = vunpack.c.h.b16 %v539
        %v1151 = vunpack.c.l.b16 %v540
        %v1152 = vunpack.c.h.b16 %v540
        %v1153 = vunpack.c.l.b16 %v541
        %v1154 = vunpack.c.h.b16 %v541
        %v1155 = vunpack.c.l.b16 %v542
        %v1156 = vunpack.c.h.b16 %v542
        %v1157 = vunpack.c.l.b16 %v543
        %v1158 = vunpack.c.h.b16 %v543
        %v1159 = vunpack.c.l.b16 %v544
        %v1160 = vunpack.c.h.b16 %v544
        %v1161 = vunpack.c.l.b16 %v545
        %v1162 = vunpack.c.h.b16 %v545
        %v1163 = vunpack.c.l.b16 %v546
        %v1164 = vunpack.c.h.b16 %v546
        %v1165 = vunpack.c.l.b16 %v547
        %v1166 = vunpack.c.h.b16 %v547
        %v1167 = vunpack.c.l.b16 %v548
        %v1168 = vunpack.c.h.b16 %v548
        %v1169 = vunpack.c.l.b16 %v549
        %v1170 = vunpack.c.h.b16 %v549
        %v1171 = vunpack.c.l.b16 %v550
        %v1172 = vunpack.c.h.b16 %v550
        %v1173 = vunpack.c.l.b16 %v551
        %v1174 = vunpack.c.h.b16 %v551
        %v1175 = vunpack.c.l.b16 %v552
        %v1176 = vunpack.c.h.b16 %v552
        %v1177 = vunpack.c.l.b16 %v553
        %v1178 = vunpack.c.h.b16 %v553
        %v1179 = vunpack.c.l.b16 %v554
        %v1180 = vunpack.c.h.b16 %v554
        %v1181 = vunpack.c.l.b16 %v555
        %v1182 = vunpack.c.h.b16 %v555
        %v1183 = vunpack.c.l.b16 %v556
        %v1184 = vunpack.c.h.b16 %v556
        %v1185 = vunpack.c.l.b16 %v557
        %v1186 = vunpack.c.h.b16 %v557
        %v1187 = vunpack.c.l.b16 %v558
        %v1188 = vunpack.c.h.b16 %v558
        %v1189 = vunpack.c.l.b16 %v559
        %v1190 = vunpack.c.h.b16 %v559
        %v1191 = vunpack.c.l.b16 %v560
        %v1192 = vunpack.c.h.b16 %v560
        %v1193 = vunpack.c.l.b16 %v561
        %v1194 = vunpack.c.h.b16 %v561
        %v1195 = vunpack.c.l.b16 %v562
        %v1196 = vunpack.c.h.b16 %v562
        %v1197 = vunpack.c.l.b16 %v563
        %v1198 = vunpack.c.h.b16 %v563
        %v1199 = vunpack.c.l.b16 %v564
        %v1200 = vunpack.c.h.b16 %v564
        %v1201 = vunpack.c.l.b16 %v565
        %v1202 = vunpack.c.h.b16 %v565
        %v1203 = vunpack.c.l.b16 %v566
        %v1204 = vunpack.c.h.b16 %v566
        %v1205 = vunpack.c.l.b16 %v567
        %v1206 = vunpack.c.h.b16 %v567
        %v1207 = vunpack.c.l.b16 %v568
        %v1208 = vunpack.c.h.b16 %v568
        %v1209 = vunpack.c.l.b16 %v569
        %v1210 = vunpack.c.h.b16 %v569
        %v1211 = vunpack.c.l.b16 %v570
        %v1212 = vunpack.c.h.b16 %v570
        %v1213 = vpack.c.b16 %v821, %v813
        %v1214 = vpack.c.b16 %v822, %v814
        %v1215 = vpack.c.b16 %v823, %v815
        %v1216 = vpack.c.b16 %v824, %v816
        %v1217 = vpack.c.b16 %v825, %v817
        %v1218 = vpack.c.b16 %v826, %v818
        %v1219 = vpack.c.b16 %v827, %v819
        %v1220 = vpack.c.b16 %v828, %v820
        %v1221 = vpack.c.b16 %v837, %v829
        %v1222 = vpack.c.b16 %v838, %v830
        %v1223 = vpack.c.b16 %v839, %v831
        %v1224 = vpack.c.b16 %v840, %v832
        %v1225 = vpack.c.b16 %v841, %v833
        %v1226 = vpack.c.b16 %v842, %v834
        %v1227 = vpack.c.b16 %v843, %v835
        %v1228 = vpack.c.b16 %v844, %v836
        %v1229 = vpack.c.b16 %v853, %v845
        %v1230 = vpack.c.b16 %v854, %v846
        %v1231 = vpack.c.b16 %v855, %v847
        %v1232 = vpack.c.b16 %v856, %v848
        %v1233 = vpack.c.b16 %v857, %v849
        %v1234 = vpack.c.b16 %v858, %v850
        %v1235 = vpack.c.b16 %v859, %v851
        %v1236 = vpack.c.b16 %v860, %v852
        %v1237 = vpack.c.b16 %v869, %v861
        %v1238 = vpack.c.b16 %v870, %v862
        %v1239 = vpack.c.b16 %v871, %v863
        %v1240 = vpack.c.b16 %v872, %v864
        %v1241 = vpack.c.b16 %v873, %v865
        %v1242 = vpack.c.b16 %v874, %v866
        %v1243 = vpack.c.b16 %v875, %v867
        %v1244 = vpack.c.b16 %v876, %v868
        %v1245 = vpack.c.b16 %v885, %v877
        %v1246 = vpack.c.b16 %v886, %v878
        %v1247 = vpack.c.b16 %v887, %v879
        %v1248 = vpack.c.b16 %v888, %v880
        %v1249 = vpack.c.b16 %v889, %v881
        %v1250 = vpack.c.b16 %v890, %v882
        %v1251 = vpack.c.b16 %v891, %v883
        %v1252 = vpack.c.b16 %v892, %v884
        %v1253 = vpack.c.b16 %v901, %v893
        %v1254 = vpack.c.b16 %v902, %v894
        %v1255 = vpack.c.b16 %v903, %v895
        %v1256 = vpack.c.b16 %v904, %v896
        %v1257 = vpack.c.b16 %v905, %v897
        %v1258 = vpack.c.b16 %v906, %v898
        %v1259 = vpack.c.b16 %v907, %v899
        %v1260 = vpack.c.b16 %v908, %v900
        %v1261 = vpack.c.b16 %v917, %v909
        %v1262 = vpack.c.b16 %v918, %v910
        %v1263 = vpack.c.b16 %v919, %v911
        %v1264 = vpack.c.b16 %v920, %v912
        %v1265 = vpack.c.b16 %v921, %v913
        %v1266 = vpack.c.b16 %v922, %v914
        %v1267 = vpack.c.b16 %v923, %v915
        %v1268 = vpack.c.b16 %v924, %v916
        %v1269 = vpack.c.b16 %v933, %v925
        %v1270 = vpack.c.b16 %v934, %v926
        %v1271 = vpack.c.b16 %v935, %v927
        %v1272 = vpack.c.b16 %v936, %v928
        %v1273 = vpack.c.b16 %v937, %v929
        %v1274 = vpack.c.b16 %v938, %v930
        %v1275 = vpack.c.b16 %v939, %v931
        %v1276 = vpack.c.b16 %v940, %v932
        %v1277 = vpack.c.b16 %v949, %v941
        %v1278 = vpack.c.b16 %v950, %v942
        %v1279 = vpack.c.b16 %v951, %v943
        %v1280 = vpack.c.b16 %v952, %v944
        %v1281 = vpack.c.b16 %v953, %v945
        %v1282 = vpack.c.b16 %v954, %v946
        %v1283 = vpack.c.b16 %v955, %v947
        %v1284 = vpack.c.b16 %v956, %v948
        %v1285 = vpack.c.b16 %v965, %v957
        %v1286 = vpack.c.b16 %v966, %v958
        %v1287 = vpack.c.b16 %v967, %v959
        %v1288 = vpack.c.b16 %v968, %v960
        %v1289 = vpack.c.b16 %v969, %v961
        %v1290 = vpack.c.b16 %v970, %v962
        %v1291 = vpack.c.b16 %v971, %v963
        %v1292 = vpack.c.b16 %v972, %v964
        %v1293 = vpack.c.b16 %v981, %v973
        %v1294 = vpack.c.b16 %v982, %v974
        %v1295 = vpack.c.b16 %v983, %v975
        %v1296 = vpack.c.b16 %v984, %v976
        %v1297 = vpack.c.b16 %v985, %v977
        %v1298 = vpack.c.b16 %v986, %v978
        %v1299 = vpack.c.b16 %v987, %v979
        %v1300 = vpack.c.b16 %v988, %v980
        %v1301 = vpack.c.b16 %v997, %v989
        %v1302 = vpack.c.b16 %v998, %v990
        %v1303 = vpack.c.b16 %v999, %v991
        %v1304 = vpack.c.b16 %v1000, %v992
        %v1305 = vpack.c.b16 %v1001, %v993
        %v1306 = vpack.c.b16 %v1002, %v994
        %v1307 = vpack.c.b16 %v1003, %v995
        %v1308 = vpack.c.b16 %v1004, %v996
        %v1309 = vpack.c.b16 %v1013, %v1005
        %v1310 = vpack.c.b16 %v1014, %v1006
        %v1311 = vpack.c.b16 %v1015, %v1007
        %v1312 = vpack.c.b16 %v1016, %v1008
        %v1313 = vpack.c.b16 %v1017, %v1009
        %v1314 = vpack.c.b16 %v1018, %v1010
        %v1315 = vpack.c.b16 %v1019, %v1011
        %v1316 = vpack.c.b16 %v1020, %v1012
        %v1317 = vpack.c.b16 %v1029, %v1021
        %v1318 = vpack.c.b16 %v1030, %v1022
        %v1319 = vpack.c.b16 %v1031, %v1023
        %v1320 = vpack.c.b16 %v1032, %v1024
        %v1321 = vpack.c.b16 %v1033, %v1025
        %v1322 = vpack.c.b16 %v1034, %v1026
        %v1323 = vpack.c.b16 %v1035, %v1027
        %v1324 = vpack.c.b16 %v1036, %v1028
        %v1325 = vpack.c.b16 %v1045, %v1037
        %v1326 = vpack.c.b16 %v1046, %v1038
        %v1327 = vpack.c.b16 %v1047, %v1039
        %v1328 = vpack.c.b16 %v1048, %v1040
        %v1329 = vpack.c.b16 %v1049, %v1041
        %v1330 = vpack.c.b16 %v1050, %v1042
        %v1331 = vpack.c.b16 %v1051, %v1043
        %v1332 = vpack.c.b16 %v1052, %v1044
        %v1333 = vpack.c.b16 %v1061, %v1053
        %v1334 = vpack.c.b16 %v1062, %v1054
        %v1335 = vpack.c.b16 %v1063, %v1055
        %v1336 = vpack.c.b16 %v1064, %v1056
        %v1337 = vpack.c.b16 %v1065, %v1057
        %v1338 = vpack.c.b16 %v1066, %v1058
        %v1339 = vpack.c.b16 %v1067, %v1059
        %v1340 = vpack.c.b16 %v1068, %v1060
        %v1341 = vpack.c.b16 %v1077, %v1069
        %v1342 = vpack.c.b16 %v1078, %v1070
        %v1343 = vpack.c.b16 %v1079, %v1071
        %v1344 = vpack.c.b16 %v1080, %v1072
        %v1345 = vpack.c.b16 %v1081, %v1073
        %v1346 = vpack.c.b16 %v1082, %v1074
        %v1347 = vpack.c.b16 %v1083, %v1075
        %v1348 = vpack.c.b16 %v1084, %v1076
        %v1349 = vpack.c.b16 %v1093, %v1085
        %v1350 = vpack.c.b16 %v1094, %v1086
        %v1351 = vpack.c.b16 %v1095, %v1087
        %v1352 = vpack.c.b16 %v1096, %v1088
        %v1353 = vpack.c.b16 %v1097, %v1089
        %v1354 = vpack.c.b16 %v1098, %v1090
        %v1355 = vpack.c.b16 %v1099, %v1091
        %v1356 = vpack.c.b16 %v1100, %v1092
        %v1357 = vpack.c.b16 %v1109, %v1101
        %v1358 = vpack.c.b16 %v1110, %v1102
        %v1359 = vpack.c.b16 %v1111, %v1103
        %v1360 = vpack.c.b16 %v1112, %v1104
        %v1361 = vpack.c.b16 %v1113, %v1105
        %v1362 = vpack.c.b16 %v1114, %v1106
        %v1363 = vpack.c.b16 %v1115, %v1107
        %v1364 = vpack.c.b16 %v1116, %v1108
        %v1365 = vpack.c.b16 %v1125, %v1117
        %v1366 = vpack.c.b16 %v1126, %v1118
        %v1367 = vpack.c.b16 %v1127, %v1119
        %v1368 = vpack.c.b16 %v1128, %v1120
        %v1369 = vpack.c.b16 %v1129, %v1121
        %v1370 = vpack.c.b16 %v1130, %v1122
        %v1371 = vpack.c.b16 %v1131, %v1123
        %v1372 = vpack.c.b16 %v1132, %v1124
        %v1373 = vpack.c.b16 %v1141, %v1133
        %v1374 = vpack.c.b16 %v1142, %v1134
        %v1375 = vpack.c.b16 %v1143, %v1135
        %v1376 = vpack.c.b16 %v1144, %v1136
        %v1377 = vpack.c.b16 %v1145, %v1137
        %v1378 = vpack.c.b16 %v1146, %v1138
        %v1379 = vpack.c.b16 %v1147, %v1139
        %v1380 = vpack.c.b16 %v1148, %v1140
        %v1381 = vpack.c.b16 %v1157, %v1149
        %v1382 = vpack.c.b16 %v1158, %v1150
        %v1383 = vpack.c.b16 %v1159, %v1151
        %v1384 = vpack.c.b16 %v1160, %v1152
        %v1385 = vpack.c.b16 %v1161, %v1153
        %v1386 = vpack.c.b16 %v1162, %v1154
        %v1387 = vpack.c.b16 %v1163, %v1155
        %v1388 = vpack.c.b16 %v1164, %v1156
        %v1389 = vpack.c.b16 %v1173, %v1165
        %v1390 = vpack.c.b16 %v1174, %v1166
        %v1391 = vpack.c.b16 %v1175, %v1167
        %v1392 = vpack.c.b16 %v1176, %v1168
        %v1393 = vpack.c.b16 %v1177, %v1169
        %v1394 = vpack.c.b16 %v1178, %v1170
        %v1395 = vpack.c.b16 %v1179, %v1171
        %v1396 = vpack.c.b16 %v1180, %v1172
        %v1397 = vpack.c.b16 %v1189, %v1181
        %v1398 = vpack.c.b16 %v1190, %v1182
        %v1399 = vpack.c.b16 %v1191, %v1183
        %v1400 = vpack.c.b16 %v1192, %v1184
        %v1401 = vpack.c.b16 %v1193, %v1185
        %v1402 = vpack.c.b16 %v1194, %v1186
        %v1403 = vpack.c.b16 %v1195, %v1187
        %v1404 = vpack.c.b16 %v1196, %v1188
        %v1405 = vpack.c.b16 %v1205, %v1197
        %v1406 = vpack.c.b16 %v1206, %v1198
        %v1407 = vpack.c.b16 %v1207, %v1199
        %v1408 = vpack.c.b16 %v1208, %v1200
        %v1409 = vpack.c.b16 %v1209, %v1201
        %v1410 = vpack.c.b16 %v1210, %v1202
        %v1411 = vpack.c.b16 %v1211, %v1203
        %v1412 = vpack.c.b16 %v1212, %v1204
        %vm1613 = vcmask 130048
        %v1615 = vsel %vm1613, %v370, 0
        %1617 = vmatprep.subr.bf16.mxu0 %v1214
        %1618 = vmatpush1.bf16.msra.mxu0 %v1213
        %1619 = vmatprep.subr.bf16.mxu0 %v1222
        %1620 = vmatpush1.bf16.msra.mxu0 %v1221
        %1621 = vmatprep.subr.bf16.mxu0 %v1230
        %1622 = vmatpush1.bf16.msra.mxu0 %v1229
        %1623 = vmatprep.subr.bf16.mxu0 %v1238
        %1624 = vmatpush1.bf16.msra.mxu0 %v1237
        %1625 = vmatprep.subr.bf16.mxu0 %v1246
        %1626 = vmatpush1.bf16.msra.mxu0 %v1245
        %1627 = vmatprep.subr.bf16.mxu0 %v1254
        %1628 = vmatpush1.bf16.msra.mxu0 %v1253
        %1629 = vmatprep.subr.bf16.mxu0 %v1262
        %1630 = vmatpush1.bf16.msra.mxu0 %v1261
        %1631 = vmatprep.subr.bf16.mxu0 %v1270
        %1632 = vmatpush1.bf16.msra.mxu0 %v1269
        %1633 = vmatprep.subr.bf16.mxu0 %v1278
        %1634 = vmatpush1.bf16.msra.mxu0 %v1277
        %1635 = vmatprep.subr.bf16.mxu0 %v1286
        %1636 = vmatpush1.bf16.msra.mxu0 %v1285
        %1637 = vmatprep.subr.bf16.mxu0 %v1294
        %1638 = vmatpush1.bf16.msra.mxu0 %v1293
        %1639 = vmatprep.subr.bf16.mxu0 %v1302
        %1640 = vmatpush1.bf16.msra.mxu0 %v1301
        %1641 = vmatprep.subr.bf16.mxu0 %v1310
        %1642 = vmatpush1.bf16.msra.mxu0 %v1309
        %1643 = vmatprep.subr.bf16.mxu0 %v1318
        %1644 = vmatpush1.bf16.msra.mxu0 %v1317
        %1645 = vmatprep.subr.bf16.mxu0 %v1326
        %1646 = vmatpush1.bf16.msra.mxu0 %v1325
        %1647 = vmatprep.subr.bf16.mxu0 %v1334
        %1648 = vmatpush1.bf16.msra.mxu0 %v1333
        %1649 = vmatprep.mubr.bf16.mxu0 %v368
        %1650 = vmatmul.mubr.bf16.gmra.mrb[0].mxu0 %v367
        %v1651 = vpop.f32.mrb[0].mxu0
        %v1652 = vadd.f32 %v576, %v1651
        %v1653 = vpop.f32.mrb[0].mxu0
        %v1654 = vadd.f32 %v580, %v1653
        %v1655 = vpop.f32.mrb[0].mxu0
        %v1656 = vpop.f32.mrb[0].mxu0
        %1657 = vdwg.mxu0
        %1658 = vmatprep.subr.bf16.mxu0 %v1342
        %1659 = vmatpush1.bf16.msra.mxu0 %v1341
        %1660 = vmatprep.subr.bf16.mxu0 %v1350
        %1661 = vmatpush1.bf16.msra.mxu0 %v1349
        %1662 = vmatprep.subr.bf16.mxu0 %v1358
        %1663 = vmatpush1.bf16.msra.mxu0 %v1357
        %1664 = vmatprep.subr.bf16.mxu0 %v1366
        %1665 = vmatpush1.bf16.msra.mxu0 %v1365
        %1666 = vmatprep.subr.bf16.mxu0 %v1374
        %1667 = vmatpush1.bf16.msra.mxu0 %v1373
        %1668 = vmatprep.subr.bf16.mxu0 %v1382
        %1669 = vmatpush1.bf16.msra.mxu0 %v1381
        %1670 = vmatprep.subr.bf16.mxu0 %v1390
        %1671 = vmatpush1.bf16.msra.mxu0 %v1389
        %1672 = vmatprep.subr.bf16.mxu0 %v1398
        %1673 = vmatpush1.bf16.msra.mxu0 %v1397
        %1674 = vmatprep.subr.bf16.mxu0 %v1406
        %1675 = vmatpush1.bf16.msra.mxu0 %v1405
        %1676 = vmatprep.subr.bf16.mxu0 0
        %1677 = vmatpush1.bf16.msra.mxu0 0
        %1678 = vmatprep.subr.bf16.mxu0 0
        %1679 = vmatpush1.bf16.msra.mxu0 0
        %1680 = vmatprep.subr.bf16.mxu0 0
        %1681 = vmatpush1.bf16.msra.mxu0 0
        %1682 = vmatprep.subr.bf16.mxu0 0
        %1683 = vmatpush1.bf16.msra.mxu0 0
        %1684 = vmatprep.subr.bf16.mxu0 0
        %1685 = vmatpush1.bf16.msra.mxu0 0
        %1686 = vmatprep.subr.bf16.mxu0 0
        %1687 = vmatpush1.bf16.msra.mxu0 0
        %1688 = vmatprep.subr.bf16.mxu0 0
        %1689 = vmatpush1.bf16.msra.mxu0 0
        %1690 = vmatprep.mubr.bf16.mxu0 %v1615
        %1691 = vmatmul.mubr.bf16.gmra.mrb[0].mxu0 %v369
        %v1692 = vpop.f32.mrb[0].mxu0
        %v1693 = vadd.f32 %v1652, %v1692
        %v1694 = vpop.f32.mrb[0].mxu0
        %v1695 = vadd.f32 %v1654, %v1694
        %v1696 = vpop.f32.mrb[0].mxu0
        %v1697 = vpop.f32.mrb[0].mxu0
        %1698 = vdwg.mxu0
        %1699 = vmatprep.subr.bf16.mxu0 %v1216
        %1700 = vmatpush1.bf16.msra.mxu0 %v1215
        %1701 = vmatprep.subr.bf16.mxu0 %v1224
        %1702 = vmatpush1.bf16.msra.mxu0 %v1223
        %1703 = vmatprep.subr.bf16.mxu0 %v1232
        %1704 = vmatpush1.bf16.msra.mxu0 %v1231
        %1705 = vmatprep.subr.bf16.mxu0 %v1240
        %1706 = vmatpush1.bf16.msra.mxu0 %v1239
        %1707 = vmatprep.subr.bf16.mxu0 %v1248
        %1708 = vmatpush1.bf16.msra.mxu0 %v1247
        %1709 = vmatprep.subr.bf16.mxu0 %v1256
        %1710 = vmatpush1.bf16.msra.mxu0 %v1255
        %1711 = vmatprep.subr.bf16.mxu0 %v1264
        %1712 = vmatpush1.bf16.msra.mxu0 %v1263
        %1713 = vmatprep.subr.bf16.mxu0 %v1272
        %1714 = vmatpush1.bf16.msra.mxu0 %v1271
        %1715 = vmatprep.subr.bf16.mxu0 %v1280
        %1716 = vmatpush1.bf16.msra.mxu0 %v1279
        %1717 = vmatprep.subr.bf16.mxu0 %v1288
        %1718 = vmatpush1.bf16.msra.mxu0 %v1287
        %1719 = vmatprep.subr.bf16.mxu0 %v1296
        %1720 = vmatpush1.bf16.msra.mxu0 %v1295
        %1721 = vmatprep.subr.bf16.mxu0 %v1304
        %1722 = vmatpush1.bf16.msra.mxu0 %v1303
        %1723 = vmatprep.subr.bf16.mxu0 %v1312
        %1724 = vmatpush1.bf16.msra.mxu0 %v1311
        %1725 = vmatprep.subr.bf16.mxu0 %v1320
        %1726 = vmatpush1.bf16.msra.mxu0 %v1319
        %1727 = vmatprep.subr.bf16.mxu0 %v1328
        %1728 = vmatpush1.bf16.msra.mxu0 %v1327
        %1729 = vmatprep.subr.bf16.mxu0 %v1336
        %1730 = vmatpush1.bf16.msra.mxu0 %v1335
        %1731 = vmatprep.mubr.bf16.mxu0 %v368
        %1732 = vmatmul.mubr.bf16.gmra.mrb[0].mxu0 %v367
        %v1733 = vpop.f32.mrb[0].mxu0
        %v1734 = vadd.f32 %v584, %v1733
        %v1735 = vpop.f32.mrb[0].mxu0
        %v1736 = vadd.f32 %v588, %v1735
        %v1737 = vpop.f32.mrb[0].mxu0
        %v1738 = vpop.f32.mrb[0].mxu0
        %1739 = vdwg.mxu0
        %1740 = vmatprep.subr.bf16.mxu0 %v1344
        %1741 = vmatpush1.bf16.msra.mxu0 %v1343
        %1742 = vmatprep.subr.bf16.mxu0 %v1352
        %1743 = vmatpush1.bf16.msra.mxu0 %v1351
        %1744 = vmatprep.subr.bf16.mxu0 %v1360
        %1745 = vmatpush1.bf16.msra.mxu0 %v1359
        %1746 = vmatprep.subr.bf16.mxu0 %v1368
        %1747 = vmatpush1.bf16.msra.mxu0 %v1367
        %1748 = vmatprep.subr.bf16.mxu0 %v1376
        %1749 = vmatpush1.bf16.msra.mxu0 %v1375
        %1750 = vmatprep.subr.bf16.mxu0 %v1384
        %1751 = vmatpush1.bf16.msra.mxu0 %v1383
        %1752 = vmatprep.subr.bf16.mxu0 %v1392
        %1753 = vmatpush1.bf16.msra.mxu0 %v1391
        %1754 = vmatprep.subr.bf16.mxu0 %v1400
        %1755 = vmatpush1.bf16.msra.mxu0 %v1399
        %1756 = vmatprep.subr.bf16.mxu0 %v1408
        %1757 = vmatpush1.bf16.msra.mxu0 %v1407
        %1758 = vmatprep.subr.bf16.mxu0 0
        %1759 = vmatpush1.bf16.msra.mxu0 0
        %1760 = vmatprep.subr.bf16.mxu0 0
        %1761 = vmatpush1.bf16.msra.mxu0 0
        %1762 = vmatprep.subr.bf16.mxu0 0
        %1763 = vmatpush1.bf16.msra.mxu0 0
        %1764 = vmatprep.subr.bf16.mxu0 0
        %1765 = vmatpush1.bf16.msra.mxu0 0
        %1766 = vmatprep.subr.bf16.mxu0 0
        %1767 = vmatpush1.bf16.msra.mxu0 0
        %1768 = vmatprep.subr.bf16.mxu0 0
        %1769 = vmatpush1.bf16.msra.mxu0 0
        %1770 = vmatprep.subr.bf16.mxu0 0
        %1771 = vmatpush1.bf16.msra.mxu0 0
        %1772 = vmatprep.mubr.bf16.mxu0 %v1615
        %1773 = vmatmul.mubr.bf16.gmra.mrb[0].mxu0 %v369
        %v1774 = vpop.f32.mrb[0].mxu0
        %v1775 = vadd.f32 %v1734, %v1774
        %v1776 = vpop.f32.mrb[0].mxu0
        %v1777 = vadd.f32 %v1736, %v1776
        %v1778 = vpop.f32.mrb[0].mxu0
        %v1779 = vpop.f32.mrb[0].mxu0
        %1780 = vdwg.mxu0
        %1781 = vmatprep.subr.bf16.mxu0 %v1218
        %1782 = vmatpush1.bf16.msra.mxu0 %v1217
        %1783 = vmatprep.subr.bf16.mxu0 %v1226
        %1784 = vmatpush1.bf16.msra.mxu0 %v1225
        %1785 = vmatprep.subr.bf16.mxu0 %v1234
        %1786 = vmatpush1.bf16.msra.mxu0 %v1233
        %1787 = vmatprep.subr.bf16.mxu0 %v1242
        %1788 = vmatpush1.bf16.msra.mxu0 %v1241
        %1789 = vmatprep.subr.bf16.mxu0 %v1250
        %1790 = vmatpush1.bf16.msra.mxu0 %v1249
        %1791 = vmatprep.subr.bf16.mxu0 %v1258
        %1792 = vmatpush1.bf16.msra.mxu0 %v1257
        %1793 = vmatprep.subr.bf16.mxu0 %v1266
        %1794 = vmatpush1.bf16.msra.mxu0 %v1265
        %1795 = vmatprep.subr.bf16.mxu0 %v1274
        %1796 = vmatpush1.bf16.msra.mxu0 %v1273
        %1797 = vmatprep.subr.bf16.mxu0 %v1282
        %1798 = vmatpush1.bf16.msra.mxu0 %v1281
        %1799 = vmatprep.subr.bf16.mxu0 %v1290
        %1800 = vmatpush1.bf16.msra.mxu0 %v1289
        %1801 = vmatprep.subr.bf16.mxu0 %v1298
        %1802 = vmatpush1.bf16.msra.mxu0 %v1297
        %1803 = vmatprep.subr.bf16.mxu0 %v1306
        %1804 = vmatpush1.bf16.msra.mxu0 %v1305
        %1805 = vmatprep.subr.bf16.mxu0 %v1314
        %1806 = vmatpush1.bf16.msra.mxu0 %v1313
        %1807 = vmatprep.subr.bf16.mxu0 %v1322
        %1808 = vmatpush1.bf16.msra.mxu0 %v1321
        %1809 = vmatprep.subr.bf16.mxu0 %v1330
        %1810 = vmatpush1.bf16.msra.mxu0 %v1329
        %1811 = vmatprep.subr.bf16.mxu0 %v1338
        %1812 = vmatpush1.bf16.msra.mxu0 %v1337
        %1813 = vmatprep.mubr.bf16.mxu0 %v368
        %1814 = vmatmul.mubr.bf16.gmra.mrb[0].mxu0 %v367
        %v1815 = vpop.f32.mrb[0].mxu0
        %v1816 = vadd.f32 %v592, %v1815
        %v1817 = vpop.f32.mrb[0].mxu0
        %v1818 = vadd.f32 %v596, %v1817
        %v1819 = vpop.f32.mrb[0].mxu0
        %v1820 = vpop.f32.mrb[0].mxu0
        %1821 = vdwg.mxu0
        %1822 = vmatprep.subr.bf16.mxu0 %v1346
        %1823 = vmatpush1.bf16.msra.mxu0 %v1345
        %1824 = vmatprep.subr.bf16.mxu0 %v1354
        %1825 = vmatpush1.bf16.msra.mxu0 %v1353
        %1826 = vmatprep.subr.bf16.mxu0 %v1362
        %1827 = vmatpush1.bf16.msra.mxu0 %v1361
        %1828 = vmatprep.subr.bf16.mxu0 %v1370
        %1829 = vmatpush1.bf16.msra.mxu0 %v1369
        %1830 = vmatprep.subr.bf16.mxu0 %v1378
        %1831 = vmatpush1.bf16.msra.mxu0 %v1377
        %1832 = vmatprep.subr.bf16.mxu0 %v1386
        %1833 = vmatpush1.bf16.msra.mxu0 %v1385
        %1834 = vmatprep.subr.bf16.mxu0 %v1394
        %1835 = vmatpush1.bf16.msra.mxu0 %v1393
        %1836 = vmatprep.subr.bf16.mxu0 %v1402
        %1837 = vmatpush1.bf16.msra.mxu0 %v1401
        %1838 = vmatprep.subr.bf16.mxu0 %v1410
        %1839 = vmatpush1.bf16.msra.mxu0 %v1409
        %1840 = vmatprep.subr.bf16.mxu0 0
        %1841 = vmatpush1.bf16.msra.mxu0 0
        %1842 = vmatprep.subr.bf16.mxu0 0
        %1843 = vmatpush1.bf16.msra.mxu0 0
        %1844 = vmatprep.subr.bf16.mxu0 0
        %1845 = vmatpush1.bf16.msra.mxu0 0
        %1846 = vmatprep.subr.bf16.mxu0 0
        %1847 = vmatpush1.bf16.msra.mxu0 0
        %1848 = vmatprep.subr.bf16.mxu0 0
        %1849 = vmatpush1.bf16.msra.mxu0 0
        %1850 = vmatprep.subr.bf16.mxu0 0
        %1851 = vmatpush1.bf16.msra.mxu0 0
        %1852 = vmatprep.subr.bf16.mxu0 0
        %1853 = vmatpush1.bf16.msra.mxu0 0
        %1854 = vmatprep.mubr.bf16.mxu0 %v1615
        %1855 = vmatmul.mubr.bf16.gmra.mrb[0].mxu0 %v369
        %v1856 = vpop.f32.mrb[0].mxu0
        %v1857 = vadd.f32 %v1816, %v1856
        %v1858 = vpop.f32.mrb[0].mxu0
        %v1859 = vadd.f32 %v1818, %v1858
        %v1860 = vpop.f32.mrb[0].mxu0
        %v1861 = vpop.f32.mrb[0].mxu0
        %1862 = vdwg.mxu0
        %1863 = vmatprep.subr.bf16.mxu0 %v1220
        %1864 = vmatpush1.bf16.msra.mxu0 %v1219
        %1865 = vmatprep.subr.bf16.mxu0 %v1228
        %1866 = vmatpush1.bf16.msra.mxu0 %v1227
        %1867 = vmatprep.subr.bf16.mxu0 %v1236
        %1868 = vmatpush1.bf16.msra.mxu0 %v1235
        %1869 = vmatprep.subr.bf16.mxu0 %v1244
        %1870 = vmatpush1.bf16.msra.mxu0 %v1243
        %1871 = vmatprep.subr.bf16.mxu0 %v1252
        %1872 = vmatpush1.bf16.msra.mxu0 %v1251
        %1873 = vmatprep.subr.bf16.mxu0 %v1260
        %1874 = vmatpush1.bf16.msra.mxu0 %v1259
        %1875 = vmatprep.subr.bf16.mxu0 %v1268
        %1876 = vmatpush1.bf16.msra.mxu0 %v1267
        %1877 = vmatprep.subr.bf16.mxu0 %v1276
        %1878 = vmatpush1.bf16.msra.mxu0 %v1275
        %1879 = vmatprep.subr.bf16.mxu0 %v1284
        %1880 = vmatpush1.bf16.msra.mxu0 %v1283
        %1881 = vmatprep.subr.bf16.mxu0 %v1292
        %1882 = vmatpush1.bf16.msra.mxu0 %v1291
        %1883 = vmatprep.subr.bf16.mxu0 %v1300
        %1884 = vmatpush1.bf16.msra.mxu0 %v1299
        %1885 = vmatprep.subr.bf16.mxu0 %v1308
        %1886 = vmatpush1.bf16.msra.mxu0 %v1307
        %1887 = vmatprep.subr.bf16.mxu0 %v1316
        %1888 = vmatpush1.bf16.msra.mxu0 %v1315
        %1889 = vmatprep.subr.bf16.mxu0 %v1324
        %1890 = vmatpush1.bf16.msra.mxu0 %v1323
        %1891 = vmatprep.subr.bf16.mxu0 %v1332
        %1892 = vmatpush1.bf16.msra.mxu0 %v1331
        %1893 = vmatprep.subr.bf16.mxu0 %v1340
        %1894 = vmatpush1.bf16.msra.mxu0 %v1339
        %1895 = vmatprep.mubr.bf16.mxu0 %v368
        %1896 = vmatmul.mubr.bf16.gmra.mrb[0].mxu0 %v367
        %v1897 = vpop.f32.mrb[0].mxu0
        %v1898 = vadd.f32 %v600, %v1897
        %v1899 = vpop.f32.mrb[0].mxu0
        %v1900 = vadd.f32 %v604, %v1899
        %v1901 = vpop.f32.mrb[0].mxu0
        %v1902 = vpop.f32.mrb[0].mxu0
        %1903 = vdwg.mxu0
        %1904 = vmatprep.subr.bf16.mxu0 %v1348
        %1905 = vmatpush1.bf16.msra.mxu0 %v1347
        %1906 = vmatprep.subr.bf16.mxu0 %v1356
        %1907 = vmatpush1.bf16.msra.mxu0 %v1355
        %1908 = vmatprep.subr.bf16.mxu0 %v1364
        %1909 = vmatpush1.bf16.msra.mxu0 %v1363
        %1910 = vmatprep.subr.bf16.mxu0 %v1372
        %1911 = vmatpush1.bf16.msra.mxu0 %v1371
        %1912 = vmatprep.subr.bf16.mxu0 %v1380
        %1913 = vmatpush1.bf16.msra.mxu0 %v1379
        %1914 = vmatprep.subr.bf16.mxu0 %v1388
        %1915 = vmatpush1.bf16.msra.mxu0 %v1387
        %1916 = vmatprep.subr.bf16.mxu0 %v1396
        %1917 = vmatpush1.bf16.msra.mxu0 %v1395
        %1918 = vmatprep.subr.bf16.mxu0 %v1404
        %1919 = vmatpush1.bf16.msra.mxu0 %v1403
        %1920 = vmatprep.subr.bf16.mxu0 %v1412
        %1921 = vmatpush1.bf16.msra.mxu0 %v1411
        %1922 = vmatprep.subr.bf16.mxu0 0
        %1923 = vmatpush1.bf16.msra.mxu0 0
        %1924 = vmatprep.subr.bf16.mxu0 0
        %1925 = vmatpush1.bf16.msra.mxu0 0
        %1926 = vmatprep.subr.bf16.mxu0 0
        %1927 = vmatpush1.bf16.msra.mxu0 0
        %1928 = vmatprep.subr.bf16.mxu0 0
        %1929 = vmatpush1.bf16.msra.mxu0 0
        %1930 = vmatprep.subr.bf16.mxu0 0
        %1931 = vmatpush1.bf16.msra.mxu0 0
        %1932 = vmatprep.subr.bf16.mxu0 0
        %1933 = vmatpush1.bf16.msra.mxu0 0
        %1934 = vmatprep.subr.bf16.mxu0 0
        %1935 = vmatpush1.bf16.msra.mxu0 0
        %1936 = vmatprep.mubr.bf16.mxu0 %v1615
        %1937 = vmatmul.mubr.bf16.gmra.mrb[0].mxu0 %v369
        %v1938 = vpop.f32.mrb[0].mxu0
        %v1939 = vadd.f32 %v1898, %v1938
        %v1940 = vpop.f32.mrb[0].mxu0
        %v1941 = vadd.f32 %v1900, %v1940
        %v1942 = vpop.f32.mrb[0].mxu0
        %v1943 = vpop.f32.mrb[0].mxu0
        %1944 = vdwg.mxu0
        %v1945 = vmax.f32 %v1693, 0.0
        %v1946 = vmax.f32 %v1695, 0.0
        %v1947 = vmax.f32 %v1775, 0.0
        %v1948 = vmax.f32 %v1777, 0.0
        %v1949 = vmax.f32 %v1857, 0.0
        %v1950 = vmax.f32 %v1859, 0.0
        %v1951 = vmax.f32 %v1939, 0.0
        %v1952 = vmax.f32 %v1941, 0.0
        %v1953 = vpack.c.bf16 %v1945, %v1945
        %v1954 = vpack.c.bf16 %v1946, %v1946
        %v1955 = vpack.c.bf16 %v1947, %v1947
        %v1956 = vpack.c.bf16 %v1948, %v1948
        %v1957 = vpack.c.bf16 %v1949, %v1949
        %v1958 = vpack.c.bf16 %v1950, %v1950
        %v1959 = vpack.c.bf16 %v1951, %v1951
        %v1960 = vpack.c.bf16 %v1952, %v1952
        %v1961 = vld [vmem:[#allocation8] sm:$0xff]
        %v1962 = vld [vmem:[#allocation8 + $0x8] sm:$0xff]
        %v1963 = vld [vmem:[#allocation8 + $0x10] sm:$0xff]
        %v1964 = vld [vmem:[#allocation8 + $0x18] sm:$0xff]
        %v1965 = vld [vmem:[#allocation8 + $0x20] sm:$0xff]
        %v1966 = vld [vmem:[#allocation8 + $0x28] sm:$0xff]
        %v1967 = vld [vmem:[#allocation8 + $0x30] sm:$0xff]
        %v1968 = vld [vmem:[#allocation8 + $0x38] sm:$0xff]
        %v1969 = vld [vmem:[#allocation8 + $0x40] sm:$0xff]
        %v1970 = vld [vmem:[#allocation8 + $0x48] sm:$0xff]
        %v1971 = vld [vmem:[#allocation8 + $0x50] sm:$0xff]
        %v1972 = vld [vmem:[#allocation8 + $0x58] sm:$0xff]
        %v1973 = vld [vmem:[#allocation8 + $0x60] sm:$0xff]
        %v1974 = vld [vmem:[#allocation8 + $0x68] sm:$0xff]
        %v1975 = vld [vmem:[#allocation8 + $0x70] sm:$0xff]
        %v1976 = vld [vmem:[#allocation8 + $0x78] sm:$0xff]
        %v1977 = vld [vmem:[#allocation8 + $0x80] sm:$0xff]
        %v1978 = vld [vmem:[#allocation8 + $0x88] sm:$0xff]
        %v1979 = vld [vmem:[#allocation8 + $0x90] sm:$0xff]
        %v1980 = vld [vmem:[#allocation8 + $0x98] sm:$0xff]
        %v1981 = vld [vmem:[#allocation8 + $0xa0] sm:$0xff]
        %v1982 = vld [vmem:[#allocation8 + $0xa8] sm:$0xff]
        %v1983 = vld [vmem:[#allocation8 + $0xb0] sm:$0xff]
        %v1984 = vld [vmem:[#allocation8 + $0xb8] sm:$0xff]
        %v1985 = vld [vmem:[#allocation8 + $0xc0] sm:$0xff]
        %v1986 = vld [vmem:[#allocation8 + $0xc8] sm:$0xff]
        %v1987 = vld [vmem:[#allocation8 + $0xd0] sm:$0xff]
        %v1988 = vld [vmem:[#allocation8 + $0xd8] sm:$0xff]
        %v1989 = vld [vmem:[#allocation8 + $0xe0] sm:$0xff]
        %v1990 = vld [vmem:[#allocation8 + $0xe8] sm:$0xff]
        %v1991 = vld [vmem:[#allocation8 + $0xf0] sm:$0xff]
        %v1992 = vld [vmem:[#allocation8 + $0xf8] sm:$0xff]
        %v1993 = vld [vmem:[#allocation8 + $0x100] sm:$0xff]
        %v1994 = vld [vmem:[#allocation8 + $0x108] sm:$0xff]
        %v1995 = vld [vmem:[#allocation8 + $0x110] sm:$0xff]
        %v1996 = vld [vmem:[#allocation8 + $0x118] sm:$0xff]
        %v1997 = vld [vmem:[#allocation8 + $0x120] sm:$0xff]
        %v1998 = vld [vmem:[#allocation8 + $0x128] sm:$0xff]
        %v1999 = vld [vmem:[#allocation8 + $0x130] sm:$0xff]
        %v2000 = vld [vmem:[#allocation8 + $0x138] sm:$0xff]
        %v2001 = vld [vmem:[#allocation8 + $0x140] sm:$0xff]
        %v2002 = vld [vmem:[#allocation8 + $0x148] sm:$0xff]
        %v2003 = vld [vmem:[#allocation8 + $0x150] sm:$0xff]
        %v2004 = vld [vmem:[#allocation8 + $0x158] sm:$0xff]
        %v2005 = vld [vmem:[#allocation8 + $0x160] sm:$0xff]
        %v2006 = vld [vmem:[#allocation8 + $0x168] sm:$0xff]
        %v2007 = vld [vmem:[#allocation8 + $0x170] sm:$0xff]
        %v2008 = vld [vmem:[#allocation8 + $0x178] sm:$0xff]
        %v2009 = vld [vmem:[#allocation8 + $0x180] sm:$0xff]
        %v2010 = vld [vmem:[#allocation8 + $0x188] sm:$0xff]
        %v2011 = vld [vmem:[#allocation8 + $0x190] sm:$0xff]
        %v2012 = vld [vmem:[#allocation8 + $0x198] sm:$0xff]
        %v2013 = vld [vmem:[#allocation8 + $0x1a0] sm:$0xff]
        %v2014 = vld [vmem:[#allocation8 + $0x1a8] sm:$0xff]
        %v2015 = vld [vmem:[#allocation8 + $0x1b0] sm:$0xff]
        %v2016 = vld [vmem:[#allocation8 + $0x1b8] sm:$0xff]
        %v2017 = vld [vmem:[#allocation8 + $0x1c0] sm:$0xff]
        %v2018 = vld [vmem:[#allocation8 + $0x1c8] sm:$0xff]
        %v2019 = vld [vmem:[#allocation8 + $0x1d0] sm:$0xff]
        %v2020 = vld [vmem:[#allocation8 + $0x1d8] sm:$0xff]
        %v2021 = vld [vmem:[#allocation8 + $0x1e0] sm:$0xff]
        %v2022 = vld [vmem:[#allocation8 + $0x1e8] sm:$0xff]
        %v2023 = vld [vmem:[#allocation8 + $0x1f0] sm:$0xff]
        %v2024 = vld [vmem:[#allocation8 + $0x1f8] sm:$0xff]
        %v2025 = vld [vmem:[#allocation8 + $0x200] sm:$0xff]
        %v2026 = vld [vmem:[#allocation8 + $0x208] sm:$0xff]
        %v2027 = vld [vmem:[#allocation8 + $0x210] sm:$0xff]
        %v2028 = vld [vmem:[#allocation8 + $0x218] sm:$0xff]
        %v2029 = vld [vmem:[#allocation8 + $0x220] sm:$0xff]
        %v2030 = vld [vmem:[#allocation8 + $0x228] sm:$0xff]
        %v2031 = vld [vmem:[#allocation8 + $0x230] sm:$0xff]
        %v2032 = vld [vmem:[#allocation8 + $0x238] sm:$0xff]
        %v2033 = vld [vmem:[#allocation8 + $0x240] sm:$0xff]
        %v2034 = vld [vmem:[#allocation8 + $0x248] sm:$0xff]
        %v2035 = vld [vmem:[#allocation8 + $0x250] sm:$0xff]
        %v2036 = vld [vmem:[#allocation8 + $0x258] sm:$0xff]
        %v2037 = vld [vmem:[#allocation8 + $0x260] sm:$0xff]
        %v2038 = vld [vmem:[#allocation8 + $0x268] sm:$0xff]
        %v2039 = vld [vmem:[#allocation8 + $0x270] sm:$0xff]
        %v2040 = vld [vmem:[#allocation8 + $0x278] sm:$0xff]
        %v2041 = vld [vmem:[#allocation8 + $0x280] sm:$0xff]
        %v2042 = vld [vmem:[#allocation8 + $0x288] sm:$0xff]
        %v2043 = vld [vmem:[#allocation8 + $0x290] sm:$0xff]
        %v2044 = vld [vmem:[#allocation8 + $0x298] sm:$0xff]
        %v2045 = vld [vmem:[#allocation8 + $0x2a0] sm:$0xff]
        %v2046 = vld [vmem:[#allocation8 + $0x2a8] sm:$0xff]
        %v2047 = vld [vmem:[#allocation8 + $0x2b0] sm:$0xff]
        %v2048 = vld [vmem:[#allocation8 + $0x2b8] sm:$0xff]
        %v2049 = vld [vmem:[#allocation8 + $0x2c0] sm:$0xff]
        %v2050 = vld [vmem:[#allocation8 + $0x2c8] sm:$0xff]
        %v2051 = vld [vmem:[#allocation8 + $0x2d0] sm:$0xff]
        %v2052 = vld [vmem:[#allocation8 + $0x2d8] sm:$0xff]
        %v2053 = vld [vmem:[#allocation8 + $0x2e0] sm:$0xff]
        %v2054 = vld [vmem:[#allocation8 + $0x2e8] sm:$0xff]
        %v2055 = vld [vmem:[#allocation8 + $0x2f0] sm:$0xff]
        %v2056 = vld [vmem:[#allocation8 + $0x2f8] sm:$0xff]
        %v2057 = vld [vmem:[#allocation8 + $0x300] sm:$0xff]
        %v2058 = vld [vmem:[#allocation8 + $0x308] sm:$0xff]
        %v2059 = vld [vmem:[#allocation8 + $0x310] sm:$0xff]
        %v2060 = vld [vmem:[#allocation8 + $0x318] sm:$0xff]
        %v2061 = vld [vmem:[#allocation8 + $0x320] sm:$0xff]
        %v2062 = vld [vmem:[#allocation8 + $0x328] sm:$0xff]
        %v2063 = vld [vmem:[#allocation8 + $0x330] sm:$0xff]
        %v2064 = vld [vmem:[#allocation8 + $0x338] sm:$0xff]
        %v2065 = vld [vmem:[#allocation8 + $0x340] sm:$0xff]
        %v2066 = vld [vmem:[#allocation8 + $0x348] sm:$0xff]
        %v2067 = vld [vmem:[#allocation8 + $0x350] sm:$0xff]
        %v2068 = vld [vmem:[#allocation8 + $0x358] sm:$0xff]
        %v2069 = vld [vmem:[#allocation8 + $0x360] sm:$0xff]
        %v2070 = vld [vmem:[#allocation8 + $0x368] sm:$0xff]
        %v2071 = vld [vmem:[#allocation8 + $0x370] sm:$0xff]
        %v2072 = vld [vmem:[#allocation8 + $0x378] sm:$0xff]
        %v2073 = vld [vmem:[#allocation8 + $0x380] sm:$0xff]
        %v2074 = vld [vmem:[#allocation8 + $0x388] sm:$0xff]
        %v2075 = vld [vmem:[#allocation8 + $0x390] sm:$0xff]
        %v2076 = vld [vmem:[#allocation8 + $0x398] sm:$0xff]
        %v2077 = vld [vmem:[#allocation8 + $0x3a0] sm:$0xff]
        %v2078 = vld [vmem:[#allocation8 + $0x3a8] sm:$0xff]
        %v2079 = vld [vmem:[#allocation8 + $0x3b0] sm:$0xff]
        %v2080 = vld [vmem:[#allocation8 + $0x3b8] sm:$0xff]
        %v2081 = vld [vmem:[#allocation8 + $0x3c0] sm:$0xff]
        %v2082 = vld [vmem:[#allocation8 + $0x3c8] sm:$0xff]
        %v2083 = vld [vmem:[#allocation8 + $0x3d0] sm:$0xff]
        %v2084 = vld [vmem:[#allocation8 + $0x3d8] sm:$0xff]
        %v2085 = vld [vmem:[#allocation8 + $0x3e0] sm:$0xff]
        %v2086 = vld [vmem:[#allocation8 + $0x3e8] sm:$0xff]
        %v2087 = vld [vmem:[#allocation8 + $0x3f0] sm:$0xff]
        %v2088 = vld [vmem:[#allocation8 + $0x3f8] sm:$0xff]
        %v2089 = vld [vmem:[#allocation8 + $0x400] sm:$0xff]
        %v2090 = vld [vmem:[#allocation8 + $0x408] sm:$0xff]
        %v2091 = vld [vmem:[#allocation8 + $0x410] sm:$0xff]
        %v2092 = vld [vmem:[#allocation8 + $0x418] sm:$0xff]
        %v2093 = vld [vmem:[#allocation8 + $0x420] sm:$0xff]
        %v2094 = vld [vmem:[#allocation8 + $0x428] sm:$0xff]
        %v2095 = vld [vmem:[#allocation8 + $0x430] sm:$0xff]
        %v2096 = vld [vmem:[#allocation8 + $0x438] sm:$0xff]
        %v2097 = vld [vmem:[#allocation8 + $0x440] sm:$0xff]
        %v2098 = vld [vmem:[#allocation8 + $0x448] sm:$0xff]
        %v2099 = vld [vmem:[#allocation8 + $0x450] sm:$0xff]
        %v2100 = vld [vmem:[#allocation8 + $0x458] sm:$0xff]
        %v2101 = vld [vmem:[#allocation8 + $0x460] sm:$0xff]
        %v2102 = vld [vmem:[#allocation8 + $0x468] sm:$0xff]
        %v2103 = vld [vmem:[#allocation8 + $0x470] sm:$0xff]
        %v2104 = vld [vmem:[#allocation8 + $0x478] sm:$0xff]
        %v2105 = vld [vmem:[#allocation8 + $0x480] sm:$0xff]
        %v2106 = vld [vmem:[#allocation8 + $0x488] sm:$0xff]
        %v2107 = vld [vmem:[#allocation8 + $0x490] sm:$0xff]
        %v2108 = vld [vmem:[#allocation8 + $0x498] sm:$0xff]
        %v2109 = vld [vmem:[#allocation8 + $0x4a0] sm:$0xff]
        %v2110 = vld [vmem:[#allocation8 + $0x4a8] sm:$0xff]
        %v2111 = vld [vmem:[#allocation8 + $0x4b0] sm:$0xff]
        %v2112 = vld [vmem:[#allocation8 + $0x4b8] sm:$0xff]
        %v2113 = vld [vmem:[#allocation8 + $0x4c0] sm:$0xff]
        %v2114 = vld [vmem:[#allocation8 + $0x4c8] sm:$0xff]
        %v2115 = vld [vmem:[#allocation8 + $0x4d0] sm:$0xff]
        %v2116 = vld [vmem:[#allocation8 + $0x4d8] sm:$0xff]
        %v2117 = vld [vmem:[#allocation8 + $0x4e0] sm:$0xff]
        %v2118 = vld [vmem:[#allocation8 + $0x4e8] sm:$0xff]
        %v2119 = vld [vmem:[#allocation8 + $0x4f0] sm:$0xff]
        %v2120 = vld [vmem:[#allocation8 + $0x4f8] sm:$0xff]
        %v2121 = vld [vmem:[#allocation8 + $0x500] sm:$0xff]
        %v2122 = vld [vmem:[#allocation8 + $0x508] sm:$0xff]
        %v2123 = vld [vmem:[#allocation8 + $0x510] sm:$0xff]
        %v2124 = vld [vmem:[#allocation8 + $0x518] sm:$0xff]
        %v2125 = vld [vmem:[#allocation8 + $0x520] sm:$0xff]
        %v2126 = vld [vmem:[#allocation8 + $0x528] sm:$0xff]
        %v2127 = vld [vmem:[#allocation8 + $0x530] sm:$0xff]
        %v2128 = vld [vmem:[#allocation8 + $0x538] sm:$0xff]
        %v2129 = vld [vmem:[#allocation8 + $0x540] sm:$0xff]
        %v2130 = vld [vmem:[#allocation8 + $0x548] sm:$0xff]
        %v2131 = vld [vmem:[#allocation8 + $0x550] sm:$0xff]
        %v2132 = vld [vmem:[#allocation8 + $0x558] sm:$0xff]
        %v2133 = vld [vmem:[#allocation8 + $0x560] sm:$0xff]
        %v2134 = vld [vmem:[#allocation8 + $0x568] sm:$0xff]
        %v2135 = vld [vmem:[#allocation8 + $0x570] sm:$0xff]
        %v2136 = vld [vmem:[#allocation8 + $0x578] sm:$0xff]
        %v2137 = vld [vmem:[#allocation8 + $0x580] sm:$0xff]
        %v2138 = vld [vmem:[#allocation8 + $0x588] sm:$0xff]
        %v2139 = vld [vmem:[#allocation8 + $0x590] sm:$0xff]
        %v2140 = vld [vmem:[#allocation8 + $0x598] sm:$0xff]
        %v2141 = vld [vmem:[#allocation8 + $0x5a0] sm:$0xff]
        %v2142 = vld [vmem:[#allocation8 + $0x5a8] sm:$0xff]
        %v2143 = vld [vmem:[#allocation8 + $0x5b0] sm:$0xff]
        %v2144 = vld [vmem:[#allocation8 + $0x5b8] sm:$0xff]
        %v2145 = vld [vmem:[#allocation8 + $0x5c0] sm:$0xff]
        %v2146 = vld [vmem:[#allocation8 + $0x5c8] sm:$0xff]
        %v2147 = vld [vmem:[#allocation8 + $0x5d0] sm:$0xff]
        %v2148 = vld [vmem:[#allocation8 + $0x5d8] sm:$0xff]
        %v2149 = vld [vmem:[#allocation8 + $0x5e0] sm:$0xff]
        %v2150 = vld [vmem:[#allocation8 + $0x5e8] sm:$0xff]
        %v2151 = vld [vmem:[#allocation8 + $0x5f0] sm:$0xff]
        %v2152 = vld [vmem:[#allocation8 + $0x5f8] sm:$0xff]
        %v2153 = vld [vmem:[#allocation8 + $0x600] sm:$0xff]
        %v2154 = vld [vmem:[#allocation8 + $0x608] sm:$0xff]
        %v2155 = vld [vmem:[#allocation8 + $0x610] sm:$0xff]
        %v2156 = vld [vmem:[#allocation8 + $0x618] sm:$0xff]
        %v2157 = vld [vmem:[#allocation8 + $0x620] sm:$0xff]
        %v2158 = vld [vmem:[#allocation8 + $0x628] sm:$0xff]
        %v2159 = vld [vmem:[#allocation8 + $0x630] sm:$0xff]
        %v2160 = vld [vmem:[#allocation8 + $0x638] sm:$0xff]
        %v2161 = vld [vmem:[#allocation8 + $0x640] sm:$0xff]
        %v2162 = vld [vmem:[#allocation8 + $0x648] sm:$0xff]
        %v2163 = vld [vmem:[#allocation8 + $0x650] sm:$0xff]
        %v2164 = vld [vmem:[#allocation8 + $0x658] sm:$0xff]
        %v2165 = vld [vmem:[#allocation8 + $0x660] sm:$0xff]
        %v2166 = vld [vmem:[#allocation8 + $0x668] sm:$0xff]
        %v2167 = vld [vmem:[#allocation8 + $0x670] sm:$0xff]
        %v2168 = vld [vmem:[#allocation8 + $0x678] sm:$0xff]
        %v2169 = vld [vmem:[#allocation8 + $0x680] sm:$0xff]
        %v2170 = vld [vmem:[#allocation8 + $0x688] sm:$0xff]
        %v2171 = vld [vmem:[#allocation8 + $0x690] sm:$0xff]
        %v2172 = vld [vmem:[#allocation8 + $0x698] sm:$0xff]
        %v2173 = vld [vmem:[#allocation8 + $0x6a0] sm:$0xff]
        %v2174 = vld [vmem:[#allocation8 + $0x6a8] sm:$0xff]
        %v2175 = vld [vmem:[#allocation8 + $0x6b0] sm:$0xff]
        %v2176 = vld [vmem:[#allocation8 + $0x6b8] sm:$0xff]
        %v2177 = vld [vmem:[#allocation8 + $0x6c0] sm:$0xff]
        %v2178 = vld [vmem:[#allocation8 + $0x6c8] sm:$0xff]
        %v2179 = vld [vmem:[#allocation8 + $0x6d0] sm:$0xff]
        %v2180 = vld [vmem:[#allocation8 + $0x6d8] sm:$0xff]
        %v2181 = vld [vmem:[#allocation8 + $0x6e0] sm:$0xff]
        %v2182 = vld [vmem:[#allocation8 + $0x6e8] sm:$0xff]
        %v2183 = vld [vmem:[#allocation8 + $0x6f0] sm:$0xff]
        %v2184 = vld [vmem:[#allocation8 + $0x6f8] sm:$0xff]
        %v2185 = vld [vmem:[#allocation8 + $0x700] sm:$0xff]
        %v2186 = vld [vmem:[#allocation8 + $0x708] sm:$0xff]
        %v2187 = vld [vmem:[#allocation8 + $0x710] sm:$0xff]
        %v2188 = vld [vmem:[#allocation8 + $0x718] sm:$0xff]
        %v2189 = vld [vmem:[#allocation8 + $0x720] sm:$0xff]
        %v2190 = vld [vmem:[#allocation8 + $0x728] sm:$0xff]
        %v2191 = vld [vmem:[#allocation8 + $0x730] sm:$0xff]
        %v2192 = vld [vmem:[#allocation8 + $0x738] sm:$0xff]
        %v2193 = vld [vmem:[#allocation8 + $0x740] sm:$0xff]
        %v2194 = vld [vmem:[#allocation8 + $0x748] sm:$0xff]
        %v2195 = vld [vmem:[#allocation8 + $0x750] sm:$0xff]
        %v2196 = vld [vmem:[#allocation8 + $0x758] sm:$0xff]
        %v2197 = vld [vmem:[#allocation8 + $0x760] sm:$0xff]
        %v2198 = vld [vmem:[#allocation8 + $0x768] sm:$0xff]
        %v2199 = vld [vmem:[#allocation8 + $0x770] sm:$0xff]
        %v2200 = vld [vmem:[#allocation8 + $0x778] sm:$0xff]
        %v2201 = vld [vmem:[#allocation8 + $0x780] sm:$0xff]
        %v2202 = vld [vmem:[#allocation8 + $0x788] sm:$0xff]
        %v2203 = vld [vmem:[#allocation8 + $0x790] sm:$0xff]
        %v2204 = vld [vmem:[#allocation8 + $0x798] sm:$0xff]
        %v2205 = vld [vmem:[#allocation8 + $0x7a0] sm:$0xff]
        %v2206 = vld [vmem:[#allocation8 + $0x7a8] sm:$0xff]
        %v2207 = vld [vmem:[#allocation8 + $0x7b0] sm:$0xff]
        %v2208 = vld [vmem:[#allocation8 + $0x7b8] sm:$0xff]
        %v2209 = vld [vmem:[#allocation8 + $0x7c0] sm:$0xff]
        %v2210 = vld [vmem:[#allocation8 + $0x7c8] sm:$0xff]
        %v2211 = vld [vmem:[#allocation8 + $0x7d0] sm:$0xff]
        %v2212 = vld [vmem:[#allocation8 + $0x7d8] sm:$0xff]
        %v2213 = vld [vmem:[#allocation8 + $0x7e0] sm:$0xff]
        %v2214 = vld [vmem:[#allocation8 + $0x7e8] sm:$0xff]
        %v2215 = vld [vmem:[#allocation8 + $0x7f0] sm:$0xff]
        %v2216 = vld [vmem:[#allocation8 + $0x7f8] sm:$0xff]
        %v2217 = vld [vmem:[#allocation8 + $0x800] sm:$0xff]
        %v2218 = vld [vmem:[#allocation8 + $0x808] sm:$0xff]
        %v2219 = vld [vmem:[#allocation8 + $0x810] sm:$0xff]
        %v2220 = vld [vmem:[#allocation8 + $0x818] sm:$0xff]
        %v2221 = vld [vmem:[#allocation8 + $0x820] sm:$0xff]
        %v2222 = vld [vmem:[#allocation8 + $0x828] sm:$0xff]
        %v2223 = vld [vmem:[#allocation8 + $0x830] sm:$0xff]
        %v2224 = vld [vmem:[#allocation8 + $0x838] sm:$0xff]
        %v2225 = vld [vmem:[#allocation8 + $0x840] sm:$0xff]
        %v2226 = vld [vmem:[#allocation8 + $0x848] sm:$0xff]
        %v2227 = vld [vmem:[#allocation8 + $0x850] sm:$0xff]
        %v2228 = vld [vmem:[#allocation8 + $0x858] sm:$0xff]
        %v2229 = vld [vmem:[#allocation8 + $0x860] sm:$0xff]
        %v2230 = vld [vmem:[#allocation8 + $0x868] sm:$0xff]
        %v2231 = vld [vmem:[#allocation8 + $0x870] sm:$0xff]
        %v2232 = vld [vmem:[#allocation8 + $0x878] sm:$0xff]
        %v2233 = vld [vmem:[#allocation8 + $0x880] sm:$0xff]
        %v2234 = vld [vmem:[#allocation8 + $0x888] sm:$0xff]
        %v2235 = vld [vmem:[#allocation8 + $0x890] sm:$0xff]
        %v2236 = vld [vmem:[#allocation8 + $0x898] sm:$0xff]
        %v2237 = vld [vmem:[#allocation8 + $0x8a0] sm:$0xff]
        %v2238 = vld [vmem:[#allocation8 + $0x8a8] sm:$0xff]
        %v2239 = vld [vmem:[#allocation8 + $0x8b0] sm:$0xff]
        %v2240 = vld [vmem:[#allocation8 + $0x8b8] sm:$0xff]
        %v2241 = vld [vmem:[#allocation8 + $0x8c0] sm:$0xff]
        %v2242 = vld [vmem:[#allocation8 + $0x8c8] sm:$0xff]
        %v2243 = vld [vmem:[#allocation8 + $0x8d0] sm:$0xff]
        %v2244 = vld [vmem:[#allocation8 + $0x8d8] sm:$0xff]
        %v2245 = vld [vmem:[#allocation8 + $0x8e0] sm:$0xff]
        %v2246 = vld [vmem:[#allocation8 + $0x8e8] sm:$0xff]
        %v2247 = vld [vmem:[#allocation8 + $0x8f0] sm:$0xff]
        %v2248 = vld [vmem:[#allocation8 + $0x8f8] sm:$0xff]
        %v2249 = vld [vmem:[#allocation8 + $0x900] sm:$0xff]
        %v2250 = vld [vmem:[#allocation8 + $0x908] sm:$0xff]
        %v2251 = vld [vmem:[#allocation8 + $0x910] sm:$0xff]
        %v2252 = vld [vmem:[#allocation8 + $0x918] sm:$0xff]
        %v2253 = vld [vmem:[#allocation8 + $0x920] sm:$0xff]
        %v2254 = vld [vmem:[#allocation8 + $0x928] sm:$0xff]
        %v2255 = vld [vmem:[#allocation8 + $0x930] sm:$0xff]
        %v2256 = vld [vmem:[#allocation8 + $0x938] sm:$0xff]
        %v2257 = vld [vmem:[#allocation8 + $0x940] sm:$0xff]
        %v2258 = vld [vmem:[#allocation8 + $0x948] sm:$0xff]
        %v2259 = vld [vmem:[#allocation8 + $0x950] sm:$0xff]
        %v2260 = vld [vmem:[#allocation8 + $0x958] sm:$0xff]
        %v2261 = vld [vmem:[#allocation8 + $0x960] sm:$0xff]
        %v2262 = vld [vmem:[#allocation8 + $0x968] sm:$0xff]
        %v2263 = vld [vmem:[#allocation8 + $0x970] sm:$0xff]
        %v2264 = vld [vmem:[#allocation8 + $0x978] sm:$0xff]
        %v2265 = vld [vmem:[#allocation8 + $0x980] sm:$0xff]
        %v2266 = vld [vmem:[#allocation8 + $0x988] sm:$0xff]
        %v2267 = vld [vmem:[#allocation8 + $0x990] sm:$0xff]
        %v2268 = vld [vmem:[#allocation8 + $0x998] sm:$0xff]
        %v2269 = vld [vmem:[#allocation8 + $0x9a0] sm:$0xff]
        %v2270 = vld [vmem:[#allocation8 + $0x9a8] sm:$0xff]
        %v2271 = vld [vmem:[#allocation8 + $0x9b0] sm:$0xff]
        %v2272 = vld [vmem:[#allocation8 + $0x9b8] sm:$0xff]
        %v2273 = vld [vmem:[#allocation8 + $0x9c0] sm:$0xff]
        %v2274 = vld [vmem:[#allocation8 + $0x9c8] sm:$0xff]
        %v2275 = vld [vmem:[#allocation8 + $0x9d0] sm:$0xff]
        %v2276 = vld [vmem:[#allocation8 + $0x9d8] sm:$0xff]
        %v2277 = vld [vmem:[#allocation8 + $0x9e0] sm:$0xff]
        %v2278 = vld [vmem:[#allocation8 + $0x9e8] sm:$0xff]
        %v2279 = vld [vmem:[#allocation8 + $0x9f0] sm:$0xff]
        %v2280 = vld [vmem:[#allocation8 + $0x9f8] sm:$0xff]
        %v2281 = vld [vmem:[#allocation8 + $0xa00] sm:$0xff]
        %v2282 = vld [vmem:[#allocation8 + $0xa08] sm:$0xff]
        %v2283 = vld [vmem:[#allocation8 + $0xa10] sm:$0xff]
        %v2284 = vld [vmem:[#allocation8 + $0xa18] sm:$0xff]
        %v2285 = vld [vmem:[#allocation8 + $0xa20] sm:$0xff]
        %v2286 = vld [vmem:[#allocation8 + $0xa28] sm:$0xff]
        %v2287 = vld [vmem:[#allocation8 + $0xa30] sm:$0xff]
        %v2288 = vld [vmem:[#allocation8 + $0xa38] sm:$0xff]
        %v2289 = vld [vmem:[#allocation8 + $0xa40] sm:$0xff]
        %v2290 = vld [vmem:[#allocation8 + $0xa48] sm:$0xff]
        %v2291 = vld [vmem:[#allocation8 + $0xa50] sm:$0xff]
        %v2292 = vld [vmem:[#allocation8 + $0xa58] sm:$0xff]
        %v2293 = vld [vmem:[#allocation8 + $0xa60] sm:$0xff]
        %v2294 = vld [vmem:[#allocation8 + $0xa68] sm:$0xff]
        %v2295 = vld [vmem:[#allocation8 + $0xa70] sm:$0xff]
        %v2296 = vld [vmem:[#allocation8 + $0xa78] sm:$0xff]
        %v2297 = vld [vmem:[#allocation8 + $0xa80] sm:$0xff]
        %v2298 = vld [vmem:[#allocation8 + $0xa88] sm:$0xff]
        %v2299 = vld [vmem:[#allocation8 + $0xa90] sm:$0xff]
        %v2300 = vld [vmem:[#allocation8 + $0xa98] sm:$0xff]
        %v2301 = vld [vmem:[#allocation8 + $0xaa0] sm:$0xff]
        %v2302 = vld [vmem:[#allocation8 + $0xaa8] sm:$0xff]
        %v2303 = vld [vmem:[#allocation8 + $0xab0] sm:$0xff]
        %v2304 = vld [vmem:[#allocation8 + $0xab8] sm:$0xff]
        %v2305 = vld [vmem:[#allocation8 + $0xac0] sm:$0xff]
        %v2306 = vld [vmem:[#allocation8 + $0xac8] sm:$0xff]
        %v2307 = vld [vmem:[#allocation8 + $0xad0] sm:$0xff]
        %v2308 = vld [vmem:[#allocation8 + $0xad8] sm:$0xff]
        %v2309 = vld [vmem:[#allocation8 + $0xae0] sm:$0xff]
        %v2310 = vld [vmem:[#allocation8 + $0xae8] sm:$0xff]
        %v2311 = vld [vmem:[#allocation8 + $0xaf0] sm:$0xff]
        %v2312 = vld [vmem:[#allocation8 + $0xaf8] sm:$0xff]
        %v2313 = vld [vmem:[#allocation8 + $0xb00] sm:$0xff]
        %v2314 = vld [vmem:[#allocation8 + $0xb08] sm:$0xff]
        %v2315 = vld [vmem:[#allocation8 + $0xb10] sm:$0xff]
        %v2316 = vld [vmem:[#allocation8 + $0xb18] sm:$0xff]
        %v2317 = vld [vmem:[#allocation8 + $0xb20] sm:$0xff]
        %v2318 = vld [vmem:[#allocation8 + $0xb28] sm:$0xff]
        %v2319 = vld [vmem:[#allocation8 + $0xb30] sm:$0xff]
        %v2320 = vld [vmem:[#allocation8 + $0xb38] sm:$0xff]
        %v2321 = vld [vmem:[#allocation8 + $0xb40] sm:$0xff]
        %v2322 = vld [vmem:[#allocation8 + $0xb48] sm:$0xff]
        %v2323 = vld [vmem:[#allocation8 + $0xb50] sm:$0xff]
        %v2324 = vld [vmem:[#allocation8 + $0xb58] sm:$0xff]
        %v2325 = vld [vmem:[#allocation8 + $0xb60] sm:$0xff]
        %v2326 = vld [vmem:[#allocation8 + $0xb68] sm:$0xff]
        %v2327 = vld [vmem:[#allocation8 + $0xb70] sm:$0xff]
        %v2328 = vld [vmem:[#allocation8 + $0xb78] sm:$0xff]
        %v2329 = vld [vmem:[#allocation8 + $0xb80] sm:$0xff]
        %v2330 = vld [vmem:[#allocation8 + $0xb88] sm:$0xff]
        %v2331 = vld [vmem:[#allocation8 + $0xb90] sm:$0xff]
        %v2332 = vld [vmem:[#allocation8 + $0xb98] sm:$0xff]
        %v2333 = vld [vmem:[#allocation8 + $0xba0] sm:$0xff]
        %v2334 = vld [vmem:[#allocation8 + $0xba8] sm:$0xff]
        %v2335 = vld [vmem:[#allocation8 + $0xbb0] sm:$0xff]
        %v2336 = vld [vmem:[#allocation8 + $0xbb8] sm:$0xff]
        %v2337 = vld [vmem:[#allocation8 + $0xbc0] sm:$0xff]
        %v2338 = vld [vmem:[#allocation8 + $0xbc8] sm:$0xff]
        %v2339 = vld [vmem:[#allocation8 + $0xbd0] sm:$0xff]
        %v2340 = vld [vmem:[#allocation8 + $0xbd8] sm:$0xff]
        %v2341 = vld [vmem:[#allocation8 + $0xbe0] sm:$0xff]
        %v2342 = vld [vmem:[#allocation8 + $0xbe8] sm:$0xff]
        %v2343 = vld [vmem:[#allocation8 + $0xbf0] sm:$0xff]
        %v2344 = vld [vmem:[#allocation8 + $0xbf8] sm:$0xff]
        %v2345 = vld [vmem:[#allocation8 + $0xc00] sm:$0xff]
        %v2346 = vld [vmem:[#allocation8 + $0xc08] sm:$0xff]
        %v2347 = vld [vmem:[#allocation8 + $0xc10] sm:$0xff]
        %v2348 = vld [vmem:[#allocation8 + $0xc18] sm:$0xff]
        %v2349 = vld [vmem:[#allocation8 + $0xc20] sm:$0xff]
        %v2350 = vld [vmem:[#allocation8 + $0xc28] sm:$0xff]
        %v2351 = vld [vmem:[#allocation8 + $0xc30] sm:$0xff]
        %v2352 = vld [vmem:[#allocation8 + $0xc38] sm:$0xff]
        %v2353 = vld [vmem:[#allocation8 + $0xc40] sm:$0xff]
        %v2354 = vld [vmem:[#allocation8 + $0xc48] sm:$0xff]
        %v2355 = vld [vmem:[#allocation8 + $0xc50] sm:$0xff]
        %v2356 = vld [vmem:[#allocation8 + $0xc58] sm:$0xff]
        %v2357 = vld [vmem:[#allocation8 + $0xc60] sm:$0xff]
        %v2358 = vld [vmem:[#allocation8 + $0xc68] sm:$0xff]
        %v2359 = vld [vmem:[#allocation8 + $0xc70] sm:$0xff]
        %v2360 = vld [vmem:[#allocation8 + $0xc78] sm:$0xff]
        %v2361 = vld [vmem:[#allocation8 + $0xc80] sm:$0xff]
        %v2362 = vld [vmem:[#allocation8 + $0xc88] sm:$0xff]
        %v2363 = vld [vmem:[#allocation8 + $0xc90] sm:$0xff]
        %v2364 = vld [vmem:[#allocation8 + $0xc98] sm:$0xff]
        %v2365 = vld [vmem:[#allocation8 + $0xca0] sm:$0xff]
        %v2366 = vld [vmem:[#allocation8 + $0xca8] sm:$0xff]
        %v2367 = vld [vmem:[#allocation8 + $0xcb0] sm:$0xff]
        %v2368 = vld [vmem:[#allocation8 + $0xcb8] sm:$0xff]
        %v2369 = vld [vmem:[#allocation8 + $0xcc0] sm:$0xff]
        %v2370 = vld [vmem:[#allocation8 + $0xcc8] sm:$0xff]
        %v2371 = vld [vmem:[#allocation8 + $0xcd0] sm:$0xff]
        %v2372 = vld [vmem:[#allocation8 + $0xcd8] sm:$0xff]
        %v2373 = vld [vmem:[#allocation8 + $0xce0] sm:$0xff]
        %v2374 = vld [vmem:[#allocation8 + $0xce8] sm:$0xff]
        %v2375 = vld [vmem:[#allocation8 + $0xcf0] sm:$0xff]
        %v2376 = vld [vmem:[#allocation8 + $0xcf8] sm:$0xff]
        %v2377 = vld [vmem:[#allocation8 + $0xd00] sm:$0xff]
        %v2378 = vld [vmem:[#allocation8 + $0xd08] sm:$0xff]
        %v2379 = vld [vmem:[#allocation8 + $0xd10] sm:$0xff]
        %v2380 = vld [vmem:[#allocation8 + $0xd18] sm:$0xff]
        %v2381 = vld [vmem:[#allocation8 + $0xd20] sm:$0xff]
        %v2382 = vld [vmem:[#allocation8 + $0xd28] sm:$0xff]
        %v2383 = vld [vmem:[#allocation8 + $0xd30] sm:$0xff]
        %v2384 = vld [vmem:[#allocation8 + $0xd38] sm:$0xff]
        %v2385 = vld [vmem:[#allocation8 + $0xd40] sm:$0xff]
        %v2386 = vld [vmem:[#allocation8 + $0xd48] sm:$0xff]
        %v2387 = vld [vmem:[#allocation8 + $0xd50] sm:$0xff]
        %v2388 = vld [vmem:[#allocation8 + $0xd58] sm:$0xff]
        %v2389 = vld [vmem:[#allocation8 + $0xd60] sm:$0xff]
        %v2390 = vld [vmem:[#allocation8 + $0xd68] sm:$0xff]
        %v2391 = vld [vmem:[#allocation8 + $0xd70] sm:$0xff]
        %v2392 = vld [vmem:[#allocation8 + $0xd78] sm:$0xff]
        %v2393 = vld [vmem:[#allocation8 + $0xd80] sm:$0xff]
        %v2394 = vld [vmem:[#allocation8 + $0xd88] sm:$0xff]
        %v2395 = vld [vmem:[#allocation8 + $0xd90] sm:$0xff]
        %v2396 = vld [vmem:[#allocation8 + $0xd98] sm:$0xff]
        %v2397 = vld [vmem:[#allocation8 + $0xda0] sm:$0xff]
        %v2398 = vld [vmem:[#allocation8 + $0xda8] sm:$0xff]
        %v2399 = vld [vmem:[#allocation8 + $0xdb0] sm:$0xff]
        %v2400 = vld [vmem:[#allocation8 + $0xdb8] sm:$0xff]
        %v2401 = vld [vmem:[#allocation8 + $0xdc0] sm:$0xff]
        %v2402 = vld [vmem:[#allocation8 + $0xdc8] sm:$0xff]
        %v2403 = vld [vmem:[#allocation8 + $0xdd0] sm:$0xff]
        %v2404 = vld [vmem:[#allocation8 + $0xdd8] sm:$0xff]
        %v2405 = vld [vmem:[#allocation8 + $0xde0] sm:$0xff]
        %v2406 = vld [vmem:[#allocation8 + $0xde8] sm:$0xff]
        %v2407 = vld [vmem:[#allocation8 + $0xdf0] sm:$0xff]
        %v2408 = vld [vmem:[#allocation8 + $0xdf8] sm:$0xff]
        %v2409 = vld [vmem:[#allocation8 + $0xe00] sm:$0xff]
        %v2410 = vld [vmem:[#allocation8 + $0xe08] sm:$0xff]
        %v2411 = vld [vmem:[#allocation8 + $0xe10] sm:$0xff]
        %v2412 = vld [vmem:[#allocation8 + $0xe18] sm:$0xff]
        %v2413 = vld [vmem:[#allocation8 + $0xe20] sm:$0xff]
        %v2414 = vld [vmem:[#allocation8 + $0xe28] sm:$0xff]
        %v2415 = vld [vmem:[#allocation8 + $0xe30] sm:$0xff]
        %v2416 = vld [vmem:[#allocation8 + $0xe38] sm:$0xff]
        %v2417 = vld [vmem:[#allocation8 + $0xe40] sm:$0xff]
        %v2418 = vld [vmem:[#allocation8 + $0xe48] sm:$0xff]
        %v2419 = vld [vmem:[#allocation8 + $0xe50] sm:$0xff]
        %v2420 = vld [vmem:[#allocation8 + $0xe58] sm:$0xff]
        %v2421 = vld [vmem:[#allocation8 + $0xe60] sm:$0xff]
        %v2422 = vld [vmem:[#allocation8 + $0xe68] sm:$0xff]
        %v2423 = vld [vmem:[#allocation8 + $0xe70] sm:$0xff]
        %v2424 = vld [vmem:[#allocation8 + $0xe78] sm:$0xff]
        %v2425 = vld [vmem:[#allocation8 + $0xe80] sm:$0xff]
        %v2426 = vld [vmem:[#allocation8 + $0xe88] sm:$0xff]
        %v2427 = vld [vmem:[#allocation8 + $0xe90] sm:$0xff]
        %v2428 = vld [vmem:[#allocation8 + $0xe98] sm:$0xff]
        %v2429 = vld [vmem:[#allocation8 + $0xea0] sm:$0xff]
        %v2430 = vld [vmem:[#allocation8 + $0xea8] sm:$0xff]
        %v2431 = vld [vmem:[#allocation8 + $0xeb0] sm:$0xff]
        %v2432 = vld [vmem:[#allocation8 + $0xeb8] sm:$0xff]
        %v2433 = vld [vmem:[#allocation8 + $0xec0] sm:$0xff]
        %v2434 = vld [vmem:[#allocation8 + $0xec8] sm:$0xff]
        %v2435 = vld [vmem:[#allocation8 + $0xed0] sm:$0xff]
        %v2436 = vld [vmem:[#allocation8 + $0xed8] sm:$0xff]
        %v2437 = vld [vmem:[#allocation8 + $0xee0] sm:$0xff]
        %v2438 = vld [vmem:[#allocation8 + $0xee8] sm:$0xff]
        %v2439 = vld [vmem:[#allocation8 + $0xef0] sm:$0xff]
        %v2440 = vld [vmem:[#allocation8 + $0xef8] sm:$0xff]
        %v2441 = vld [vmem:[#allocation8 + $0xf00] sm:$0xff]
        %v2442 = vld [vmem:[#allocation8 + $0xf08] sm:$0xff]
        %v2443 = vld [vmem:[#allocation8 + $0xf10] sm:$0xff]
        %v2444 = vld [vmem:[#allocation8 + $0xf18] sm:$0xff]
        %v2445 = vld [vmem:[#allocation8 + $0xf20] sm:$0xff]
        %v2446 = vld [vmem:[#allocation8 + $0xf28] sm:$0xff]
        %v2447 = vld [vmem:[#allocation8 + $0xf30] sm:$0xff]
        %v2448 = vld [vmem:[#allocation8 + $0xf38] sm:$0xff]
        %v2449 = vld [vmem:[#allocation8 + $0xf40] sm:$0xff]
        %v2450 = vld [vmem:[#allocation8 + $0xf48] sm:$0xff]
        %v2451 = vld [vmem:[#allocation8 + $0xf50] sm:$0xff]
        %v2452 = vld [vmem:[#allocation8 + $0xf58] sm:$0xff]
        %v2453 = vld [vmem:[#allocation8 + $0xf60] sm:$0xff]
        %v2454 = vld [vmem:[#allocation8 + $0xf68] sm:$0xff]
        %v2455 = vld [vmem:[#allocation8 + $0xf70] sm:$0xff]
        %v2456 = vld [vmem:[#allocation8 + $0xf78] sm:$0xff]
        %v2457 = vld [vmem:[#allocation8 + $0xf80] sm:$0xff]
        %v2458 = vld [vmem:[#allocation8 + $0xf88] sm:$0xff]
        %v2459 = vld [vmem:[#allocation8 + $0xf90] sm:$0xff]
        %v2460 = vld [vmem:[#allocation8 + $0xf98] sm:$0xff]
        %v2461 = vld [vmem:[#allocation10] sm:$0xff]
        %v2463 = vlaneseq
        %v2464 = vshrl.u32 %v2463, 7
        %v2465 = vsub.s32 0, %v2464
        %v2466 = vrot.slane %v2461, %v2465
        %v2467 = vlaneseq
        %v2468 = vshrl.u32 %v2467, 7
        %v2469 = vsub.s32 1, %v2468
        %v2470 = vrot.slane %v2461, %v2469
        %v2471 = vlaneseq
        %v2472 = vshrl.u32 %v2471, 7
        %v2473 = vsub.s32 2, %v2472
        %v2474 = vrot.slane %v2461, %v2473
        %v2475 = vlaneseq
        %v2476 = vshrl.u32 %v2475, 7
        %v2477 = vsub.s32 3, %v2476
        %v2478 = vrot.slane %v2461, %v2477
        %v2479 = vlaneseq
        %v2480 = vshrl.u32 %v2479, 7
        %v2481 = vsub.s32 4, %v2480
        %v2482 = vrot.slane %v2461, %v2481
        %v2483 = vlaneseq
        %v2484 = vshrl.u32 %v2483, 7
        %v2485 = vsub.s32 5, %v2484
        %v2486 = vrot.slane %v2461, %v2485
        %v2487 = vlaneseq
        %v2488 = vshrl.u32 %v2487, 7
        %v2489 = vsub.s32 6, %v2488
        %v2490 = vrot.slane %v2461, %v2489
        %v2491 = vlaneseq
        %v2492 = vshrl.u32 %v2491, 7
        %v2493 = vsub.s32 7, %v2492
        %v2494 = vrot.slane %v2461, %v2493
        %v3003 = vunpack.c.l.b16 %v1961
        %v3004 = vunpack.c.h.b16 %v1961
        %v3005 = vunpack.c.l.b16 %v1962
        %v3006 = vunpack.c.h.b16 %v1962
        %v3007 = vunpack.c.l.b16 %v1963
        %v3008 = vunpack.c.h.b16 %v1963
        %v3009 = vunpack.c.l.b16 %v1964
        %v3010 = vunpack.c.h.b16 %v1964
        %v3011 = vunpack.c.l.b16 %v1965
        %v3012 = vunpack.c.h.b16 %v1965
        %v3013 = vunpack.c.l.b16 %v1966
        %v3014 = vunpack.c.h.b16 %v1966
        %v3015 = vunpack.c.l.b16 %v1967
        %v3016 = vunpack.c.h.b16 %v1967
        %v3017 = vunpack.c.l.b16 %v1968
        %v3018 = vunpack.c.h.b16 %v1968
        %v3019 = vunpack.c.l.b16 %v1969
        %v3020 = vunpack.c.h.b16 %v1969
        %v3021 = vunpack.c.l.b16 %v1970
        %v3022 = vunpack.c.h.b16 %v1970
        %v3023 = vunpack.c.l.b16 %v1971
        %v3024 = vunpack.c.h.b16 %v1971
        %v3025 = vunpack.c.l.b16 %v1972
        %v3026 = vunpack.c.h.b16 %v1972
        %v3027 = vunpack.c.l.b16 %v1973
        %v3028 = vunpack.c.h.b16 %v1973
        %v3029 = vunpack.c.l.b16 %v1974
        %v3030 = vunpack.c.h.b16 %v1974
        %v3031 = vunpack.c.l.b16 %v1975
        %v3032 = vunpack.c.h.b16 %v1975
        %v3033 = vunpack.c.l.b16 %v1976
        %v3034 = vunpack.c.h.b16 %v1976
        %v3035 = vunpack.c.l.b16 %v1977
        %v3036 = vunpack.c.h.b16 %v1977
        %v3037 = vunpack.c.l.b16 %v1978
        %v3038 = vunpack.c.h.b16 %v1978
        %v3039 = vunpack.c.l.b16 %v1979
        %v3040 = vunpack.c.h.b16 %v1979
        %v3041 = vunpack.c.l.b16 %v1980
        %v3042 = vunpack.c.h.b16 %v1980
        %v3043 = vunpack.c.l.b16 %v1981
        %v3044 = vunpack.c.h.b16 %v1981
        %v3045 = vunpack.c.l.b16 %v1982
        %v3046 = vunpack.c.h.b16 %v1982
        %v3047 = vunpack.c.l.b16 %v1983
        %v3048 = vunpack.c.h.b16 %v1983
        %v3049 = vunpack.c.l.b16 %v1984
        %v3050 = vunpack.c.h.b16 %v1984
        %v3051 = vunpack.c.l.b16 %v1985
        %v3052 = vunpack.c.h.b16 %v1985
        %v3053 = vunpack.c.l.b16 %v1986
        %v3054 = vunpack.c.h.b16 %v1986
        %v3055 = vunpack.c.l.b16 %v1987
        %v3056 = vunpack.c.h.b16 %v1987
        %v3057 = vunpack.c.l.b16 %v1988
        %v3058 = vunpack.c.h.b16 %v1988
        %v3059 = vunpack.c.l.b16 %v1989
        %v3060 = vunpack.c.h.b16 %v1989
        %v3061 = vunpack.c.l.b16 %v1990
        %v3062 = vunpack.c.h.b16 %v1990
        %v3063 = vunpack.c.l.b16 %v1991
        %v3064 = vunpack.c.h.b16 %v1991
        %v3065 = vunpack.c.l.b16 %v1992
        %v3066 = vunpack.c.h.b16 %v1992
        %v3067 = vunpack.c.l.b16 %v1993
        %v3068 = vunpack.c.h.b16 %v1993
        %v3069 = vunpack.c.l.b16 %v1994
        %v3070 = vunpack.c.h.b16 %v1994
        %v3071 = vunpack.c.l.b16 %v1995
        %v3072 = vunpack.c.h.b16 %v1995
        %v3073 = vunpack.c.l.b16 %v1996
        %v3074 = vunpack.c.h.b16 %v1996
        %v3075 = vunpack.c.l.b16 %v1997
        %v3076 = vunpack.c.h.b16 %v1997
        %v3077 = vunpack.c.l.b16 %v1998
        %v3078 = vunpack.c.h.b16 %v1998
        %v3079 = vunpack.c.l.b16 %v1999
        %v3080 = vunpack.c.h.b16 %v1999
        %v3081 = vunpack.c.l.b16 %v2000
        %v3082 = vunpack.c.h.b16 %v2000
        %v3083 = vunpack.c.l.b16 %v2001
        %v3084 = vunpack.c.h.b16 %v2001
        %v3085 = vunpack.c.l.b16 %v2002
        %v3086 = vunpack.c.h.b16 %v2002
        %v3087 = vunpack.c.l.b16 %v2003
        %v3088 = vunpack.c.h.b16 %v2003
        %v3089 = vunpack.c.l.b16 %v2004
        %v3090 = vunpack.c.h.b16 %v2004
        %v3091 = vunpack.c.l.b16 %v2005
        %v3092 = vunpack.c.h.b16 %v2005
        %v3093 = vunpack.c.l.b16 %v2006
        %v3094 = vunpack.c.h.b16 %v2006
        %v3095 = vunpack.c.l.b16 %v2007
        %v3096 = vunpack.c.h.b16 %v2007
        %v3097 = vunpack.c.l.b16 %v2008
        %v3098 = vunpack.c.h.b16 %v2008
        %v3099 = vunpack.c.l.b16 %v2009
        %v3100 = vunpack.c.h.b16 %v2009
        %v3101 = vunpack.c.l.b16 %v2010
        %v3102 = vunpack.c.h.b16 %v2010
        %v3103 = vunpack.c.l.b16 %v2011
        %v3104 = vunpack.c.h.b16 %v2011
        %v3105 = vunpack.c.l.b16 %v2012
        %v3106 = vunpack.c.h.b16 %v2012
        %v3107 = vunpack.c.l.b16 %v2013
        %v3108 = vunpack.c.h.b16 %v2013
        %v3109 = vunpack.c.l.b16 %v2014
        %v3110 = vunpack.c.h.b16 %v2014
        %v3111 = vunpack.c.l.b16 %v2015
        %v3112 = vunpack.c.h.b16 %v2015
        %v3113 = vunpack.c.l.b16 %v2016
        %v3114 = vunpack.c.h.b16 %v2016
        %v3115 = vunpack.c.l.b16 %v2017
        %v3116 = vunpack.c.h.b16 %v2017
        %v3117 = vunpack.c.l.b16 %v2018
        %v3118 = vunpack.c.h.b16 %v2018
        %v3119 = vunpack.c.l.b16 %v2019
        %v3120 = vunpack.c.h.b16 %v2019
        %v3121 = vunpack.c.l.b16 %v2020
        %v3122 = vunpack.c.h.b16 %v2020
        %v3123 = vunpack.c.l.b16 %v2021
        %v3124 = vunpack.c.h.b16 %v2021
        %v3125 = vunpack.c.l.b16 %v2022
        %v3126 = vunpack.c.h.b16 %v2022
        %v3127 = vunpack.c.l.b16 %v2023
        %v3128 = vunpack.c.h.b16 %v2023
        %v3129 = vunpack.c.l.b16 %v2024
        %v3130 = vunpack.c.h.b16 %v2024
        %v3131 = vunpack.c.l.b16 %v2025
        %v3132 = vunpack.c.h.b16 %v2025
        %v3133 = vunpack.c.l.b16 %v2026
        %v3134 = vunpack.c.h.b16 %v2026
        %v3135 = vunpack.c.l.b16 %v2027
        %v3136 = vunpack.c.h.b16 %v2027
        %v3137 = vunpack.c.l.b16 %v2028
        %v3138 = vunpack.c.h.b16 %v2028
        %v3139 = vunpack.c.l.b16 %v2029
        %v3140 = vunpack.c.h.b16 %v2029
        %v3141 = vunpack.c.l.b16 %v2030
        %v3142 = vunpack.c.h.b16 %v2030
        %v3143 = vunpack.c.l.b16 %v2031
        %v3144 = vunpack.c.h.b16 %v2031
        %v3145 = vunpack.c.l.b16 %v2032
        %v3146 = vunpack.c.h.b16 %v2032
        %v3147 = vunpack.c.l.b16 %v2033
        %v3148 = vunpack.c.h.b16 %v2033
        %v3149 = vunpack.c.l.b16 %v2034
        %v3150 = vunpack.c.h.b16 %v2034
        %v3151 = vunpack.c.l.b16 %v2035
        %v3152 = vunpack.c.h.b16 %v2035
        %v3153 = vunpack.c.l.b16 %v2036
        %v3154 = vunpack.c.h.b16 %v2036
        %v3155 = vunpack.c.l.b16 %v2037
        %v3156 = vunpack.c.h.b16 %v2037
        %v3157 = vunpack.c.l.b16 %v2038
        %v3158 = vunpack.c.h.b16 %v2038
        %v3159 = vunpack.c.l.b16 %v2039
        %v3160 = vunpack.c.h.b16 %v2039
        %v3161 = vunpack.c.l.b16 %v2040
        %v3162 = vunpack.c.h.b16 %v2040
        %v3163 = vunpack.c.l.b16 %v2041
        %v3164 = vunpack.c.h.b16 %v2041
        %v3165 = vunpack.c.l.b16 %v2042
        %v3166 = vunpack.c.h.b16 %v2042
        %v3167 = vunpack.c.l.b16 %v2043
        %v3168 = vunpack.c.h.b16 %v2043
        %v3169 = vunpack.c.l.b16 %v2044
        %v3170 = vunpack.c.h.b16 %v2044
        %v3171 = vunpack.c.l.b16 %v2045
        %v3172 = vunpack.c.h.b16 %v2045
        %v3173 = vunpack.c.l.b16 %v2046
        %v3174 = vunpack.c.h.b16 %v2046
        %v3175 = vunpack.c.l.b16 %v2047
        %v3176 = vunpack.c.h.b16 %v2047
        %v3177 = vunpack.c.l.b16 %v2048
        %v3178 = vunpack.c.h.b16 %v2048
        %v3179 = vunpack.c.l.b16 %v2049
        %v3180 = vunpack.c.h.b16 %v2049
        %v3181 = vunpack.c.l.b16 %v2050
        %v3182 = vunpack.c.h.b16 %v2050
        %v3183 = vunpack.c.l.b16 %v2051
        %v3184 = vunpack.c.h.b16 %v2051
        %v3185 = vunpack.c.l.b16 %v2052
        %v3186 = vunpack.c.h.b16 %v2052
        %v3187 = vunpack.c.l.b16 %v2053
        %v3188 = vunpack.c.h.b16 %v2053
        %v3189 = vunpack.c.l.b16 %v2054
        %v3190 = vunpack.c.h.b16 %v2054
        %v3191 = vunpack.c.l.b16 %v2055
        %v3192 = vunpack.c.h.b16 %v2055
        %v3193 = vunpack.c.l.b16 %v2056
        %v3194 = vunpack.c.h.b16 %v2056
        %v3195 = vunpack.c.l.b16 %v2057
        %v3196 = vunpack.c.h.b16 %v2057
        %v3197 = vunpack.c.l.b16 %v2058
        %v3198 = vunpack.c.h.b16 %v2058
        %v3199 = vunpack.c.l.b16 %v2059
        %v3200 = vunpack.c.h.b16 %v2059
        %v3201 = vunpack.c.l.b16 %v2060
        %v3202 = vunpack.c.h.b16 %v2060
        %v3203 = vunpack.c.l.b16 %v2061
        %v3204 = vunpack.c.h.b16 %v2061
        %v3205 = vunpack.c.l.b16 %v2062
        %v3206 = vunpack.c.h.b16 %v2062
        %v3207 = vunpack.c.l.b16 %v2063
        %v3208 = vunpack.c.h.b16 %v2063
        %v3209 = vunpack.c.l.b16 %v2064
        %v3210 = vunpack.c.h.b16 %v2064
        %v3211 = vunpack.c.l.b16 %v2065
        %v3212 = vunpack.c.h.b16 %v2065
        %v3213 = vunpack.c.l.b16 %v2066
        %v3214 = vunpack.c.h.b16 %v2066
        %v3215 = vunpack.c.l.b16 %v2067
        %v3216 = vunpack.c.h.b16 %v2067
        %v3217 = vunpack.c.l.b16 %v2068
        %v3218 = vunpack.c.h.b16 %v2068
        %v3219 = vunpack.c.l.b16 %v2069
        %v3220 = vunpack.c.h.b16 %v2069
        %v3221 = vunpack.c.l.b16 %v2070
        %v3222 = vunpack.c.h.b16 %v2070
        %v3223 = vunpack.c.l.b16 %v2071
        %v3224 = vunpack.c.h.b16 %v2071
        %v3225 = vunpack.c.l.b16 %v2072
        %v3226 = vunpack.c.h.b16 %v2072
        %v3227 = vunpack.c.l.b16 %v2073
        %v3228 = vunpack.c.h.b16 %v2073
        %v3229 = vunpack.c.l.b16 %v2074
        %v3230 = vunpack.c.h.b16 %v2074
        %v3231 = vunpack.c.l.b16 %v2075
        %v3232 = vunpack.c.h.b16 %v2075
        %v3233 = vunpack.c.l.b16 %v2076
        %v3234 = vunpack.c.h.b16 %v2076
        %v3235 = vunpack.c.l.b16 %v2077
        %v3236 = vunpack.c.h.b16 %v2077
        %v3237 = vunpack.c.l.b16 %v2078
        %v3238 = vunpack.c.h.b16 %v2078
        %v3239 = vunpack.c.l.b16 %v2079
        %v3240 = vunpack.c.h.b16 %v2079
        %v3241 = vunpack.c.l.b16 %v2080
        %v3242 = vunpack.c.h.b16 %v2080
        %v3243 = vunpack.c.l.b16 %v2081
        %v3244 = vunpack.c.h.b16 %v2081
        %v3245 = vunpack.c.l.b16 %v2082
        %v3246 = vunpack.c.h.b16 %v2082
        %v3247 = vunpack.c.l.b16 %v2083
        %v3248 = vunpack.c.h.b16 %v2083
        %v3249 = vunpack.c.l.b16 %v2084
        %v3250 = vunpack.c.h.b16 %v2084
        %v3251 = vunpack.c.l.b16 %v2085
        %v3252 = vunpack.c.h.b16 %v2085
        %v3253 = vunpack.c.l.b16 %v2086
        %v3254 = vunpack.c.h.b16 %v2086
        %v3255 = vunpack.c.l.b16 %v2087
        %v3256 = vunpack.c.h.b16 %v2087
        %v3257 = vunpack.c.l.b16 %v2088
        %v3258 = vunpack.c.h.b16 %v2088
        %v3259 = vunpack.c.l.b16 %v2089
        %v3260 = vunpack.c.h.b16 %v2089
        %v3261 = vunpack.c.l.b16 %v2090
        %v3262 = vunpack.c.h.b16 %v2090
        %v3263 = vunpack.c.l.b16 %v2091
        %v3264 = vunpack.c.h.b16 %v2091
        %v3265 = vunpack.c.l.b16 %v2092
        %v3266 = vunpack.c.h.b16 %v2092
        %v3267 = vunpack.c.l.b16 %v2093
        %v3268 = vunpack.c.h.b16 %v2093
        %v3269 = vunpack.c.l.b16 %v2094
        %v3270 = vunpack.c.h.b16 %v2094
        %v3271 = vunpack.c.l.b16 %v2095
        %v3272 = vunpack.c.h.b16 %v2095
        %v3273 = vunpack.c.l.b16 %v2096
        %v3274 = vunpack.c.h.b16 %v2096
        %v3275 = vunpack.c.l.b16 %v2097
        %v3276 = vunpack.c.h.b16 %v2097
        %v3277 = vunpack.c.l.b16 %v2098
        %v3278 = vunpack.c.h.b16 %v2098
        %v3279 = vunpack.c.l.b16 %v2099
        %v3280 = vunpack.c.h.b16 %v2099
        %v3281 = vunpack.c.l.b16 %v2100
        %v3282 = vunpack.c.h.b16 %v2100
        %v3283 = vunpack.c.l.b16 %v2101
        %v3284 = vunpack.c.h.b16 %v2101
        %v3285 = vunpack.c.l.b16 %v2102
        %v3286 = vunpack.c.h.b16 %v2102
        %v3287 = vunpack.c.l.b16 %v2103
        %v3288 = vunpack.c.h.b16 %v2103
        %v3289 = vunpack.c.l.b16 %v2104
        %v3290 = vunpack.c.h.b16 %v2104
        %v3291 = vunpack.c.l.b16 %v2105
        %v3292 = vunpack.c.h.b16 %v2105
        %v3293 = vunpack.c.l.b16 %v2106
        %v3294 = vunpack.c.h.b16 %v2106
        %v3295 = vunpack.c.l.b16 %v2107
        %v3296 = vunpack.c.h.b16 %v2107
        %v3297 = vunpack.c.l.b16 %v2108
        %v3298 = vunpack.c.h.b16 %v2108
        %v3299 = vunpack.c.l.b16 %v2109
        %v3300 = vunpack.c.h.b16 %v2109
        %v3301 = vunpack.c.l.b16 %v2110
        %v3302 = vunpack.c.h.b16 %v2110
        %v3303 = vunpack.c.l.b16 %v2111
        %v3304 = vunpack.c.h.b16 %v2111
        %v3305 = vunpack.c.l.b16 %v2112
        %v3306 = vunpack.c.h.b16 %v2112
        %v3307 = vunpack.c.l.b16 %v2113
        %v3308 = vunpack.c.h.b16 %v2113
        %v3309 = vunpack.c.l.b16 %v2114
        %v3310 = vunpack.c.h.b16 %v2114
        %v3311 = vunpack.c.l.b16 %v2115
        %v3312 = vunpack.c.h.b16 %v2115
        %v3313 = vunpack.c.l.b16 %v2116
        %v3314 = vunpack.c.h.b16 %v2116
        %v3315 = vunpack.c.l.b16 %v2117
        %v3316 = vunpack.c.h.b16 %v2117
        %v3317 = vunpack.c.l.b16 %v2118
        %v3318 = vunpack.c.h.b16 %v2118
        %v3319 = vunpack.c.l.b16 %v2119
        %v3320 = vunpack.c.h.b16 %v2119
        %v3321 = vunpack.c.l.b16 %v2120
        %v3322 = vunpack.c.h.b16 %v2120
        %v3323 = vunpack.c.l.b16 %v2121
        %v3324 = vunpack.c.h.b16 %v2121
        %v3325 = vunpack.c.l.b16 %v2122
        %v3326 = vunpack.c.h.b16 %v2122
        %v3327 = vunpack.c.l.b16 %v2123
        %v3328 = vunpack.c.h.b16 %v2123
        %v3329 = vunpack.c.l.b16 %v2124
        %v3330 = vunpack.c.h.b16 %v2124
        %v3331 = vunpack.c.l.b16 %v2125
        %v3332 = vunpack.c.h.b16 %v2125
        %v3333 = vunpack.c.l.b16 %v2126
        %v3334 = vunpack.c.h.b16 %v2126
        %v3335 = vunpack.c.l.b16 %v2127
        %v3336 = vunpack.c.h.b16 %v2127
        %v3337 = vunpack.c.l.b16 %v2128
        %v3338 = vunpack.c.h.b16 %v2128
        %v3339 = vunpack.c.l.b16 %v2129
        %v3340 = vunpack.c.h.b16 %v2129
        %v3341 = vunpack.c.l.b16 %v2130
        %v3342 = vunpack.c.h.b16 %v2130
        %v3343 = vunpack.c.l.b16 %v2131
        %v3344 = vunpack.c.h.b16 %v2131
        %v3345 = vunpack.c.l.b16 %v2132
        %v3346 = vunpack.c.h.b16 %v2132
        %v3347 = vunpack.c.l.b16 %v2133
        %v3348 = vunpack.c.h.b16 %v2133
        %v3349 = vunpack.c.l.b16 %v2134
        %v3350 = vunpack.c.h.b16 %v2134
        %v3351 = vunpack.c.l.b16 %v2135
        %v3352 = vunpack.c.h.b16 %v2135
        %v3353 = vunpack.c.l.b16 %v2136
        %v3354 = vunpack.c.h.b16 %v2136
        %v3355 = vunpack.c.l.b16 %v2137
        %v3356 = vunpack.c.h.b16 %v2137
        %v3357 = vunpack.c.l.b16 %v2138
        %v3358 = vunpack.c.h.b16 %v2138
        %v3359 = vunpack.c.l.b16 %v2139
        %v3360 = vunpack.c.h.b16 %v2139
        %v3361 = vunpack.c.l.b16 %v2140
        %v3362 = vunpack.c.h.b16 %v2140
        %v3363 = vunpack.c.l.b16 %v2141
        %v3364 = vunpack.c.h.b16 %v2141
        %v3365 = vunpack.c.l.b16 %v2142
        %v3366 = vunpack.c.h.b16 %v2142
        %v3367 = vunpack.c.l.b16 %v2143
        %v3368 = vunpack.c.h.b16 %v2143
        %v3369 = vunpack.c.l.b16 %v2144
        %v3370 = vunpack.c.h.b16 %v2144
        %v3371 = vunpack.c.l.b16 %v2145
        %v3372 = vunpack.c.h.b16 %v2145
        %v3373 = vunpack.c.l.b16 %v2146
        %v3374 = vunpack.c.h.b16 %v2146
        %v3375 = vunpack.c.l.b16 %v2147
        %v3376 = vunpack.c.h.b16 %v2147
        %v3377 = vunpack.c.l.b16 %v2148
        %v3378 = vunpack.c.h.b16 %v2148
        %v3379 = vunpack.c.l.b16 %v2149
        %v3380 = vunpack.c.h.b16 %v2149
        %v3381 = vunpack.c.l.b16 %v2150
        %v3382 = vunpack.c.h.b16 %v2150
        %v3383 = vunpack.c.l.b16 %v2151
        %v3384 = vunpack.c.h.b16 %v2151
        %v3385 = vunpack.c.l.b16 %v2152
        %v3386 = vunpack.c.h.b16 %v2152
        %v3387 = vunpack.c.l.b16 %v2153
        %v3388 = vunpack.c.h.b16 %v2153
        %v3389 = vunpack.c.l.b16 %v2154
        %v3390 = vunpack.c.h.b16 %v2154
        %v3391 = vunpack.c.l.b16 %v2155
        %v3392 = vunpack.c.h.b16 %v2155
        %v3393 = vunpack.c.l.b16 %v2156
        %v3394 = vunpack.c.h.b16 %v2156
        %v3395 = vunpack.c.l.b16 %v2157
        %v3396 = vunpack.c.h.b16 %v2157
        %v3397 = vunpack.c.l.b16 %v2158
        %v3398 = vunpack.c.h.b16 %v2158
        %v3399 = vunpack.c.l.b16 %v2159
        %v3400 = vunpack.c.h.b16 %v2159
        %v3401 = vunpack.c.l.b16 %v2160
        %v3402 = vunpack.c.h.b16 %v2160
        %v3403 = vunpack.c.l.b16 %v2161
        %v3404 = vunpack.c.h.b16 %v2161
        %v3405 = vunpack.c.l.b16 %v2162
        %v3406 = vunpack.c.h.b16 %v2162
        %v3407 = vunpack.c.l.b16 %v2163
        %v3408 = vunpack.c.h.b16 %v2163
        %v3409 = vunpack.c.l.b16 %v2164
        %v3410 = vunpack.c.h.b16 %v2164
        %v3411 = vunpack.c.l.b16 %v2165
        %v3412 = vunpack.c.h.b16 %v2165
        %v3413 = vunpack.c.l.b16 %v2166
        %v3414 = vunpack.c.h.b16 %v2166
        %v3415 = vunpack.c.l.b16 %v2167
        %v3416 = vunpack.c.h.b16 %v2167
        %v3417 = vunpack.c.l.b16 %v2168
        %v3418 = vunpack.c.h.b16 %v2168
        %v3419 = vunpack.c.l.b16 %v2169
        %v3420 = vunpack.c.h.b16 %v2169
        %v3421 = vunpack.c.l.b16 %v2170
        %v3422 = vunpack.c.h.b16 %v2170
        %v3423 = vunpack.c.l.b16 %v2171
        %v3424 = vunpack.c.h.b16 %v2171
        %v3425 = vunpack.c.l.b16 %v2172
        %v3426 = vunpack.c.h.b16 %v2172
        %v3427 = vunpack.c.l.b16 %v2173
        %v3428 = vunpack.c.h.b16 %v2173
        %v3429 = vunpack.c.l.b16 %v2174
        %v3430 = vunpack.c.h.b16 %v2174
        %v3431 = vunpack.c.l.b16 %v2175
        %v3432 = vunpack.c.h.b16 %v2175
        %v3433 = vunpack.c.l.b16 %v2176
        %v3434 = vunpack.c.h.b16 %v2176
        %v3435 = vunpack.c.l.b16 %v2177
        %v3436 = vunpack.c.h.b16 %v2177
        %v3437 = vunpack.c.l.b16 %v2178
        %v3438 = vunpack.c.h.b16 %v2178
        %v3439 = vunpack.c.l.b16 %v2179
        %v3440 = vunpack.c.h.b16 %v2179
        %v3441 = vunpack.c.l.b16 %v2180
        %v3442 = vunpack.c.h.b16 %v2180
        %v3443 = vunpack.c.l.b16 %v2181
        %v3444 = vunpack.c.h.b16 %v2181
        %v3445 = vunpack.c.l.b16 %v2182
        %v3446 = vunpack.c.h.b16 %v2182
        %v3447 = vunpack.c.l.b16 %v2183
        %v3448 = vunpack.c.h.b16 %v2183
        %v3449 = vunpack.c.l.b16 %v2184
        %v3450 = vunpack.c.h.b16 %v2184
        %v3451 = vunpack.c.l.b16 %v2185
        %v3452 = vunpack.c.h.b16 %v2185
        %v3453 = vunpack.c.l.b16 %v2186
        %v3454 = vunpack.c.h.b16 %v2186
        %v3455 = vunpack.c.l.b16 %v2187
        %v3456 = vunpack.c.h.b16 %v2187
        %v3457 = vunpack.c.l.b16 %v2188
        %v3458 = vunpack.c.h.b16 %v2188
        %v3459 = vunpack.c.l.b16 %v2189
        %v3460 = vunpack.c.h.b16 %v2189
        %v3461 = vunpack.c.l.b16 %v2190
        %v3462 = vunpack.c.h.b16 %v2190
        %v3463 = vunpack.c.l.b16 %v2191
        %v3464 = vunpack.c.h.b16 %v2191
        %v3465 = vunpack.c.l.b16 %v2192
        %v3466 = vunpack.c.h.b16 %v2192
        %v3467 = vunpack.c.l.b16 %v2193
        %v3468 = vunpack.c.h.b16 %v2193
        %v3469 = vunpack.c.l.b16 %v2194
        %v3470 = vunpack.c.h.b16 %v2194
        %v3471 = vunpack.c.l.b16 %v2195
        %v3472 = vunpack.c.h.b16 %v2195
        %v3473 = vunpack.c.l.b16 %v2196
        %v3474 = vunpack.c.h.b16 %v2196
        %v3475 = vunpack.c.l.b16 %v2197
        %v3476 = vunpack.c.h.b16 %v2197
        %v3477 = vunpack.c.l.b16 %v2198
        %v3478 = vunpack.c.h.b16 %v2198
        %v3479 = vunpack.c.l.b16 %v2199
        %v3480 = vunpack.c.h.b16 %v2199
        %v3481 = vunpack.c.l.b16 %v2200
        %v3482 = vunpack.c.h.b16 %v2200
        %v3483 = vunpack.c.l.b16 %v2201
        %v3484 = vunpack.c.h.b16 %v2201
        %v3485 = vunpack.c.l.b16 %v2202
        %v3486 = vunpack.c.h.b16 %v2202
        %v3487 = vunpack.c.l.b16 %v2203
        %v3488 = vunpack.c.h.b16 %v2203
        %v3489 = vunpack.c.l.b16 %v2204
        %v3490 = vunpack.c.h.b16 %v2204
        %v3491 = vunpack.c.l.b16 %v2205
        %v3492 = vunpack.c.h.b16 %v2205
        %v3493 = vunpack.c.l.b16 %v2206
        %v3494 = vunpack.c.h.b16 %v2206
        %v3495 = vunpack.c.l.b16 %v2207
        %v3496 = vunpack.c.h.b16 %v2207
        %v3497 = vunpack.c.l.b16 %v2208
        %v3498 = vunpack.c.h.b16 %v2208
        %v3499 = vunpack.c.l.b16 %v2209
        %v3500 = vunpack.c.h.b16 %v2209
        %v3501 = vunpack.c.l.b16 %v2210
        %v3502 = vunpack.c.h.b16 %v2210
        %v3503 = vunpack.c.l.b16 %v2211
        %v3504 = vunpack.c.h.b16 %v2211
        %v3505 = vunpack.c.l.b16 %v2212
        %v3506 = vunpack.c.h.b16 %v2212
        %v3507 = vunpack.c.l.b16 %v2213
        %v3508 = vunpack.c.h.b16 %v2213
        %v3509 = vunpack.c.l.b16 %v2214
        %v3510 = vunpack.c.h.b16 %v2214
        %v3511 = vunpack.c.l.b16 %v2215
        %v3512 = vunpack.c.h.b16 %v2215
        %v3513 = vunpack.c.l.b16 %v2216
        %v3514 = vunpack.c.h.b16 %v2216
        %v3515 = vunpack.c.l.b16 %v2217
        %v3516 = vunpack.c.h.b16 %v2217
        %v3517 = vunpack.c.l.b16 %v2218
        %v3518 = vunpack.c.h.b16 %v2218
        %v3519 = vunpack.c.l.b16 %v2219
        %v3520 = vunpack.c.h.b16 %v2219
        %v3521 = vunpack.c.l.b16 %v2220
        %v3522 = vunpack.c.h.b16 %v2220
        %v3523 = vunpack.c.l.b16 %v2221
        %v3524 = vunpack.c.h.b16 %v2221
        %v3525 = vunpack.c.l.b16 %v2222
        %v3526 = vunpack.c.h.b16 %v2222
        %v3527 = vunpack.c.l.b16 %v2223
        %v3528 = vunpack.c.h.b16 %v2223
        %v3529 = vunpack.c.l.b16 %v2224
        %v3530 = vunpack.c.h.b16 %v2224
        %v3531 = vunpack.c.l.b16 %v2225
        %v3532 = vunpack.c.h.b16 %v2225
        %v3533 = vunpack.c.l.b16 %v2226
        %v3534 = vunpack.c.h.b16 %v2226
        %v3535 = vunpack.c.l.b16 %v2227
        %v3536 = vunpack.c.h.b16 %v2227
        %v3537 = vunpack.c.l.b16 %v2228
        %v3538 = vunpack.c.h.b16 %v2228
        %v3539 = vunpack.c.l.b16 %v2229
        %v3540 = vunpack.c.h.b16 %v2229
        %v3541 = vunpack.c.l.b16 %v2230
        %v3542 = vunpack.c.h.b16 %v2230
        %v3543 = vunpack.c.l.b16 %v2231
        %v3544 = vunpack.c.h.b16 %v2231
        %v3545 = vunpack.c.l.b16 %v2232
        %v3546 = vunpack.c.h.b16 %v2232
        %v3547 = vunpack.c.l.b16 %v2233
        %v3548 = vunpack.c.h.b16 %v2233
        %v3549 = vunpack.c.l.b16 %v2234
        %v3550 = vunpack.c.h.b16 %v2234
        %v3551 = vunpack.c.l.b16 %v2235
        %v3552 = vunpack.c.h.b16 %v2235
        %v3553 = vunpack.c.l.b16 %v2236
        %v3554 = vunpack.c.h.b16 %v2236
        %v3555 = vunpack.c.l.b16 %v2237
        %v3556 = vunpack.c.h.b16 %v2237
        %v3557 = vunpack.c.l.b16 %v2238
        %v3558 = vunpack.c.h.b16 %v2238
        %v3559 = vunpack.c.l.b16 %v2239
        %v3560 = vunpack.c.h.b16 %v2239
        %v3561 = vunpack.c.l.b16 %v2240
        %v3562 = vunpack.c.h.b16 %v2240
        %v3563 = vunpack.c.l.b16 %v2241
        %v3564 = vunpack.c.h.b16 %v2241
        %v3565 = vunpack.c.l.b16 %v2242
        %v3566 = vunpack.c.h.b16 %v2242
        %v3567 = vunpack.c.l.b16 %v2243
        %v3568 = vunpack.c.h.b16 %v2243
        %v3569 = vunpack.c.l.b16 %v2244
        %v3570 = vunpack.c.h.b16 %v2244
        %v3571 = vunpack.c.l.b16 %v2245
        %v3572 = vunpack.c.h.b16 %v2245
        %v3573 = vunpack.c.l.b16 %v2246
        %v3574 = vunpack.c.h.b16 %v2246
        %v3575 = vunpack.c.l.b16 %v2247
        %v3576 = vunpack.c.h.b16 %v2247
        %v3577 = vunpack.c.l.b16 %v2248
        %v3578 = vunpack.c.h.b16 %v2248
        %v3579 = vunpack.c.l.b16 %v2249
        %v3580 = vunpack.c.h.b16 %v2249
        %v3581 = vunpack.c.l.b16 %v2250
        %v3582 = vunpack.c.h.b16 %v2250
        %v3583 = vunpack.c.l.b16 %v2251
        %v3584 = vunpack.c.h.b16 %v2251
        %v3585 = vunpack.c.l.b16 %v2252
        %v3586 = vunpack.c.h.b16 %v2252
        %v3587 = vunpack.c.l.b16 %v2253
        %v3588 = vunpack.c.h.b16 %v2253
        %v3589 = vunpack.c.l.b16 %v2254
        %v3590 = vunpack.c.h.b16 %v2254
        %v3591 = vunpack.c.l.b16 %v2255
        %v3592 = vunpack.c.h.b16 %v2255
        %v3593 = vunpack.c.l.b16 %v2256
        %v3594 = vunpack.c.h.b16 %v2256
        %v3595 = vunpack.c.l.b16 %v2257
        %v3596 = vunpack.c.h.b16 %v2257
        %v3597 = vunpack.c.l.b16 %v2258
        %v3598 = vunpack.c.h.b16 %v2258
        %v3599 = vunpack.c.l.b16 %v2259
        %v3600 = vunpack.c.h.b16 %v2259
        %v3601 = vunpack.c.l.b16 %v2260
        %v3602 = vunpack.c.h.b16 %v2260
        %v3603 = vunpack.c.l.b16 %v2261
        %v3604 = vunpack.c.h.b16 %v2261
        %v3605 = vunpack.c.l.b16 %v2262
        %v3606 = vunpack.c.h.b16 %v2262
        %v3607 = vunpack.c.l.b16 %v2263
        %v3608 = vunpack.c.h.b16 %v2263
        %v3609 = vunpack.c.l.b16 %v2264
        %v3610 = vunpack.c.h.b16 %v2264
        %v3611 = vunpack.c.l.b16 %v2265
        %v3612 = vunpack.c.h.b16 %v2265
        %v3613 = vunpack.c.l.b16 %v2266
        %v3614 = vunpack.c.h.b16 %v2266
        %v3615 = vunpack.c.l.b16 %v2267
        %v3616 = vunpack.c.h.b16 %v2267
        %v3617 = vunpack.c.l.b16 %v2268
        %v3618 = vunpack.c.h.b16 %v2268
        %v3619 = vunpack.c.l.b16 %v2269
        %v3620 = vunpack.c.h.b16 %v2269
        %v3621 = vunpack.c.l.b16 %v2270
        %v3622 = vunpack.c.h.b16 %v2270
        %v3623 = vunpack.c.l.b16 %v2271
        %v3624 = vunpack.c.h.b16 %v2271
        %v3625 = vunpack.c.l.b16 %v2272
        %v3626 = vunpack.c.h.b16 %v2272
        %v3627 = vunpack.c.l.b16 %v2273
        %v3628 = vunpack.c.h.b16 %v2273
        %v3629 = vunpack.c.l.b16 %v2274
        %v3630 = vunpack.c.h.b16 %v2274
        %v3631 = vunpack.c.l.b16 %v2275
        %v3632 = vunpack.c.h.b16 %v2275
        %v3633 = vunpack.c.l.b16 %v2276
        %v3634 = vunpack.c.h.b16 %v2276
        %v3635 = vunpack.c.l.b16 %v2277
        %v3636 = vunpack.c.h.b16 %v2277
        %v3637 = vunpack.c.l.b16 %v2278
        %v3638 = vunpack.c.h.b16 %v2278
        %v3639 = vunpack.c.l.b16 %v2279
        %v3640 = vunpack.c.h.b16 %v2279
        %v3641 = vunpack.c.l.b16 %v2280
        %v3642 = vunpack.c.h.b16 %v2280
        %v3643 = vunpack.c.l.b16 %v2281
        %v3644 = vunpack.c.h.b16 %v2281
        %v3645 = vunpack.c.l.b16 %v2282
        %v3646 = vunpack.c.h.b16 %v2282
        %v3647 = vunpack.c.l.b16 %v2283
        %v3648 = vunpack.c.h.b16 %v2283
        %v3649 = vunpack.c.l.b16 %v2284
        %v3650 = vunpack.c.h.b16 %v2284
        %v3651 = vunpack.c.l.b16 %v2285
        %v3652 = vunpack.c.h.b16 %v2285
        %v3653 = vunpack.c.l.b16 %v2286
        %v3654 = vunpack.c.h.b16 %v2286
        %v3655 = vunpack.c.l.b16 %v2287
        %v3656 = vunpack.c.h.b16 %v2287
        %v3657 = vunpack.c.l.b16 %v2288
        %v3658 = vunpack.c.h.b16 %v2288
        %v3659 = vunpack.c.l.b16 %v2289
        %v3660 = vunpack.c.h.b16 %v2289
        %v3661 = vunpack.c.l.b16 %v2290
        %v3662 = vunpack.c.h.b16 %v2290
        %v3663 = vunpack.c.l.b16 %v2291
        %v3664 = vunpack.c.h.b16 %v2291
        %v3665 = vunpack.c.l.b16 %v2292
        %v3666 = vunpack.c.h.b16 %v2292
        %v3667 = vunpack.c.l.b16 %v2293
        %v3668 = vunpack.c.h.b16 %v2293
        %v3669 = vunpack.c.l.b16 %v2294
        %v3670 = vunpack.c.h.b16 %v2294
        %v3671 = vunpack.c.l.b16 %v2295
        %v3672 = vunpack.c.h.b16 %v2295
        %v3673 = vunpack.c.l.b16 %v2296
        %v3674 = vunpack.c.h.b16 %v2296
        %v3675 = vunpack.c.l.b16 %v2297
        %v3676 = vunpack.c.h.b16 %v2297
        %v3677 = vunpack.c.l.b16 %v2298
        %v3678 = vunpack.c.h.b16 %v2298
        %v3679 = vunpack.c.l.b16 %v2299
        %v3680 = vunpack.c.h.b16 %v2299
        %v3681 = vunpack.c.l.b16 %v2300
        %v3682 = vunpack.c.h.b16 %v2300
        %v3683 = vunpack.c.l.b16 %v2301
        %v3684 = vunpack.c.h.b16 %v2301
        %v3685 = vunpack.c.l.b16 %v2302
        %v3686 = vunpack.c.h.b16 %v2302
        %v3687 = vunpack.c.l.b16 %v2303
        %v3688 = vunpack.c.h.b16 %v2303
        %v3689 = vunpack.c.l.b16 %v2304
        %v3690 = vunpack.c.h.b16 %v2304
        %v3691 = vunpack.c.l.b16 %v2305
        %v3692 = vunpack.c.h.b16 %v2305
        %v3693 = vunpack.c.l.b16 %v2306
        %v3694 = vunpack.c.h.b16 %v2306
        %v3695 = vunpack.c.l.b16 %v2307
        %v3696 = vunpack.c.h.b16 %v2307
        %v3697 = vunpack.c.l.b16 %v2308
        %v3698 = vunpack.c.h.b16 %v2308
        %v3699 = vunpack.c.l.b16 %v2309
        %v3700 = vunpack.c.h.b16 %v2309
        %v3701 = vunpack.c.l.b16 %v2310
        %v3702 = vunpack.c.h.b16 %v2310
        %v3703 = vunpack.c.l.b16 %v2311
        %v3704 = vunpack.c.h.b16 %v2311
        %v3705 = vunpack.c.l.b16 %v2312
        %v3706 = vunpack.c.h.b16 %v2312
        %v3707 = vunpack.c.l.b16 %v2313
        %v3708 = vunpack.c.h.b16 %v2313
        %v3709 = vunpack.c.l.b16 %v2314
        %v3710 = vunpack.c.h.b16 %v2314
        %v3711 = vunpack.c.l.b16 %v2315
        %v3712 = vunpack.c.h.b16 %v2315
        %v3713 = vunpack.c.l.b16 %v2316
        %v3714 = vunpack.c.h.b16 %v2316
        %v3715 = vunpack.c.l.b16 %v2317
        %v3716 = vunpack.c.h.b16 %v2317
        %v3717 = vunpack.c.l.b16 %v2318
        %v3718 = vunpack.c.h.b16 %v2318
        %v3719 = vunpack.c.l.b16 %v2319
        %v3720 = vunpack.c.h.b16 %v2319
        %v3721 = vunpack.c.l.b16 %v2320
        %v3722 = vunpack.c.h.b16 %v2320
        %v3723 = vunpack.c.l.b16 %v2321
        %v3724 = vunpack.c.h.b16 %v2321
        %v3725 = vunpack.c.l.b16 %v2322
        %v3726 = vunpack.c.h.b16 %v2322
        %v3727 = vunpack.c.l.b16 %v2323
        %v3728 = vunpack.c.h.b16 %v2323
        %v3729 = vunpack.c.l.b16 %v2324
        %v3730 = vunpack.c.h.b16 %v2324
        %v3731 = vunpack.c.l.b16 %v2325
        %v3732 = vunpack.c.h.b16 %v2325
        %v3733 = vunpack.c.l.b16 %v2326
        %v3734 = vunpack.c.h.b16 %v2326
        %v3735 = vunpack.c.l.b16 %v2327
        %v3736 = vunpack.c.h.b16 %v2327
        %v3737 = vunpack.c.l.b16 %v2328
        %v3738 = vunpack.c.h.b16 %v2328
        %v3739 = vunpack.c.l.b16 %v2329
        %v3740 = vunpack.c.h.b16 %v2329
        %v3741 = vunpack.c.l.b16 %v2330
        %v3742 = vunpack.c.h.b16 %v2330
        %v3743 = vunpack.c.l.b16 %v2331
        %v3744 = vunpack.c.h.b16 %v2331
        %v3745 = vunpack.c.l.b16 %v2332
        %v3746 = vunpack.c.h.b16 %v2332
        %v3747 = vunpack.c.l.b16 %v2333
        %v3748 = vunpack.c.h.b16 %v2333
        %v3749 = vunpack.c.l.b16 %v2334
        %v3750 = vunpack.c.h.b16 %v2334
        %v3751 = vunpack.c.l.b16 %v2335
        %v3752 = vunpack.c.h.b16 %v2335
        %v3753 = vunpack.c.l.b16 %v2336
        %v3754 = vunpack.c.h.b16 %v2336
        %v3755 = vunpack.c.l.b16 %v2337
        %v3756 = vunpack.c.h.b16 %v2337
        %v3757 = vunpack.c.l.b16 %v2338
        %v3758 = vunpack.c.h.b16 %v2338
        %v3759 = vunpack.c.l.b16 %v2339
        %v3760 = vunpack.c.h.b16 %v2339
        %v3761 = vunpack.c.l.b16 %v2340
        %v3762 = vunpack.c.h.b16 %v2340
        %v3763 = vunpack.c.l.b16 %v2341
        %v3764 = vunpack.c.h.b16 %v2341
        %v3765 = vunpack.c.l.b16 %v2342
        %v3766 = vunpack.c.h.b16 %v2342
        %v3767 = vunpack.c.l.b16 %v2343
        %v3768 = vunpack.c.h.b16 %v2343
        %v3769 = vunpack.c.l.b16 %v2344
        %v3770 = vunpack.c.h.b16 %v2344
        %v3771 = vunpack.c.l.b16 %v2345
        %v3772 = vunpack.c.h.b16 %v2345
        %v3773 = vunpack.c.l.b16 %v2346
        %v3774 = vunpack.c.h.b16 %v2346
        %v3775 = vunpack.c.l.b16 %v2347
        %v3776 = vunpack.c.h.b16 %v2347
        %v3777 = vunpack.c.l.b16 %v2348
        %v3778 = vunpack.c.h.b16 %v2348
        %v3779 = vunpack.c.l.b16 %v2349
        %v3780 = vunpack.c.h.b16 %v2349
        %v3781 = vunpack.c.l.b16 %v2350
        %v3782 = vunpack.c.h.b16 %v2350
        %v3783 = vunpack.c.l.b16 %v2351
        %v3784 = vunpack.c.h.b16 %v2351
        %v3785 = vunpack.c.l.b16 %v2352
        %v3786 = vunpack.c.h.b16 %v2352
        %v3787 = vunpack.c.l.b16 %v2353
        %v3788 = vunpack.c.h.b16 %v2353
        %v3789 = vunpack.c.l.b16 %v2354
        %v3790 = vunpack.c.h.b16 %v2354
        %v3791 = vunpack.c.l.b16 %v2355
        %v3792 = vunpack.c.h.b16 %v2355
        %v3793 = vunpack.c.l.b16 %v2356
        %v3794 = vunpack.c.h.b16 %v2356
        %v3795 = vunpack.c.l.b16 %v2357
        %v3796 = vunpack.c.h.b16 %v2357
        %v3797 = vunpack.c.l.b16 %v2358
        %v3798 = vunpack.c.h.b16 %v2358
        %v3799 = vunpack.c.l.b16 %v2359
        %v3800 = vunpack.c.h.b16 %v2359
        %v3801 = vunpack.c.l.b16 %v2360
        %v3802 = vunpack.c.h.b16 %v2360
        %v3803 = vunpack.c.l.b16 %v2361
        %v3804 = vunpack.c.h.b16 %v2361
        %v3805 = vunpack.c.l.b16 %v2362
        %v3806 = vunpack.c.h.b16 %v2362
        %v3807 = vunpack.c.l.b16 %v2363
        %v3808 = vunpack.c.h.b16 %v2363
        %v3809 = vunpack.c.l.b16 %v2364
        %v3810 = vunpack.c.h.b16 %v2364
        %v3811 = vunpack.c.l.b16 %v2365
        %v3812 = vunpack.c.h.b16 %v2365
        %v3813 = vunpack.c.l.b16 %v2366
        %v3814 = vunpack.c.h.b16 %v2366
        %v3815 = vunpack.c.l.b16 %v2367
        %v3816 = vunpack.c.h.b16 %v2367
        %v3817 = vunpack.c.l.b16 %v2368
        %v3818 = vunpack.c.h.b16 %v2368
        %v3819 = vunpack.c.l.b16 %v2369
        %v3820 = vunpack.c.h.b16 %v2369
        %v3821 = vunpack.c.l.b16 %v2370
        %v3822 = vunpack.c.h.b16 %v2370
        %v3823 = vunpack.c.l.b16 %v2371
        %v3824 = vunpack.c.h.b16 %v2371
        %v3825 = vunpack.c.l.b16 %v2372
        %v3826 = vunpack.c.h.b16 %v2372
        %v3827 = vunpack.c.l.b16 %v2373
        %v3828 = vunpack.c.h.b16 %v2373
        %v3829 = vunpack.c.l.b16 %v2374
        %v3830 = vunpack.c.h.b16 %v2374
        %v3831 = vunpack.c.l.b16 %v2375
        %v3832 = vunpack.c.h.b16 %v2375
        %v3833 = vunpack.c.l.b16 %v2376
        %v3834 = vunpack.c.h.b16 %v2376
        %v3835 = vunpack.c.l.b16 %v2377
        %v3836 = vunpack.c.h.b16 %v2377
        %v3837 = vunpack.c.l.b16 %v2378
        %v3838 = vunpack.c.h.b16 %v2378
        %v3839 = vunpack.c.l.b16 %v2379
        %v3840 = vunpack.c.h.b16 %v2379
        %v3841 = vunpack.c.l.b16 %v2380
        %v3842 = vunpack.c.h.b16 %v2380
        %v3843 = vunpack.c.l.b16 %v2381
        %v3844 = vunpack.c.h.b16 %v2381
        %v3845 = vunpack.c.l.b16 %v2382
        %v3846 = vunpack.c.h.b16 %v2382
        %v3847 = vunpack.c.l.b16 %v2383
        %v3848 = vunpack.c.h.b16 %v2383
        %v3849 = vunpack.c.l.b16 %v2384
        %v3850 = vunpack.c.h.b16 %v2384
        %v3851 = vunpack.c.l.b16 %v2385
        %v3852 = vunpack.c.h.b16 %v2385
        %v3853 = vunpack.c.l.b16 %v2386
        %v3854 = vunpack.c.h.b16 %v2386
        %v3855 = vunpack.c.l.b16 %v2387
        %v3856 = vunpack.c.h.b16 %v2387
        %v3857 = vunpack.c.l.b16 %v2388
        %v3858 = vunpack.c.h.b16 %v2388
        %v3859 = vunpack.c.l.b16 %v2389
        %v3860 = vunpack.c.h.b16 %v2389
        %v3861 = vunpack.c.l.b16 %v2390
        %v3862 = vunpack.c.h.b16 %v2390
        %v3863 = vunpack.c.l.b16 %v2391
        %v3864 = vunpack.c.h.b16 %v2391
        %v3865 = vunpack.c.l.b16 %v2392
        %v3866 = vunpack.c.h.b16 %v2392
        %v3867 = vunpack.c.l.b16 %v2393
        %v3868 = vunpack.c.h.b16 %v2393
        %v3869 = vunpack.c.l.b16 %v2394
        %v3870 = vunpack.c.h.b16 %v2394
        %v3871 = vunpack.c.l.b16 %v2395
        %v3872 = vunpack.c.h.b16 %v2395
        %v3873 = vunpack.c.l.b16 %v2396
        %v3874 = vunpack.c.h.b16 %v2396
        %v3875 = vunpack.c.l.b16 %v2397
        %v3876 = vunpack.c.h.b16 %v2397
        %v3877 = vunpack.c.l.b16 %v2398
        %v3878 = vunpack.c.h.b16 %v2398
        %v3879 = vunpack.c.l.b16 %v2399
        %v3880 = vunpack.c.h.b16 %v2399
        %v3881 = vunpack.c.l.b16 %v2400
        %v3882 = vunpack.c.h.b16 %v2400
        %v3883 = vunpack.c.l.b16 %v2401
        %v3884 = vunpack.c.h.b16 %v2401
        %v3885 = vunpack.c.l.b16 %v2402
        %v3886 = vunpack.c.h.b16 %v2402
        %v3887 = vunpack.c.l.b16 %v2403
        %v3888 = vunpack.c.h.b16 %v2403
        %v3889 = vunpack.c.l.b16 %v2404
        %v3890 = vunpack.c.h.b16 %v2404
        %v3891 = vunpack.c.l.b16 %v2405
        %v3892 = vunpack.c.h.b16 %v2405
        %v3893 = vunpack.c.l.b16 %v2406
        %v3894 = vunpack.c.h.b16 %v2406
        %v3895 = vunpack.c.l.b16 %v2407
        %v3896 = vunpack.c.h.b16 %v2407
        %v3897 = vunpack.c.l.b16 %v2408
        %v3898 = vunpack.c.h.b16 %v2408
        %v3899 = vunpack.c.l.b16 %v2409
        %v3900 = vunpack.c.h.b16 %v2409
        %v3901 = vunpack.c.l.b16 %v2410
        %v3902 = vunpack.c.h.b16 %v2410
        %v3903 = vunpack.c.l.b16 %v2411
        %v3904 = vunpack.c.h.b16 %v2411
        %v3905 = vunpack.c.l.b16 %v2412
        %v3906 = vunpack.c.h.b16 %v2412
        %v3907 = vunpack.c.l.b16 %v2413
        %v3908 = vunpack.c.h.b16 %v2413
        %v3909 = vunpack.c.l.b16 %v2414
        %v3910 = vunpack.c.h.b16 %v2414
        %v3911 = vunpack.c.l.b16 %v2415
        %v3912 = vunpack.c.h.b16 %v2415
        %v3913 = vunpack.c.l.b16 %v2416
        %v3914 = vunpack.c.h.b16 %v2416
        %v3915 = vunpack.c.l.b16 %v2417
        %v3916 = vunpack.c.h.b16 %v2417
        %v3917 = vunpack.c.l.b16 %v2418
        %v3918 = vunpack.c.h.b16 %v2418
        %v3919 = vunpack.c.l.b16 %v2419
        %v3920 = vunpack.c.h.b16 %v2419
        %v3921 = vunpack.c.l.b16 %v2420
        %v3922 = vunpack.c.h.b16 %v2420
        %v3923 = vunpack.c.l.b16 %v2421
        %v3924 = vunpack.c.h.b16 %v2421
        %v3925 = vunpack.c.l.b16 %v2422
        %v3926 = vunpack.c.h.b16 %v2422
        %v3927 = vunpack.c.l.b16 %v2423
        %v3928 = vunpack.c.h.b16 %v2423
        %v3929 = vunpack.c.l.b16 %v2424
        %v3930 = vunpack.c.h.b16 %v2424
        %v3931 = vunpack.c.l.b16 %v2425
        %v3932 = vunpack.c.h.b16 %v2425
        %v3933 = vunpack.c.l.b16 %v2426
        %v3934 = vunpack.c.h.b16 %v2426
        %v3935 = vunpack.c.l.b16 %v2427
        %v3936 = vunpack.c.h.b16 %v2427
        %v3937 = vunpack.c.l.b16 %v2428
        %v3938 = vunpack.c.h.b16 %v2428
        %v3939 = vunpack.c.l.b16 %v2429
        %v3940 = vunpack.c.h.b16 %v2429
        %v3941 = vunpack.c.l.b16 %v2430
        %v3942 = vunpack.c.h.b16 %v2430
        %v3943 = vunpack.c.l.b16 %v2431
        %v3944 = vunpack.c.h.b16 %v2431
        %v3945 = vunpack.c.l.b16 %v2432
        %v3946 = vunpack.c.h.b16 %v2432
        %v3947 = vunpack.c.l.b16 %v2433
        %v3948 = vunpack.c.h.b16 %v2433
        %v3949 = vunpack.c.l.b16 %v2434
        %v3950 = vunpack.c.h.b16 %v2434
        %v3951 = vunpack.c.l.b16 %v2435
        %v3952 = vunpack.c.h.b16 %v2435
        %v3953 = vunpack.c.l.b16 %v2436
        %v3954 = vunpack.c.h.b16 %v2436
        %v3955 = vunpack.c.l.b16 %v2437
        %v3956 = vunpack.c.h.b16 %v2437
        %v3957 = vunpack.c.l.b16 %v2438
        %v3958 = vunpack.c.h.b16 %v2438
        %v3959 = vunpack.c.l.b16 %v2439
        %v3960 = vunpack.c.h.b16 %v2439
        %v3961 = vunpack.c.l.b16 %v2440
        %v3962 = vunpack.c.h.b16 %v2440
        %v3963 = vunpack.c.l.b16 %v2441
        %v3964 = vunpack.c.h.b16 %v2441
        %v3965 = vunpack.c.l.b16 %v2442
        %v3966 = vunpack.c.h.b16 %v2442
        %v3967 = vunpack.c.l.b16 %v2443
        %v3968 = vunpack.c.h.b16 %v2443
        %v3969 = vunpack.c.l.b16 %v2444
        %v3970 = vunpack.c.h.b16 %v2444
        %v3971 = vunpack.c.l.b16 %v2445
        %v3972 = vunpack.c.h.b16 %v2445
        %v3973 = vunpack.c.l.b16 %v2446
        %v3974 = vunpack.c.h.b16 %v2446
        %v3975 = vunpack.c.l.b16 %v2447
        %v3976 = vunpack.c.h.b16 %v2447
        %v3977 = vunpack.c.l.b16 %v2448
        %v3978 = vunpack.c.h.b16 %v2448
        %v3979 = vunpack.c.l.b16 %v2449
        %v3980 = vunpack.c.h.b16 %v2449
        %v3981 = vunpack.c.l.b16 %v2450
        %v3982 = vunpack.c.h.b16 %v2450
        %v3983 = vunpack.c.l.b16 %v2451
        %v3984 = vunpack.c.h.b16 %v2451
        %v3985 = vunpack.c.l.b16 %v2452
        %v3986 = vunpack.c.h.b16 %v2452
        %v3987 = vunpack.c.l.b16 %v2453
        %v3988 = vunpack.c.h.b16 %v2453
        %v3989 = vunpack.c.l.b16 %v2454
        %v3990 = vunpack.c.h.b16 %v2454
        %v3991 = vunpack.c.l.b16 %v2455
        %v3992 = vunpack.c.h.b16 %v2455
        %v3993 = vunpack.c.l.b16 %v2456
        %v3994 = vunpack.c.h.b16 %v2456
        %v3995 = vunpack.c.l.b16 %v2457
        %v3996 = vunpack.c.h.b16 %v2457
        %v3997 = vunpack.c.l.b16 %v2458
        %v3998 = vunpack.c.h.b16 %v2458
        %v3999 = vunpack.c.l.b16 %v2459
        %v4000 = vunpack.c.h.b16 %v2459
        %v4001 = vunpack.c.l.b16 %v2460
        %v4002 = vunpack.c.h.b16 %v2460
        %v4003 = vpack.c.b16 %v3011, %v3003
        %v4004 = vpack.c.b16 %v3012, %v3004
        %v4005 = vpack.c.b16 %v3013, %v3005
        %v4006 = vpack.c.b16 %v3014, %v3006
        %v4007 = vpack.c.b16 %v3015, %v3007
        %v4008 = vpack.c.b16 %v3016, %v3008
        %v4009 = vpack.c.b16 %v3017, %v3009
        %v4010 = vpack.c.b16 %v3018, %v3010
        %v4011 = vpack.c.b16 %v3027, %v3019
        %v4012 = vpack.c.b16 %v3028, %v3020
        %v4013 = vpack.c.b16 %v3029, %v3021
        %v4014 = vpack.c.b16 %v3030, %v3022
        %v4015 = vpack.c.b16 %v3031, %v3023
        %v4016 = vpack.c.b16 %v3032, %v3024
        %v4017 = vpack.c.b16 %v3033, %v3025
        %v4018 = vpack.c.b16 %v3034, %v3026
        %v4019 = vpack.c.b16 %v3043, %v3035
        %v4020 = vpack.c.b16 %v3044, %v3036
        %v4021 = vpack.c.b16 %v3045, %v3037
        %v4022 = vpack.c.b16 %v3046, %v3038
        %v4023 = vpack.c.b16 %v3047, %v3039
        %v4024 = vpack.c.b16 %v3048, %v3040
        %v4025 = vpack.c.b16 %v3049, %v3041
        %v4026 = vpack.c.b16 %v3050, %v3042
        %v4027 = vpack.c.b16 %v3059, %v3051
        %v4028 = vpack.c.b16 %v3060, %v3052
        %v4029 = vpack.c.b16 %v3061, %v3053
        %v4030 = vpack.c.b16 %v3062, %v3054
        %v4031 = vpack.c.b16 %v3063, %v3055
        %v4032 = vpack.c.b16 %v3064, %v3056
        %v4033 = vpack.c.b16 %v3065, %v3057
        %v4034 = vpack.c.b16 %v3066, %v3058
        %v4035 = vpack.c.b16 %v3075, %v3067
        %v4036 = vpack.c.b16 %v3076, %v3068
        %v4037 = vpack.c.b16 %v3077, %v3069
        %v4038 = vpack.c.b16 %v3078, %v3070
        %v4039 = vpack.c.b16 %v3079, %v3071
        %v4040 = vpack.c.b16 %v3080, %v3072
        %v4041 = vpack.c.b16 %v3081, %v3073
        %v4042 = vpack.c.b16 %v3082, %v3074
        %v4043 = vpack.c.b16 %v3091, %v3083
        %v4044 = vpack.c.b16 %v3092, %v3084
        %v4045 = vpack.c.b16 %v3093, %v3085
        %v4046 = vpack.c.b16 %v3094, %v3086
        %v4047 = vpack.c.b16 %v3095, %v3087
        %v4048 = vpack.c.b16 %v3096, %v3088
        %v4049 = vpack.c.b16 %v3097, %v3089
        %v4050 = vpack.c.b16 %v3098, %v3090
        %v4051 = vpack.c.b16 %v3107, %v3099
        %v4052 = vpack.c.b16 %v3108, %v3100
        %v4053 = vpack.c.b16 %v3109, %v3101
        %v4054 = vpack.c.b16 %v3110, %v3102
        %v4055 = vpack.c.b16 %v3111, %v3103
        %v4056 = vpack.c.b16 %v3112, %v3104
        %v4057 = vpack.c.b16 %v3113, %v3105
        %v4058 = vpack.c.b16 %v3114, %v3106
        %v4059 = vpack.c.b16 %v3123, %v3115
        %v4060 = vpack.c.b16 %v3124, %v3116
        %v4061 = vpack.c.b16 %v3125, %v3117
        %v4062 = vpack.c.b16 %v3126, %v3118
        %v4063 = vpack.c.b16 %v3127, %v3119
        %v4064 = vpack.c.b16 %v3128, %v3120
        %v4065 = vpack.c.b16 %v3129, %v3121
        %v4066 = vpack.c.b16 %v3130, %v3122
        %v4067 = vpack.c.b16 %v3139, %v3131
        %v4068 = vpack.c.b16 %v3140, %v3132
        %v4069 = vpack.c.b16 %v3141, %v3133
        %v4070 = vpack.c.b16 %v3142, %v3134
        %v4071 = vpack.c.b16 %v3143, %v3135
        %v4072 = vpack.c.b16 %v3144, %v3136
        %v4073 = vpack.c.b16 %v3145, %v3137
        %v4074 = vpack.c.b16 %v3146, %v3138
        %v4075 = vpack.c.b16 %v3155, %v3147
        %v4076 = vpack.c.b16 %v3156, %v3148
        %v4077 = vpack.c.b16 %v3157, %v3149
        %v4078 = vpack.c.b16 %v3158, %v3150
        %v4079 = vpack.c.b16 %v3159, %v3151
        %v4080 = vpack.c.b16 %v3160, %v3152
        %v4081 = vpack.c.b16 %v3161, %v3153
        %v4082 = vpack.c.b16 %v3162, %v3154
        %v4083 = vpack.c.b16 %v3171, %v3163
        %v4084 = vpack.c.b16 %v3172, %v3164
        %v4085 = vpack.c.b16 %v3173, %v3165
        %v4086 = vpack.c.b16 %v3174, %v3166
        %v4087 = vpack.c.b16 %v3175, %v3167
        %v4088 = vpack.c.b16 %v3176, %v3168
        %v4089 = vpack.c.b16 %v3177, %v3169
        %v4090 = vpack.c.b16 %v3178, %v3170
        %v4091 = vpack.c.b16 %v3187, %v3179
        %v4092 = vpack.c.b16 %v3188, %v3180
        %v4093 = vpack.c.b16 %v3189, %v3181
        %v4094 = vpack.c.b16 %v3190, %v3182
        %v4095 = vpack.c.b16 %v3191, %v3183
        %v4096 = vpack.c.b16 %v3192, %v3184
        %v4097 = vpack.c.b16 %v3193, %v3185
        %v4098 = vpack.c.b16 %v3194, %v3186
        %v4099 = vpack.c.b16 %v3203, %v3195
        %v4100 = vpack.c.b16 %v3204, %v3196
        %v4101 = vpack.c.b16 %v3205, %v3197
        %v4102 = vpack.c.b16 %v3206, %v3198
        %v4103 = vpack.c.b16 %v3207, %v3199
        %v4104 = vpack.c.b16 %v3208, %v3200
        %v4105 = vpack.c.b16 %v3209, %v3201
        %v4106 = vpack.c.b16 %v3210, %v3202
        %v4107 = vpack.c.b16 %v3219, %v3211
        %v4108 = vpack.c.b16 %v3220, %v3212
        %v4109 = vpack.c.b16 %v3221, %v3213
        %v4110 = vpack.c.b16 %v3222, %v3214
        %v4111 = vpack.c.b16 %v3223, %v3215
        %v4112 = vpack.c.b16 %v3224, %v3216
        %v4113 = vpack.c.b16 %v3225, %v3217
        %v4114 = vpack.c.b16 %v3226, %v3218
        %v4115 = vpack.c.b16 %v3235, %v3227
        %v4116 = vpack.c.b16 %v3236, %v3228
        %v4117 = vpack.c.b16 %v3237, %v3229
        %v4118 = vpack.c.b16 %v3238, %v3230
        %v4119 = vpack.c.b16 %v3239, %v3231
        %v4120 = vpack.c.b16 %v3240, %v3232
        %v4121 = vpack.c.b16 %v3241, %v3233
        %v4122 = vpack.c.b16 %v3242, %v3234
        %v4123 = vpack.c.b16 %v3251, %v3243
        %v4124 = vpack.c.b16 %v3252, %v3244
        %v4125 = vpack.c.b16 %v3253, %v3245
        %v4126 = vpack.c.b16 %v3254, %v3246
        %v4127 = vpack.c.b16 %v3255, %v3247
        %v4128 = vpack.c.b16 %v3256, %v3248
        %v4129 = vpack.c.b16 %v3257, %v3249
        %v4130 = vpack.c.b16 %v3258, %v3250
        %v4131 = vpack.c.b16 %v3267, %v3259
        %v4132 = vpack.c.b16 %v3268, %v3260
        %v4133 = vpack.c.b16 %v3269, %v3261
        %v4134 = vpack.c.b16 %v3270, %v3262
        %v4135 = vpack.c.b16 %v3271, %v3263
        %v4136 = vpack.c.b16 %v3272, %v3264
        %v4137 = vpack.c.b16 %v3273, %v3265
        %v4138 = vpack.c.b16 %v3274, %v3266
        %v4139 = vpack.c.b16 %v3283, %v3275
        %v4140 = vpack.c.b16 %v3284, %v3276
        %v4141 = vpack.c.b16 %v3285, %v3277
        %v4142 = vpack.c.b16 %v3286, %v3278
        %v4143 = vpack.c.b16 %v3287, %v3279
        %v4144 = vpack.c.b16 %v3288, %v3280
        %v4145 = vpack.c.b16 %v3289, %v3281
        %v4146 = vpack.c.b16 %v3290, %v3282
        %v4147 = vpack.c.b16 %v3299, %v3291
        %v4148 = vpack.c.b16 %v3300, %v3292
        %v4149 = vpack.c.b16 %v3301, %v3293
        %v4150 = vpack.c.b16 %v3302, %v3294
        %v4151 = vpack.c.b16 %v3303, %v3295
        %v4152 = vpack.c.b16 %v3304, %v3296
        %v4153 = vpack.c.b16 %v3305, %v3297
        %v4154 = vpack.c.b16 %v3306, %v3298
        %v4155 = vpack.c.b16 %v3315, %v3307
        %v4156 = vpack.c.b16 %v3316, %v3308
        %v4157 = vpack.c.b16 %v3317, %v3309
        %v4158 = vpack.c.b16 %v3318, %v3310
        %v4159 = vpack.c.b16 %v3319, %v3311
        %v4160 = vpack.c.b16 %v3320, %v3312
        %v4161 = vpack.c.b16 %v3321, %v3313
        %v4162 = vpack.c.b16 %v3322, %v3314
        %v4163 = vpack.c.b16 %v3331, %v3323
        %v4164 = vpack.c.b16 %v3332, %v3324
        %v4165 = vpack.c.b16 %v3333, %v3325
        %v4166 = vpack.c.b16 %v3334, %v3326
        %v4167 = vpack.c.b16 %v3335, %v3327
        %v4168 = vpack.c.b16 %v3336, %v3328
        %v4169 = vpack.c.b16 %v3337, %v3329
        %v4170 = vpack.c.b16 %v3338, %v3330
        %v4171 = vpack.c.b16 %v3347, %v3339
        %v4172 = vpack.c.b16 %v3348, %v3340
        %v4173 = vpack.c.b16 %v3349, %v3341
        %v4174 = vpack.c.b16 %v3350, %v3342
        %v4175 = vpack.c.b16 %v3351, %v3343
        %v4176 = vpack.c.b16 %v3352, %v3344
        %v4177 = vpack.c.b16 %v3353, %v3345
        %v4178 = vpack.c.b16 %v3354, %v3346
        %v4179 = vpack.c.b16 %v3363, %v3355
        %v4180 = vpack.c.b16 %v3364, %v3356
        %v4181 = vpack.c.b16 %v3365, %v3357
        %v4182 = vpack.c.b16 %v3366, %v3358
        %v4183 = vpack.c.b16 %v3367, %v3359
        %v4184 = vpack.c.b16 %v3368, %v3360
        %v4185 = vpack.c.b16 %v3369, %v3361
        %v4186 = vpack.c.b16 %v3370, %v3362
        %v4187 = vpack.c.b16 %v3379, %v3371
        %v4188 = vpack.c.b16 %v3380, %v3372
        %v4189 = vpack.c.b16 %v3381, %v3373
        %v4190 = vpack.c.b16 %v3382, %v3374
        %v4191 = vpack.c.b16 %v3383, %v3375
        %v4192 = vpack.c.b16 %v3384, %v3376
        %v4193 = vpack.c.b16 %v3385, %v3377
        %v4194 = vpack.c.b16 %v3386, %v3378
        %v4195 = vpack.c.b16 %v3395, %v3387
        %v4196 = vpack.c.b16 %v3396, %v3388
        %v4197 = vpack.c.b16 %v3397, %v3389
        %v4198 = vpack.c.b16 %v3398, %v3390
        %v4199 = vpack.c.b16 %v3399, %v3391
        %v4200 = vpack.c.b16 %v3400, %v3392
        %v4201 = vpack.c.b16 %v3401, %v3393
        %v4202 = vpack.c.b16 %v3402, %v3394
        %v4203 = vpack.c.b16 %v3411, %v3403
        %v4204 = vpack.c.b16 %v3412, %v3404
        %v4205 = vpack.c.b16 %v3413, %v3405
        %v4206 = vpack.c.b16 %v3414, %v3406
        %v4207 = vpack.c.b16 %v3415, %v3407
        %v4208 = vpack.c.b16 %v3416, %v3408
        %v4209 = vpack.c.b16 %v3417, %v3409
        %v4210 = vpack.c.b16 %v3418, %v3410
        %v4211 = vpack.c.b16 %v3427, %v3419
        %v4212 = vpack.c.b16 %v3428, %v3420
        %v4213 = vpack.c.b16 %v3429, %v3421
        %v4214 = vpack.c.b16 %v3430, %v3422
        %v4215 = vpack.c.b16 %v3431, %v3423
        %v4216 = vpack.c.b16 %v3432, %v3424
        %v4217 = vpack.c.b16 %v3433, %v3425
        %v4218 = vpack.c.b16 %v3434, %v3426
        %v4219 = vpack.c.b16 %v3443, %v3435
        %v4220 = vpack.c.b16 %v3444, %v3436
        %v4221 = vpack.c.b16 %v3445, %v3437
        %v4222 = vpack.c.b16 %v3446, %v3438
        %v4223 = vpack.c.b16 %v3447, %v3439
        %v4224 = vpack.c.b16 %v3448, %v3440
        %v4225 = vpack.c.b16 %v3449, %v3441
        %v4226 = vpack.c.b16 %v3450, %v3442
        %v4227 = vpack.c.b16 %v3459, %v3451
        %v4228 = vpack.c.b16 %v3460, %v3452
        %v4229 = vpack.c.b16 %v3461, %v3453
        %v4230 = vpack.c.b16 %v3462, %v3454
        %v4231 = vpack.c.b16 %v3463, %v3455
        %v4232 = vpack.c.b16 %v3464, %v3456
        %v4233 = vpack.c.b16 %v3465, %v3457
        %v4234 = vpack.c.b16 %v3466, %v3458
        %v4235 = vpack.c.b16 %v3475, %v3467
        %v4236 = vpack.c.b16 %v3476, %v3468
        %v4237 = vpack.c.b16 %v3477, %v3469
        %v4238 = vpack.c.b16 %v3478, %v3470
        %v4239 = vpack.c.b16 %v3479, %v3471
        %v4240 = vpack.c.b16 %v3480, %v3472
        %v4241 = vpack.c.b16 %v3481, %v3473
        %v4242 = vpack.c.b16 %v3482, %v3474
        %v4243 = vpack.c.b16 %v3491, %v3483
        %v4244 = vpack.c.b16 %v3492, %v3484
        %v4245 = vpack.c.b16 %v3493, %v3485
        %v4246 = vpack.c.b16 %v3494, %v3486
        %v4247 = vpack.c.b16 %v3495, %v3487
        %v4248 = vpack.c.b16 %v3496, %v3488
        %v4249 = vpack.c.b16 %v3497, %v3489
        %v4250 = vpack.c.b16 %v3498, %v3490
        %v4251 = vpack.c.b16 %v3507, %v3499
        %v4252 = vpack.c.b16 %v3508, %v3500
        %v4253 = vpack.c.b16 %v3509, %v3501
        %v4254 = vpack.c.b16 %v3510, %v3502
        %v4255 = vpack.c.b16 %v3511, %v3503
        %v4256 = vpack.c.b16 %v3512, %v3504
        %v4257 = vpack.c.b16 %v3513, %v3505
        %v4258 = vpack.c.b16 %v3514, %v3506
        %v4259 = vpack.c.b16 %v3523, %v3515
        %v4260 = vpack.c.b16 %v3524, %v3516
        %v4261 = vpack.c.b16 %v3525, %v3517
        %v4262 = vpack.c.b16 %v3526, %v3518
        %v4263 = vpack.c.b16 %v3527, %v3519
        %v4264 = vpack.c.b16 %v3528, %v3520
        %v4265 = vpack.c.b16 %v3529, %v3521
        %v4266 = vpack.c.b16 %v3530, %v3522
        %v4267 = vpack.c.b16 %v3539, %v3531
        %v4268 = vpack.c.b16 %v3540, %v3532
        %v4269 = vpack.c.b16 %v3541, %v3533
        %v4270 = vpack.c.b16 %v3542, %v3534
        %v4271 = vpack.c.b16 %v3543, %v3535
        %v4272 = vpack.c.b16 %v3544, %v3536
        %v4273 = vpack.c.b16 %v3545, %v3537
        %v4274 = vpack.c.b16 %v3546, %v3538
        %v4275 = vpack.c.b16 %v3555, %v3547
        %v4276 = vpack.c.b16 %v3556, %v3548
        %v4277 = vpack.c.b16 %v3557, %v3549
        %v4278 = vpack.c.b16 %v3558, %v3550
        %v4279 = vpack.c.b16 %v3559, %v3551
        %v4280 = vpack.c.b16 %v3560, %v3552
        %v4281 = vpack.c.b16 %v3561, %v3553
        %v4282 = vpack.c.b16 %v3562, %v3554
        %v4283 = vpack.c.b16 %v3571, %v3563
        %v4284 = vpack.c.b16 %v3572, %v3564
        %v4285 = vpack.c.b16 %v3573, %v3565
        %v4286 = vpack.c.b16 %v3574, %v3566
        %v4287 = vpack.c.b16 %v3575, %v3567
        %v4288 = vpack.c.b16 %v3576, %v3568
        %v4289 = vpack.c.b16 %v3577, %v3569
        %v4290 = vpack.c.b16 %v3578, %v3570
        %v4291 = vpack.c.b16 %v3587, %v3579
        %v4292 = vpack.c.b16 %v3588, %v3580
        %v4293 = vpack.c.b16 %v3589, %v3581
        %v4294 = vpack.c.b16 %v3590, %v3582
        %v4295 = vpack.c.b16 %v3591, %v3583
        %v4296 = vpack.c.b16 %v3592, %v3584
        %v4297 = vpack.c.b16 %v3593, %v3585
        %v4298 = vpack.c.b16 %v3594, %v3586
        %v4299 = vpack.c.b16 %v3603, %v3595
        %v4300 = vpack.c.b16 %v3604, %v3596
        %v4301 = vpack.c.b16 %v3605, %v3597
        %v4302 = vpack.c.b16 %v3606, %v3598
        %v4303 = vpack.c.b16 %v3607, %v3599
        %v4304 = vpack.c.b16 %v3608, %v3600
        %v4305 = vpack.c.b16 %v3609, %v3601
        %v4306 = vpack.c.b16 %v3610, %v3602
        %v4307 = vpack.c.b16 %v3619, %v3611
        %v4308 = vpack.c.b16 %v3620, %v3612
        %v4309 = vpack.c.b16 %v3621, %v3613
        %v4310 = vpack.c.b16 %v3622, %v3614
        %v4311 = vpack.c.b16 %v3623, %v3615
        %v4312 = vpack.c.b16 %v3624, %v3616
        %v4313 = vpack.c.b16 %v3625, %v3617
        %v4314 = vpack.c.b16 %v3626, %v3618
        %v4315 = vpack.c.b16 %v3635, %v3627
        %v4316 = vpack.c.b16 %v3636, %v3628
        %v4317 = vpack.c.b16 %v3637, %v3629
        %v4318 = vpack.c.b16 %v3638, %v3630
        %v4319 = vpack.c.b16 %v3639, %v3631
        %v4320 = vpack.c.b16 %v3640, %v3632
        %v4321 = vpack.c.b16 %v3641, %v3633
        %v4322 = vpack.c.b16 %v3642, %v3634
        %v4323 = vpack.c.b16 %v3651, %v3643
        %v4324 = vpack.c.b16 %v3652, %v3644
        %v4325 = vpack.c.b16 %v3653, %v3645
        %v4326 = vpack.c.b16 %v3654, %v3646
        %v4327 = vpack.c.b16 %v3655, %v3647
        %v4328 = vpack.c.b16 %v3656, %v3648
        %v4329 = vpack.c.b16 %v3657, %v3649
        %v4330 = vpack.c.b16 %v3658, %v3650
        %v4331 = vpack.c.b16 %v3667, %v3659
        %v4332 = vpack.c.b16 %v3668, %v3660
        %v4333 = vpack.c.b16 %v3669, %v3661
        %v4334 = vpack.c.b16 %v3670, %v3662
        %v4335 = vpack.c.b16 %v3671, %v3663
        %v4336 = vpack.c.b16 %v3672, %v3664
        %v4337 = vpack.c.b16 %v3673, %v3665
        %v4338 = vpack.c.b16 %v3674, %v3666
        %v4339 = vpack.c.b16 %v3683, %v3675
        %v4340 = vpack.c.b16 %v3684, %v3676
        %v4341 = vpack.c.b16 %v3685, %v3677
        %v4342 = vpack.c.b16 %v3686, %v3678
        %v4343 = vpack.c.b16 %v3687, %v3679
        %v4344 = vpack.c.b16 %v3688, %v3680
        %v4345 = vpack.c.b16 %v3689, %v3681
        %v4346 = vpack.c.b16 %v3690, %v3682
        %v4347 = vpack.c.b16 %v3699, %v3691
        %v4348 = vpack.c.b16 %v3700, %v3692
        %v4349 = vpack.c.b16 %v3701, %v3693
        %v4350 = vpack.c.b16 %v3702, %v3694
        %v4351 = vpack.c.b16 %v3703, %v3695
        %v4352 = vpack.c.b16 %v3704, %v3696
        %v4353 = vpack.c.b16 %v3705, %v3697
        %v4354 = vpack.c.b16 %v3706, %v3698
        %v4355 = vpack.c.b16 %v3715, %v3707
        %v4356 = vpack.c.b16 %v3716, %v3708
        %v4357 = vpack.c.b16 %v3717, %v3709
        %v4358 = vpack.c.b16 %v3718, %v3710
        %v4359 = vpack.c.b16 %v3719, %v3711
        %v4360 = vpack.c.b16 %v3720, %v3712
        %v4361 = vpack.c.b16 %v3721, %v3713
        %v4362 = vpack.c.b16 %v3722, %v3714
        %v4363 = vpack.c.b16 %v3731, %v3723
        %v4364 = vpack.c.b16 %v3732, %v3724
        %v4365 = vpack.c.b16 %v3733, %v3725
        %v4366 = vpack.c.b16 %v3734, %v3726
        %v4367 = vpack.c.b16 %v3735, %v3727
        %v4368 = vpack.c.b16 %v3736, %v3728
        %v4369 = vpack.c.b16 %v3737, %v3729
        %v4370 = vpack.c.b16 %v3738, %v3730
        %v4371 = vpack.c.b16 %v3747, %v3739
        %v4372 = vpack.c.b16 %v3748, %v3740
        %v4373 = vpack.c.b16 %v3749, %v3741
        %v4374 = vpack.c.b16 %v3750, %v3742
        %v4375 = vpack.c.b16 %v3751, %v3743
        %v4376 = vpack.c.b16 %v3752, %v3744
        %v4377 = vpack.c.b16 %v3753, %v3745
        %v4378 = vpack.c.b16 %v3754, %v3746
        %v4379 = vpack.c.b16 %v3763, %v3755
        %v4380 = vpack.c.b16 %v3764, %v3756
        %v4381 = vpack.c.b16 %v3765, %v3757
        %v4382 = vpack.c.b16 %v3766, %v3758
        %v4383 = vpack.c.b16 %v3767, %v3759
        %v4384 = vpack.c.b16 %v3768, %v3760
        %v4385 = vpack.c.b16 %v3769, %v3761
        %v4386 = vpack.c.b16 %v3770, %v3762
        %v4387 = vpack.c.b16 %v3779, %v3771
        %v4388 = vpack.c.b16 %v3780, %v3772
        %v4389 = vpack.c.b16 %v3781, %v3773
        %v4390 = vpack.c.b16 %v3782, %v3774
        %v4391 = vpack.c.b16 %v3783, %v3775
        %v4392 = vpack.c.b16 %v3784, %v3776
        %v4393 = vpack.c.b16 %v3785, %v3777
        %v4394 = vpack.c.b16 %v3786, %v3778
        %v4395 = vpack.c.b16 %v3795, %v3787
        %v4396 = vpack.c.b16 %v3796, %v3788
        %v4397 = vpack.c.b16 %v3797, %v3789
        %v4398 = vpack.c.b16 %v3798, %v3790
        %v4399 = vpack.c.b16 %v3799, %v3791
        %v4400 = vpack.c.b16 %v3800, %v3792
        %v4401 = vpack.c.b16 %v3801, %v3793
        %v4402 = vpack.c.b16 %v3802, %v3794
        %v4403 = vpack.c.b16 %v3811, %v3803
        %v4404 = vpack.c.b16 %v3812, %v3804
        %v4405 = vpack.c.b16 %v3813, %v3805
        %v4406 = vpack.c.b16 %v3814, %v3806
        %v4407 = vpack.c.b16 %v3815, %v3807
        %v4408 = vpack.c.b16 %v3816, %v3808
        %v4409 = vpack.c.b16 %v3817, %v3809
        %v4410 = vpack.c.b16 %v3818, %v3810
        %v4411 = vpack.c.b16 %v3827, %v3819
        %v4412 = vpack.c.b16 %v3828, %v3820
        %v4413 = vpack.c.b16 %v3829, %v3821
        %v4414 = vpack.c.b16 %v3830, %v3822
        %v4415 = vpack.c.b16 %v3831, %v3823
        %v4416 = vpack.c.b16 %v3832, %v3824
        %v4417 = vpack.c.b16 %v3833, %v3825
        %v4418 = vpack.c.b16 %v3834, %v3826
        %v4419 = vpack.c.b16 %v3843, %v3835
        %v4420 = vpack.c.b16 %v3844, %v3836
        %v4421 = vpack.c.b16 %v3845, %v3837
        %v4422 = vpack.c.b16 %v3846, %v3838
        %v4423 = vpack.c.b16 %v3847, %v3839
        %v4424 = vpack.c.b16 %v3848, %v3840
        %v4425 = vpack.c.b16 %v3849, %v3841
        %v4426 = vpack.c.b16 %v3850, %v3842
        %v4427 = vpack.c.b16 %v3859, %v3851
        %v4428 = vpack.c.b16 %v3860, %v3852
        %v4429 = vpack.c.b16 %v3861, %v3853
        %v4430 = vpack.c.b16 %v3862, %v3854
        %v4431 = vpack.c.b16 %v3863, %v3855
        %v4432 = vpack.c.b16 %v3864, %v3856
        %v4433 = vpack.c.b16 %v3865, %v3857
        %v4434 = vpack.c.b16 %v3866, %v3858
        %v4435 = vpack.c.b16 %v3875, %v3867
        %v4436 = vpack.c.b16 %v3876, %v3868
        %v4437 = vpack.c.b16 %v3877, %v3869
        %v4438 = vpack.c.b16 %v3878, %v3870
        %v4439 = vpack.c.b16 %v3879, %v3871
        %v4440 = vpack.c.b16 %v3880, %v3872
        %v4441 = vpack.c.b16 %v3881, %v3873
        %v4442 = vpack.c.b16 %v3882, %v3874
        %v4443 = vpack.c.b16 %v3891, %v3883
        %v4444 = vpack.c.b16 %v3892, %v3884
        %v4445 = vpack.c.b16 %v3893, %v3885
        %v4446 = vpack.c.b16 %v3894, %v3886
        %v4447 = vpack.c.b16 %v3895, %v3887
        %v4448 = vpack.c.b16 %v3896, %v3888
        %v4449 = vpack.c.b16 %v3897, %v3889
        %v4450 = vpack.c.b16 %v3898, %v3890
        %v4451 = vpack.c.b16 %v3907, %v3899
        %v4452 = vpack.c.b16 %v3908, %v3900
        %v4453 = vpack.c.b16 %v3909, %v3901
        %v4454 = vpack.c.b16 %v3910, %v3902
        %v4455 = vpack.c.b16 %v3911, %v3903
        %v4456 = vpack.c.b16 %v3912, %v3904
        %v4457 = vpack.c.b16 %v3913, %v3905
        %v4458 = vpack.c.b16 %v3914, %v3906
        %v4459 = vpack.c.b16 %v3923, %v3915
        %v4460 = vpack.c.b16 %v3924, %v3916
        %v4461 = vpack.c.b16 %v3925, %v3917
        %v4462 = vpack.c.b16 %v3926, %v3918
        %v4463 = vpack.c.b16 %v3927, %v3919
        %v4464 = vpack.c.b16 %v3928, %v3920
        %v4465 = vpack.c.b16 %v3929, %v3921
        %v4466 = vpack.c.b16 %v3930, %v3922
        %v4467 = vpack.c.b16 %v3939, %v3931
        %v4468 = vpack.c.b16 %v3940, %v3932
        %v4469 = vpack.c.b16 %v3941, %v3933
        %v4470 = vpack.c.b16 %v3942, %v3934
        %v4471 = vpack.c.b16 %v3943, %v3935
        %v4472 = vpack.c.b16 %v3944, %v3936
        %v4473 = vpack.c.b16 %v3945, %v3937
        %v4474 = vpack.c.b16 %v3946, %v3938
        %v4475 = vpack.c.b16 %v3955, %v3947
        %v4476 = vpack.c.b16 %v3956, %v3948
        %v4477 = vpack.c.b16 %v3957, %v3949
        %v4478 = vpack.c.b16 %v3958, %v3950
        %v4479 = vpack.c.b16 %v3959, %v3951
        %v4480 = vpack.c.b16 %v3960, %v3952
        %v4481 = vpack.c.b16 %v3961, %v3953
        %v4482 = vpack.c.b16 %v3962, %v3954
        %v4483 = vpack.c.b16 %v3971, %v3963
        %v4484 = vpack.c.b16 %v3972, %v3964
        %v4485 = vpack.c.b16 %v3973, %v3965
        %v4486 = vpack.c.b16 %v3974, %v3966
        %v4487 = vpack.c.b16 %v3975, %v3967
        %v4488 = vpack.c.b16 %v3976, %v3968
        %v4489 = vpack.c.b16 %v3977, %v3969
        %v4490 = vpack.c.b16 %v3978, %v3970
        %v4491 = vpack.c.b16 %v3987, %v3979
        %v4492 = vpack.c.b16 %v3988, %v3980
        %v4493 = vpack.c.b16 %v3989, %v3981
        %v4494 = vpack.c.b16 %v3990, %v3982
        %v4495 = vpack.c.b16 %v3991, %v3983
        %v4496 = vpack.c.b16 %v3992, %v3984
        %v4497 = vpack.c.b16 %v3993, %v3985
        %v4498 = vpack.c.b16 %v3994, %v3986
        %v4499 = vpack.c.b16 %v3995, %v3995
        %v4500 = vpack.c.b16 %v3996, %v3996
        %v4501 = vpack.c.b16 %v3997, %v3997
        %v4502 = vpack.c.b16 %v3998, %v3998
        %v4503 = vpack.c.b16 %v3999, %v3999
        %v4504 = vpack.c.b16 %v4000, %v4000
        %v4505 = vpack.c.b16 %v4001, %v4001
        %v4506 = vpack.c.b16 %v4002, %v4002
        %vm5003 = vcmask 850944
        %v5005 = vsel %vm5003, %v1960, 0
        %vm5007 = vcmask 1043456
        %v5009 = vsel %vm5007, %v4499, 0
        %v5012 = vsel %vm5007, %v4500, 0
        %v5015 = vsel %vm5007, %v4501, 0
        %v5018 = vsel %vm5007, %v4502, 0
        %v5021 = vsel %vm5007, %v4503, 0
        %v5024 = vsel %vm5007, %v4504, 0
        %v5027 = vsel %vm5007, %v4505, 0
        %v5030 = vsel %vm5007, %v4506, 0
        %5032 = vmatprep.subr.bf16.mxu0 %v4004
        %5033 = vmatpush1.bf16.msra.mxu0 %v4003
        %5034 = vmatprep.subr.bf16.mxu0 %v4012
        %5035 = vmatpush1.bf16.msra.mxu0 %v4011
        %5036 = vmatprep.subr.bf16.mxu0 %v4020
        %5037 = vmatpush1.bf16.msra.mxu0 %v4019
        %5038 = vmatprep.subr.bf16.mxu0 %v4028
        %5039 = vmatpush1.bf16.msra.mxu0 %v4027
        %5040 = vmatprep.subr.bf16.mxu0 %v4036
        %5041 = vmatpush1.bf16.msra.mxu0 %v4035
        %5042 = vmatprep.subr.bf16.mxu0 %v4044
        %5043 = vmatpush1.bf16.msra.mxu0 %v4043
        %5044 = vmatprep.subr.bf16.mxu0 %v4052
        %5045 = vmatpush1.bf16.msra.mxu0 %v4051
        %5046 = vmatprep.subr.bf16.mxu0 %v4060
        %5047 = vmatpush1.bf16.msra.mxu0 %v4059
        %5048 = vmatprep.subr.bf16.mxu0 %v4068
        %5049 = vmatpush1.bf16.msra.mxu0 %v4067
        %5050 = vmatprep.subr.bf16.mxu0 %v4076
        %5051 = vmatpush1.bf16.msra.mxu0 %v4075
        %5052 = vmatprep.subr.bf16.mxu0 %v4084
        %5053 = vmatpush1.bf16.msra.mxu0 %v4083
        %5054 = vmatprep.subr.bf16.mxu0 %v4092
        %5055 = vmatpush1.bf16.msra.mxu0 %v4091
        %5056 = vmatprep.subr.bf16.mxu0 %v4100
        %5057 = vmatpush1.bf16.msra.mxu0 %v4099
        %5058 = vmatprep.subr.bf16.mxu0 %v4108
        %5059 = vmatpush1.bf16.msra.mxu0 %v4107
        %5060 = vmatprep.subr.bf16.mxu0 %v4116
        %5061 = vmatpush1.bf16.msra.mxu0 %v4115
        %5062 = vmatprep.subr.bf16.mxu0 %v4124
        %5063 = vmatpush1.bf16.msra.mxu0 %v4123
        %5064 = vmatprep.mubr.bf16.mxu0 %v1954
        %5065 = vmatmul.mubr.bf16.gmra.mrb[0].mxu0 %v1953
        %v5066 = vpop.f32.mrb[0].mxu0
        %v5067 = vadd.f32 %v2466, %v5066
        %v5068 = vpop.f32.mrb[0].mxu0
        %v5069 = vadd.f32 %v2470, %v5068
        %v5070 = vpop.f32.mrb[0].mxu0
        %v5071 = vpop.f32.mrb[0].mxu0
        %5072 = vdwg.mxu0
        %5073 = vmatprep.subr.bf16.mxu0 %v4132
        %5074 = vmatpush1.bf16.msra.mxu0 %v4131
        %5075 = vmatprep.subr.bf16.mxu0 %v4140
        %5076 = vmatpush1.bf16.msra.mxu0 %v4139
        %5077 = vmatprep.subr.bf16.mxu0 %v4148
        %5078 = vmatpush1.bf16.msra.mxu0 %v4147
        %5079 = vmatprep.subr.bf16.mxu0 %v4156
        %5080 = vmatpush1.bf16.msra.mxu0 %v4155
        %5081 = vmatprep.subr.bf16.mxu0 %v4164
        %5082 = vmatpush1.bf16.msra.mxu0 %v4163
        %5083 = vmatprep.subr.bf16.mxu0 %v4172
        %5084 = vmatpush1.bf16.msra.mxu0 %v4171
        %5085 = vmatprep.subr.bf16.mxu0 %v4180
        %5086 = vmatpush1.bf16.msra.mxu0 %v4179
        %5087 = vmatprep.subr.bf16.mxu0 %v4188
        %5088 = vmatpush1.bf16.msra.mxu0 %v4187
        %5089 = vmatprep.subr.bf16.mxu0 %v4196
        %5090 = vmatpush1.bf16.msra.mxu0 %v4195
        %5091 = vmatprep.subr.bf16.mxu0 %v4204
        %5092 = vmatpush1.bf16.msra.mxu0 %v4203
        %5093 = vmatprep.subr.bf16.mxu0 %v4212
        %5094 = vmatpush1.bf16.msra.mxu0 %v4211
        %5095 = vmatprep.subr.bf16.mxu0 %v4220
        %5096 = vmatpush1.bf16.msra.mxu0 %v4219
        %5097 = vmatprep.subr.bf16.mxu0 %v4228
        %5098 = vmatpush1.bf16.msra.mxu0 %v4227
        %5099 = vmatprep.subr.bf16.mxu0 %v4236
        %5100 = vmatpush1.bf16.msra.mxu0 %v4235
        %5101 = vmatprep.subr.bf16.mxu0 %v4244
        %5102 = vmatpush1.bf16.msra.mxu0 %v4243
        %5103 = vmatprep.subr.bf16.mxu0 %v4252
        %5104 = vmatpush1.bf16.msra.mxu0 %v4251
        %5105 = vmatprep.mubr.bf16.mxu0 %v1956
        %5106 = vmatmul.mubr.bf16.gmra.mrb[0].mxu0 %v1955
        %v5107 = vpop.f32.mrb[0].mxu0
        %v5108 = vadd.f32 %v5067, %v5107
        %v5109 = vpop.f32.mrb[0].mxu0
        %v5110 = vadd.f32 %v5069, %v5109
        %v5111 = vpop.f32.mrb[0].mxu0
        %v5112 = vpop.f32.mrb[0].mxu0
        %5113 = vdwg.mxu0
        %5114 = vmatprep.subr.bf16.mxu0 %v4260
        %5115 = vmatpush1.bf16.msra.mxu0 %v4259
        %5116 = vmatprep.subr.bf16.mxu0 %v4268
        %5117 = vmatpush1.bf16.msra.mxu0 %v4267
        %5118 = vmatprep.subr.bf16.mxu0 %v4276
        %5119 = vmatpush1.bf16.msra.mxu0 %v4275
        %5120 = vmatprep.subr.bf16.mxu0 %v4284
        %5121 = vmatpush1.bf16.msra.mxu0 %v4283
        %5122 = vmatprep.subr.bf16.mxu0 %v4292
        %5123 = vmatpush1.bf16.msra.mxu0 %v4291
        %5124 = vmatprep.subr.bf16.mxu0 %v4300
        %5125 = vmatpush1.bf16.msra.mxu0 %v4299
        %5126 = vmatprep.subr.bf16.mxu0 %v4308
        %5127 = vmatpush1.bf16.msra.mxu0 %v4307
        %5128 = vmatprep.subr.bf16.mxu0 %v4316
        %5129 = vmatpush1.bf16.msra.mxu0 %v4315
        %5130 = vmatprep.subr.bf16.mxu0 %v4324
        %5131 = vmatpush1.bf16.msra.mxu0 %v4323
        %5132 = vmatprep.subr.bf16.mxu0 %v4332
        %5133 = vmatpush1.bf16.msra.mxu0 %v4331
        %5134 = vmatprep.subr.bf16.mxu0 %v4340
        %5135 = vmatpush1.bf16.msra.mxu0 %v4339
        %5136 = vmatprep.subr.bf16.mxu0 %v4348
        %5137 = vmatpush1.bf16.msra.mxu0 %v4347
        %5138 = vmatprep.subr.bf16.mxu0 %v4356
        %5139 = vmatpush1.bf16.msra.mxu0 %v4355
        %5140 = vmatprep.subr.bf16.mxu0 %v4364
        %5141 = vmatpush1.bf16.msra.mxu0 %v4363
        %5142 = vmatprep.subr.bf16.mxu0 %v4372
        %5143 = vmatpush1.bf16.msra.mxu0 %v4371
        %5144 = vmatprep.subr.bf16.mxu0 %v4380
        %5145 = vmatpush1.bf16.msra.mxu0 %v4379
        %5146 = vmatprep.mubr.bf16.mxu0 %v1958
        %5147 = vmatmul.mubr.bf16.gmra.mrb[0].mxu0 %v1957
        %v5148 = vpop.f32.mrb[0].mxu0
        %v5149 = vadd.f32 %v5108, %v5148
        %v5150 = vpop.f32.mrb[0].mxu0
        %v5151 = vadd.f32 %v5110, %v5150
        %v5152 = vpop.f32.mrb[0].mxu0
        %v5153 = vpop.f32.mrb[0].mxu0
        %5154 = vdwg.mxu0
        %5155 = vmatprep.subr.bf16.mxu0 %v4388
        %5156 = vmatpush1.bf16.msra.mxu0 %v4387
        %5157 = vmatprep.subr.bf16.mxu0 %v4396
        %5158 = vmatpush1.bf16.msra.mxu0 %v4395
        %5159 = vmatprep.subr.bf16.mxu0 %v4404
        %5160 = vmatpush1.bf16.msra.mxu0 %v4403
        %5161 = vmatprep.subr.bf16.mxu0 %v4412
        %5162 = vmatpush1.bf16.msra.mxu0 %v4411
        %5163 = vmatprep.subr.bf16.mxu0 %v4420
        %5164 = vmatpush1.bf16.msra.mxu0 %v4419
        %5165 = vmatprep.subr.bf16.mxu0 %v4428
        %5166 = vmatpush1.bf16.msra.mxu0 %v4427
        %5167 = vmatprep.subr.bf16.mxu0 %v4436
        %5168 = vmatpush1.bf16.msra.mxu0 %v4435
        %5169 = vmatprep.subr.bf16.mxu0 %v4444
        %5170 = vmatpush1.bf16.msra.mxu0 %v4443
        %5171 = vmatprep.subr.bf16.mxu0 %v4452
        %5172 = vmatpush1.bf16.msra.mxu0 %v4451
        %5173 = vmatprep.subr.bf16.mxu0 %v4460
        %5174 = vmatpush1.bf16.msra.mxu0 %v4459
        %5175 = vmatprep.subr.bf16.mxu0 %v4468
        %5176 = vmatpush1.bf16.msra.mxu0 %v4467
        %5177 = vmatprep.subr.bf16.mxu0 %v4476
        %5178 = vmatpush1.bf16.msra.mxu0 %v4475
        %5179 = vmatprep.subr.bf16.mxu0 %v4484
        %5180 = vmatpush1.bf16.msra.mxu0 %v4483
        %5181 = vmatprep.subr.bf16.mxu0 %v4492
        %5182 = vmatpush1.bf16.msra.mxu0 %v4491
        %5183 = vmatprep.subr.bf16.mxu0 %v5012
        %5184 = vmatpush1.bf16.msra.mxu0 %v5009
        %5185 = vmatprep.subr.bf16.mxu0 0
        %5186 = vmatpush1.bf16.msra.mxu0 0
        %5187 = vmatprep.mubr.bf16.mxu0 %v5005
        %5188 = vmatmul.mubr.bf16.gmra.mrb[0].mxu0 %v1959
        %v5189 = vpop.f32.mrb[0].mxu0
        %v5190 = vadd.f32 %v5149, %v5189
        %v5191 = vpop.f32.mrb[0].mxu0
        %v5192 = vadd.f32 %v5151, %v5191
        %v5193 = vpop.f32.mrb[0].mxu0
        %v5194 = vpop.f32.mrb[0].mxu0
        %5195 = vdwg.mxu0
        %5196 = vmatprep.subr.bf16.mxu0 %v4006
        %5197 = vmatpush1.bf16.msra.mxu0 %v4005
        %5198 = vmatprep.subr.bf16.mxu0 %v4014
        %5199 = vmatpush1.bf16.msra.mxu0 %v4013
        %5200 = vmatprep.subr.bf16.mxu0 %v4022
        %5201 = vmatpush1.bf16.msra.mxu0 %v4021
        %5202 = vmatprep.subr.bf16.mxu0 %v4030
        %5203 = vmatpush1.bf16.msra.mxu0 %v4029
        %5204 = vmatprep.subr.bf16.mxu0 %v4038
        %5205 = vmatpush1.bf16.msra.mxu0 %v4037
        %5206 = vmatprep.subr.bf16.mxu0 %v4046
        %5207 = vmatpush1.bf16.msra.mxu0 %v4045
        %5208 = vmatprep.subr.bf16.mxu0 %v4054
        %5209 = vmatpush1.bf16.msra.mxu0 %v4053
        %5210 = vmatprep.subr.bf16.mxu0 %v4062
        %5211 = vmatpush1.bf16.msra.mxu0 %v4061
        %5212 = vmatprep.subr.bf16.mxu0 %v4070
        %5213 = vmatpush1.bf16.msra.mxu0 %v4069
        %5214 = vmatprep.subr.bf16.mxu0 %v4078
        %5215 = vmatpush1.bf16.msra.mxu0 %v4077
        %5216 = vmatprep.subr.bf16.mxu0 %v4086
        %5217 = vmatpush1.bf16.msra.mxu0 %v4085
        %5218 = vmatprep.subr.bf16.mxu0 %v4094
        %5219 = vmatpush1.bf16.msra.mxu0 %v4093
        %5220 = vmatprep.subr.bf16.mxu0 %v4102
        %5221 = vmatpush1.bf16.msra.mxu0 %v4101
        %5222 = vmatprep.subr.bf16.mxu0 %v4110
        %5223 = vmatpush1.bf16.msra.mxu0 %v4109
        %5224 = vmatprep.subr.bf16.mxu0 %v4118
        %5225 = vmatpush1.bf16.msra.mxu0 %v4117
        %5226 = vmatprep.subr.bf16.mxu0 %v4126
        %5227 = vmatpush1.bf16.msra.mxu0 %v4125
        %5228 = vmatprep.mubr.bf16.mxu0 %v1954
        %5229 = vmatmul.mubr.bf16.gmra.mrb[0].mxu0 %v1953
        %v5230 = vpop.f32.mrb[0].mxu0
        %v5231 = vadd.f32 %v2474, %v5230
        %v5232 = vpop.f32.mrb[0].mxu0
        %v5233 = vadd.f32 %v2478, %v5232
        %v5234 = vpop.f32.mrb[0].mxu0
        %v5235 = vpop.f32.mrb[0].mxu0
        %5236 = vdwg.mxu0
        %5237 = vmatprep.subr.bf16.mxu0 %v4134
        %5238 = vmatpush1.bf16.msra.mxu0 %v4133
        %5239 = vmatprep.subr.bf16.mxu0 %v4142
        %5240 = vmatpush1.bf16.msra.mxu0 %v4141
        %5241 = vmatprep.subr.bf16.mxu0 %v4150
        %5242 = vmatpush1.bf16.msra.mxu0 %v4149
        %5243 = vmatprep.subr.bf16.mxu0 %v4158
        %5244 = vmatpush1.bf16.msra.mxu0 %v4157
        %5245 = vmatprep.subr.bf16.mxu0 %v4166
        %5246 = vmatpush1.bf16.msra.mxu0 %v4165
        %5247 = vmatprep.subr.bf16.mxu0 %v4174
        %5248 = vmatpush1.bf16.msra.mxu0 %v4173
        %5249 = vmatprep.subr.bf16.mxu0 %v4182
        %5250 = vmatpush1.bf16.msra.mxu0 %v4181
        %5251 = vmatprep.subr.bf16.mxu0 %v4190
        %5252 = vmatpush1.bf16.msra.mxu0 %v4189
        %5253 = vmatprep.subr.bf16.mxu0 %v4198
        %5254 = vmatpush1.bf16.msra.mxu0 %v4197
        %5255 = vmatprep.subr.bf16.mxu0 %v4206
        %5256 = vmatpush1.bf16.msra.mxu0 %v4205
        %5257 = vmatprep.subr.bf16.mxu0 %v4214
        %5258 = vmatpush1.bf16.msra.mxu0 %v4213
        %5259 = vmatprep.subr.bf16.mxu0 %v4222
        %5260 = vmatpush1.bf16.msra.mxu0 %v4221
        %5261 = vmatprep.subr.bf16.mxu0 %v4230
        %5262 = vmatpush1.bf16.msra.mxu0 %v4229
        %5263 = vmatprep.subr.bf16.mxu0 %v4238
        %5264 = vmatpush1.bf16.msra.mxu0 %v4237
        %5265 = vmatprep.subr.bf16.mxu0 %v4246
        %5266 = vmatpush1.bf16.msra.mxu0 %v4245
        %5267 = vmatprep.subr.bf16.mxu0 %v4254
        %5268 = vmatpush1.bf16.msra.mxu0 %v4253
        %5269 = vmatprep.mubr.bf16.mxu0 %v1956
        %5270 = vmatmul.mubr.bf16.gmra.mrb[0].mxu0 %v1955
        %v5271 = vpop.f32.mrb[0].mxu0
        %v5272 = vadd.f32 %v5231, %v5271
        %v5273 = vpop.f32.mrb[0].mxu0
        %v5274 = vadd.f32 %v5233, %v5273
        %v5275 = vpop.f32.mrb[0].mxu0
        %v5276 = vpop.f32.mrb[0].mxu0
        %5277 = vdwg.mxu0
        %5278 = vmatprep.subr.bf16.mxu0 %v4262
        %5279 = vmatpush1.bf16.msra.mxu0 %v4261
        %5280 = vmatprep.subr.bf16.mxu0 %v4270
        %5281 = vmatpush1.bf16.msra.mxu0 %v4269
        %5282 = vmatprep.subr.bf16.mxu0 %v4278
        %5283 = vmatpush1.bf16.msra.mxu0 %v4277
        %5284 = vmatprep.subr.bf16.mxu0 %v4286
        %5285 = vmatpush1.bf16.msra.mxu0 %v4285
        %5286 = vmatprep.subr.bf16.mxu0 %v4294
        %5287 = vmatpush1.bf16.msra.mxu0 %v4293
        %5288 = vmatprep.subr.bf16.mxu0 %v4302
        %5289 = vmatpush1.bf16.msra.mxu0 %v4301
        %5290 = vmatprep.subr.bf16.mxu0 %v4310
        %5291 = vmatpush1.bf16.msra.mxu0 %v4309
        %5292 = vmatprep.subr.bf16.mxu0 %v4318
        %5293 = vmatpush1.bf16.msra.mxu0 %v4317
        %5294 = vmatprep.subr.bf16.mxu0 %v4326
        %5295 = vmatpush1.bf16.msra.mxu0 %v4325
        %5296 = vmatprep.subr.bf16.mxu0 %v4334
        %5297 = vmatpush1.bf16.msra.mxu0 %v4333
        %5298 = vmatprep.subr.bf16.mxu0 %v4342
        %5299 = vmatpush1.bf16.msra.mxu0 %v4341
        %5300 = vmatprep.subr.bf16.mxu0 %v4350
        %5301 = vmatpush1.bf16.msra.mxu0 %v4349
        %5302 = vmatprep.subr.bf16.mxu0 %v4358
        %5303 = vmatpush1.bf16.msra.mxu0 %v4357
        %5304 = vmatprep.subr.bf16.mxu0 %v4366
        %5305 = vmatpush1.bf16.msra.mxu0 %v4365
        %5306 = vmatprep.subr.bf16.mxu0 %v4374
        %5307 = vmatpush1.bf16.msra.mxu0 %v4373
        %5308 = vmatprep.subr.bf16.mxu0 %v4382
        %5309 = vmatpush1.bf16.msra.mxu0 %v4381
        %5310 = vmatprep.mubr.bf16.mxu0 %v1958
        %5311 = vmatmul.mubr.bf16.gmra.mrb[0].mxu0 %v1957
        %v5312 = vpop.f32.mrb[0].mxu0
        %v5313 = vadd.f32 %v5272, %v5312
        %v5314 = vpop.f32.mrb[0].mxu0
        %v5315 = vadd.f32 %v5274, %v5314
        %v5316 = vpop.f32.mrb[0].mxu0
        %v5317 = vpop.f32.mrb[0].mxu0
        %5318 = vdwg.mxu0
        %5319 = vmatprep.subr.bf16.mxu0 %v4390
        %5320 = vmatpush1.bf16.msra.mxu0 %v4389
        %5321 = vmatprep.subr.bf16.mxu0 %v4398
        %5322 = vmatpush1.bf16.msra.mxu0 %v4397
        %5323 = vmatprep.subr.bf16.mxu0 %v4406
        %5324 = vmatpush1.bf16.msra.mxu0 %v4405
        %5325 = vmatprep.subr.bf16.mxu0 %v4414
        %5326 = vmatpush1.bf16.msra.mxu0 %v4413
        %5327 = vmatprep.subr.bf16.mxu0 %v4422
        %5328 = vmatpush1.bf16.msra.mxu0 %v4421
        %5329 = vmatprep.subr.bf16.mxu0 %v4430
        %5330 = vmatpush1.bf16.msra.mxu0 %v4429
        %5331 = vmatprep.subr.bf16.mxu0 %v4438
        %5332 = vmatpush1.bf16.msra.mxu0 %v4437
        %5333 = vmatprep.subr.bf16.mxu0 %v4446
        %5334 = vmatpush1.bf16.msra.mxu0 %v4445
        %5335 = vmatprep.subr.bf16.mxu0 %v4454
        %5336 = vmatpush1.bf16.msra.mxu0 %v4453
        %5337 = vmatprep.subr.bf16.mxu0 %v4462
        %5338 = vmatpush1.bf16.msra.mxu0 %v4461
        %5339 = vmatprep.subr.bf16.mxu0 %v4470
        %5340 = vmatpush1.bf16.msra.mxu0 %v4469
        %5341 = vmatprep.subr.bf16.mxu0 %v4478
        %5342 = vmatpush1.bf16.msra.mxu0 %v4477
        %5343 = vmatprep.subr.bf16.mxu0 %v4486
        %5344 = vmatpush1.bf16.msra.mxu0 %v4485
        %5345 = vmatprep.subr.bf16.mxu0 %v4494
        %5346 = vmatpush1.bf16.msra.mxu0 %v4493
        %5347 = vmatprep.subr.bf16.mxu0 %v5018
        %5348 = vmatpush1.bf16.msra.mxu0 %v5015
        %5349 = vmatprep.subr.bf16.mxu0 0
        %5350 = vmatpush1.bf16.msra.mxu0 0
        %5351 = vmatprep.mubr.bf16.mxu0 %v5005
        %5352 = vmatmul.mubr.bf16.gmra.mrb[0].mxu0 %v1959
        %v5353 = vpop.f32.mrb[0].mxu0
        %v5354 = vadd.f32 %v5313, %v5353
        %v5355 = vpop.f32.mrb[0].mxu0
        %v5356 = vadd.f32 %v5315, %v5355
        %v5357 = vpop.f32.mrb[0].mxu0
        %v5358 = vpop.f32.mrb[0].mxu0
        %5359 = vdwg.mxu0
        %5360 = vmatprep.subr.bf16.mxu0 %v4008
        %5361 = vmatpush1.bf16.msra.mxu0 %v4007
        %5362 = vmatprep.subr.bf16.mxu0 %v4016
        %5363 = vmatpush1.bf16.msra.mxu0 %v4015
        %5364 = vmatprep.subr.bf16.mxu0 %v4024
        %5365 = vmatpush1.bf16.msra.mxu0 %v4023
        %5366 = vmatprep.subr.bf16.mxu0 %v4032
        %5367 = vmatpush1.bf16.msra.mxu0 %v4031
        %5368 = vmatprep.subr.bf16.mxu0 %v4040
        %5369 = vmatpush1.bf16.msra.mxu0 %v4039
        %5370 = vmatprep.subr.bf16.mxu0 %v4048
        %5371 = vmatpush1.bf16.msra.mxu0 %v4047
        %5372 = vmatprep.subr.bf16.mxu0 %v4056
        %5373 = vmatpush1.bf16.msra.mxu0 %v4055
        %5374 = vmatprep.subr.bf16.mxu0 %v4064
        %5375 = vmatpush1.bf16.msra.mxu0 %v4063
        %5376 = vmatprep.subr.bf16.mxu0 %v4072
        %5377 = vmatpush1.bf16.msra.mxu0 %v4071
        %5378 = vmatprep.subr.bf16.mxu0 %v4080
        %5379 = vmatpush1.bf16.msra.mxu0 %v4079
        %5380 = vmatprep.subr.bf16.mxu0 %v4088
        %5381 = vmatpush1.bf16.msra.mxu0 %v4087
        %5382 = vmatprep.subr.bf16.mxu0 %v4096
        %5383 = vmatpush1.bf16.msra.mxu0 %v4095
        %5384 = vmatprep.subr.bf16.mxu0 %v4104
        %5385 = vmatpush1.bf16.msra.mxu0 %v4103
        %5386 = vmatprep.subr.bf16.mxu0 %v4112
        %5387 = vmatpush1.bf16.msra.mxu0 %v4111
        %5388 = vmatprep.subr.bf16.mxu0 %v4120
        %5389 = vmatpush1.bf16.msra.mxu0 %v4119
        %5390 = vmatprep.subr.bf16.mxu0 %v4128
        %5391 = vmatpush1.bf16.msra.mxu0 %v4127
        %5392 = vmatprep.mubr.bf16.mxu0 %v1954
        %5393 = vmatmul.mubr.bf16.gmra.mrb[0].mxu0 %v1953
        %v5394 = vpop.f32.mrb[0].mxu0
        %v5395 = vadd.f32 %v2482, %v5394
        %v5396 = vpop.f32.mrb[0].mxu0
        %v5397 = vadd.f32 %v2486, %v5396
        %v5398 = vpop.f32.mrb[0].mxu0
        %v5399 = vpop.f32.mrb[0].mxu0
        %5400 = vdwg.mxu0
        %5401 = vmatprep.subr.bf16.mxu0 %v4136
        %5402 = vmatpush1.bf16.msra.mxu0 %v4135
        %5403 = vmatprep.subr.bf16.mxu0 %v4144
        %5404 = vmatpush1.bf16.msra.mxu0 %v4143
        %5405 = vmatprep.subr.bf16.mxu0 %v4152
        %5406 = vmatpush1.bf16.msra.mxu0 %v4151
        %5407 = vmatprep.subr.bf16.mxu0 %v4160
        %5408 = vmatpush1.bf16.msra.mxu0 %v4159
        %5409 = vmatprep.subr.bf16.mxu0 %v4168
        %5410 = vmatpush1.bf16.msra.mxu0 %v4167
        %5411 = vmatprep.subr.bf16.mxu0 %v4176
        %5412 = vmatpush1.bf16.msra.mxu0 %v4175
        %5413 = vmatprep.subr.bf16.mxu0 %v4184
        %5414 = vmatpush1.bf16.msra.mxu0 %v4183
        %5415 = vmatprep.subr.bf16.mxu0 %v4192
        %5416 = vmatpush1.bf16.msra.mxu0 %v4191
        %5417 = vmatprep.subr.bf16.mxu0 %v4200
        %5418 = vmatpush1.bf16.msra.mxu0 %v4199
        %5419 = vmatprep.subr.bf16.mxu0 %v4208
        %5420 = vmatpush1.bf16.msra.mxu0 %v4207
        %5421 = vmatprep.subr.bf16.mxu0 %v4216
        %5422 = vmatpush1.bf16.msra.mxu0 %v4215
        %5423 = vmatprep.subr.bf16.mxu0 %v4224
        %5424 = vmatpush1.bf16.msra.mxu0 %v4223
        %5425 = vmatprep.subr.bf16.mxu0 %v4232
        %5426 = vmatpush1.bf16.msra.mxu0 %v4231
        %5427 = vmatprep.subr.bf16.mxu0 %v4240
        %5428 = vmatpush1.bf16.msra.mxu0 %v4239
        %5429 = vmatprep.subr.bf16.mxu0 %v4248
        %5430 = vmatpush1.bf16.msra.mxu0 %v4247
        %5431 = vmatprep.subr.bf16.mxu0 %v4256
        %5432 = vmatpush1.bf16.msra.mxu0 %v4255
        %5433 = vmatprep.mubr.bf16.mxu0 %v1956
        %5434 = vmatmul.mubr.bf16.gmra.mrb[0].mxu0 %v1955
        %v5435 = vpop.f32.mrb[0].mxu0
        %v5436 = vadd.f32 %v5395, %v5435
        %v5437 = vpop.f32.mrb[0].mxu0
        %v5438 = vadd.f32 %v5397, %v5437
        %v5439 = vpop.f32.mrb[0].mxu0
        %v5440 = vpop.f32.mrb[0].mxu0
        %5441 = vdwg.mxu0
        %5442 = vmatprep.subr.bf16.mxu0 %v4264
        %5443 = vmatpush1.bf16.msra.mxu0 %v4263
        %5444 = vmatprep.subr.bf16.mxu0 %v4272
        %5445 = vmatpush1.bf16.msra.mxu0 %v4271
        %5446 = vmatprep.subr.bf16.mxu0 %v4280
        %5447 = vmatpush1.bf16.msra.mxu0 %v4279
        %5448 = vmatprep.subr.bf16.mxu0 %v4288
        %5449 = vmatpush1.bf16.msra.mxu0 %v4287
        %5450 = vmatprep.subr.bf16.mxu0 %v4296
        %5451 = vmatpush1.bf16.msra.mxu0 %v4295
        %5452 = vmatprep.subr.bf16.mxu0 %v4304
        %5453 = vmatpush1.bf16.msra.mxu0 %v4303
        %5454 = vmatprep.subr.bf16.mxu0 %v4312
        %5455 = vmatpush1.bf16.msra.mxu0 %v4311
        %5456 = vmatprep.subr.bf16.mxu0 %v4320
        %5457 = vmatpush1.bf16.msra.mxu0 %v4319
        %5458 = vmatprep.subr.bf16.mxu0 %v4328
        %5459 = vmatpush1.bf16.msra.mxu0 %v4327
        %5460 = vmatprep.subr.bf16.mxu0 %v4336
        %5461 = vmatpush1.bf16.msra.mxu0 %v4335
        %5462 = vmatprep.subr.bf16.mxu0 %v4344
        %5463 = vmatpush1.bf16.msra.mxu0 %v4343
        %5464 = vmatprep.subr.bf16.mxu0 %v4352
        %5465 = vmatpush1.bf16.msra.mxu0 %v4351
        %5466 = vmatprep.subr.bf16.mxu0 %v4360
        %5467 = vmatpush1.bf16.msra.mxu0 %v4359
        %5468 = vmatprep.subr.bf16.mxu0 %v4368
        %5469 = vmatpush1.bf16.msra.mxu0 %v4367
        %5470 = vmatprep.subr.bf16.mxu0 %v4376
        %5471 = vmatpush1.bf16.msra.mxu0 %v4375
        %5472 = vmatprep.subr.bf16.mxu0 %v4384
        %5473 = vmatpush1.bf16.msra.mxu0 %v4383
        %5474 = vmatprep.mubr.bf16.mxu0 %v1958
        %5475 = vmatmul.mubr.bf16.gmra.mrb[0].mxu0 %v1957
        %v5476 = vpop.f32.mrb[0].mxu0
        %v5477 = vadd.f32 %v5436, %v5476
        %v5478 = vpop.f32.mrb[0].mxu0
        %v5479 = vadd.f32 %v5438, %v5478
        %v5480 = vpop.f32.mrb[0].mxu0
        %v5481 = vpop.f32.mrb[0].mxu0
        %5482 = vdwg.mxu0
        %5483 = vmatprep.subr.bf16.mxu0 %v4392
        %5484 = vmatpush1.bf16.msra.mxu0 %v4391
        %5485 = vmatprep.subr.bf16.mxu0 %v4400
        %5486 = vmatpush1.bf16.msra.mxu0 %v4399
        %5487 = vmatprep.subr.bf16.mxu0 %v4408
        %5488 = vmatpush1.bf16.msra.mxu0 %v4407
        %5489 = vmatprep.subr.bf16.mxu0 %v4416
        %5490 = vmatpush1.bf16.msra.mxu0 %v4415
        %5491 = vmatprep.subr.bf16.mxu0 %v4424
        %5492 = vmatpush1.bf16.msra.mxu0 %v4423
        %5493 = vmatprep.subr.bf16.mxu0 %v4432
        %5494 = vmatpush1.bf16.msra.mxu0 %v4431
        %5495 = vmatprep.subr.bf16.mxu0 %v4440
        %5496 = vmatpush1.bf16.msra.mxu0 %v4439
        %5497 = vmatprep.subr.bf16.mxu0 %v4448
        %5498 = vmatpush1.bf16.msra.mxu0 %v4447
        %5499 = vmatprep.subr.bf16.mxu0 %v4456
        %5500 = vmatpush1.bf16.msra.mxu0 %v4455
        %5501 = vmatprep.subr.bf16.mxu0 %v4464
        %5502 = vmatpush1.bf16.msra.mxu0 %v4463
        %5503 = vmatprep.subr.bf16.mxu0 %v4472
        %5504 = vmatpush1.bf16.msra.mxu0 %v4471
        %5505 = vmatprep.subr.bf16.mxu0 %v4480
        %5506 = vmatpush1.bf16.msra.mxu0 %v4479
        %5507 = vmatprep.subr.bf16.mxu0 %v4488
        %5508 = vmatpush1.bf16.msra.mxu0 %v4487
        %5509 = vmatprep.subr.bf16.mxu0 %v4496
        %5510 = vmatpush1.bf16.msra.mxu0 %v4495
        %5511 = vmatprep.subr.bf16.mxu0 %v5024
        %5512 = vmatpush1.bf16.msra.mxu0 %v5021
        %5513 = vmatprep.subr.bf16.mxu0 0
        %5514 = vmatpush1.bf16.msra.mxu0 0
        %5515 = vmatprep.mubr.bf16.mxu0 %v5005
        %5516 = vmatmul.mubr.bf16.gmra.mrb[0].mxu0 %v1959
        %v5517 = vpop.f32.mrb[0].mxu0
        %v5518 = vadd.f32 %v5477, %v5517
        %v5519 = vpop.f32.mrb[0].mxu0
        %v5520 = vadd.f32 %v5479, %v5519
        %v5521 = vpop.f32.mrb[0].mxu0
        %v5522 = vpop.f32.mrb[0].mxu0
        %5523 = vdwg.mxu0
        %5524 = vmatprep.subr.bf16.mxu0 %v4010
        %5525 = vmatpush1.bf16.msra.mxu0 %v4009
        %5526 = vmatprep.subr.bf16.mxu0 %v4018
        %5527 = vmatpush1.bf16.msra.mxu0 %v4017
        %5528 = vmatprep.subr.bf16.mxu0 %v4026
        %5529 = vmatpush1.bf16.msra.mxu0 %v4025
        %5530 = vmatprep.subr.bf16.mxu0 %v4034
        %5531 = vmatpush1.bf16.msra.mxu0 %v4033
        %5532 = vmatprep.subr.bf16.mxu0 %v4042
        %5533 = vmatpush1.bf16.msra.mxu0 %v4041
        %5534 = vmatprep.subr.bf16.mxu0 %v4050
        %5535 = vmatpush1.bf16.msra.mxu0 %v4049
        %5536 = vmatprep.subr.bf16.mxu0 %v4058
        %5537 = vmatpush1.bf16.msra.mxu0 %v4057
        %5538 = vmatprep.subr.bf16.mxu0 %v4066
        %5539 = vmatpush1.bf16.msra.mxu0 %v4065
        %5540 = vmatprep.subr.bf16.mxu0 %v4074
        %5541 = vmatpush1.bf16.msra.mxu0 %v4073
        %5542 = vmatprep.subr.bf16.mxu0 %v4082
        %5543 = vmatpush1.bf16.msra.mxu0 %v4081
        %5544 = vmatprep.subr.bf16.mxu0 %v4090
        %5545 = vmatpush1.bf16.msra.mxu0 %v4089
        %5546 = vmatprep.subr.bf16.mxu0 %v4098
        %5547 = vmatpush1.bf16.msra.mxu0 %v4097
        %5548 = vmatprep.subr.bf16.mxu0 %v4106
        %5549 = vmatpush1.bf16.msra.mxu0 %v4105
        %5550 = vmatprep.subr.bf16.mxu0 %v4114
        %5551 = vmatpush1.bf16.msra.mxu0 %v4113
        %5552 = vmatprep.subr.bf16.mxu0 %v4122
        %5553 = vmatpush1.bf16.msra.mxu0 %v4121
        %5554 = vmatprep.subr.bf16.mxu0 %v4130
        %5555 = vmatpush1.bf16.msra.mxu0 %v4129
        %5556 = vmatprep.mubr.bf16.mxu0 %v1954
        %5557 = vmatmul.mubr.bf16.gmra.mrb[0].mxu0 %v1953
        %v5558 = vpop.f32.mrb[0].mxu0
        %v5559 = vadd.f32 %v2490, %v5558
        %v5560 = vpop.f32.mrb[0].mxu0
        %v5561 = vadd.f32 %v2494, %v5560
        %v5562 = vpop.f32.mrb[0].mxu0
        %v5563 = vpop.f32.mrb[0].mxu0
        %5564 = vdwg.mxu0
        %5565 = vmatprep.subr.bf16.mxu0 %v4138
        %5566 = vmatpush1.bf16.msra.mxu0 %v4137
        %5567 = vmatprep.subr.bf16.mxu0 %v4146
        %5568 = vmatpush1.bf16.msra.mxu0 %v4145
        %5569 = vmatprep.subr.bf16.mxu0 %v4154
        %5570 = vmatpush1.bf16.msra.mxu0 %v4153
        %5571 = vmatprep.subr.bf16.mxu0 %v4162
        %5572 = vmatpush1.bf16.msra.mxu0 %v4161
        %5573 = vmatprep.subr.bf16.mxu0 %v4170
        %5574 = vmatpush1.bf16.msra.mxu0 %v4169
        %5575 = vmatprep.subr.bf16.mxu0 %v4178
        %5576 = vmatpush1.bf16.msra.mxu0 %v4177
        %5577 = vmatprep.subr.bf16.mxu0 %v4186
        %5578 = vmatpush1.bf16.msra.mxu0 %v4185
        %5579 = vmatprep.subr.bf16.mxu0 %v4194
        %5580 = vmatpush1.bf16.msra.mxu0 %v4193
        %5581 = vmatprep.subr.bf16.mxu0 %v4202
        %5582 = vmatpush1.bf16.msra.mxu0 %v4201
        %5583 = vmatprep.subr.bf16.mxu0 %v4210
        %5584 = vmatpush1.bf16.msra.mxu0 %v4209
        %5585 = vmatprep.subr.bf16.mxu0 %v4218
        %5586 = vmatpush1.bf16.msra.mxu0 %v4217
        %5587 = vmatprep.subr.bf16.mxu0 %v4226
        %5588 = vmatpush1.bf16.msra.mxu0 %v4225
        %5589 = vmatprep.subr.bf16.mxu0 %v4234
        %5590 = vmatpush1.bf16.msra.mxu0 %v4233
        %5591 = vmatprep.subr.bf16.mxu0 %v4242
        %5592 = vmatpush1.bf16.msra.mxu0 %v4241
        %5593 = vmatprep.subr.bf16.mxu0 %v4250
        %5594 = vmatpush1.bf16.msra.mxu0 %v4249
        %5595 = vmatprep.subr.bf16.mxu0 %v4258
        %5596 = vmatpush1.bf16.msra.mxu0 %v4257
        %5597 = vmatprep.mubr.bf16.mxu0 %v1956
        %5598 = vmatmul.mubr.bf16.gmra.mrb[0].mxu0 %v1955
        %v5599 = vpop.f32.mrb[0].mxu0
        %v5600 = vadd.f32 %v5559, %v5599
        %v5601 = vpop.f32.mrb[0].mxu0
        %v5602 = vadd.f32 %v5561, %v5601
        %v5603 = vpop.f32.mrb[0].mxu0
        %v5604 = vpop.f32.mrb[0].mxu0
        %5605 = vdwg.mxu0
        %5606 = vmatprep.subr.bf16.mxu0 %v4266
        %5607 = vmatpush1.bf16.msra.mxu0 %v4265
        %5608 = vmatprep.subr.bf16.mxu0 %v4274
        %5609 = vmatpush1.bf16.msra.mxu0 %v4273
        %5610 = vmatprep.subr.bf16.mxu0 %v4282
        %5611 = vmatpush1.bf16.msra.mxu0 %v4281
        %5612 = vmatprep.subr.bf16.mxu0 %v4290
        %5613 = vmatpush1.bf16.msra.mxu0 %v4289
        %5614 = vmatprep.subr.bf16.mxu0 %v4298
        %5615 = vmatpush1.bf16.msra.mxu0 %v4297
        %5616 = vmatprep.subr.bf16.mxu0 %v4306
        %5617 = vmatpush1.bf16.msra.mxu0 %v4305
        %5618 = vmatprep.subr.bf16.mxu0 %v4314
        %5619 = vmatpush1.bf16.msra.mxu0 %v4313
        %5620 = vmatprep.subr.bf16.mxu0 %v4322
        %5621 = vmatpush1.bf16.msra.mxu0 %v4321
        %5622 = vmatprep.subr.bf16.mxu0 %v4330
        %5623 = vmatpush1.bf16.msra.mxu0 %v4329
        %5624 = vmatprep.subr.bf16.mxu0 %v4338
        %5625 = vmatpush1.bf16.msra.mxu0 %v4337
        %5626 = vmatprep.subr.bf16.mxu0 %v4346
        %5627 = vmatpush1.bf16.msra.mxu0 %v4345
        %5628 = vmatprep.subr.bf16.mxu0 %v4354
        %5629 = vmatpush1.bf16.msra.mxu0 %v4353
        %5630 = vmatprep.subr.bf16.mxu0 %v4362
        %5631 = vmatpush1.bf16.msra.mxu0 %v4361
        %5632 = vmatprep.subr.bf16.mxu0 %v4370
        %5633 = vmatpush1.bf16.msra.mxu0 %v4369
        %5634 = vmatprep.subr.bf16.mxu0 %v4378
        %5635 = vmatpush1.bf16.msra.mxu0 %v4377
        %5636 = vmatprep.subr.bf16.mxu0 %v4386
        %5637 = vmatpush1.bf16.msra.mxu0 %v4385
        %5638 = vmatprep.mubr.bf16.mxu0 %v1958
        %5639 = vmatmul.mubr.bf16.gmra.mrb[0].mxu0 %v1957
        %v5640 = vpop.f32.mrb[0].mxu0
        %v5641 = vadd.f32 %v5600, %v5640
        %v5642 = vpop.f32.mrb[0].mxu0
        %v5643 = vadd.f32 %v5602, %v5642
        %v5644 = vpop.f32.mrb[0].mxu0
        %v5645 = vpop.f32.mrb[0].mxu0
        %5646 = vdwg.mxu0
        %5647 = vmatprep.subr.bf16.mxu0 %v4394
        %5648 = vmatpush1.bf16.msra.mxu0 %v4393
        %5649 = vmatprep.subr.bf16.mxu0 %v4402
        %5650 = vmatpush1.bf16.msra.mxu0 %v4401
        %5651 = vmatprep.subr.bf16.mxu0 %v4410
        %5652 = vmatpush1.bf16.msra.mxu0 %v4409
        %5653 = vmatprep.subr.bf16.mxu0 %v4418
        %5654 = vmatpush1.bf16.msra.mxu0 %v4417
        %5655 = vmatprep.subr.bf16.mxu0 %v4426
        %5656 = vmatpush1.bf16.msra.mxu0 %v4425
        %5657 = vmatprep.subr.bf16.mxu0 %v4434
        %5658 = vmatpush1.bf16.msra.mxu0 %v4433
        %5659 = vmatprep.subr.bf16.mxu0 %v4442
        %5660 = vmatpush1.bf16.msra.mxu0 %v4441
        %5661 = vmatprep.subr.bf16.mxu0 %v4450
        %5662 = vmatpush1.bf16.msra.mxu0 %v4449
        %5663 = vmatprep.subr.bf16.mxu0 %v4458
        %5664 = vmatpush1.bf16.msra.mxu0 %v4457
        %5665 = vmatprep.subr.bf16.mxu0 %v4466
        %5666 = vmatpush1.bf16.msra.mxu0 %v4465
        %5667 = vmatprep.subr.bf16.mxu0 %v4474
        %5668 = vmatpush1.bf16.msra.mxu0 %v4473
        %5669 = vmatprep.subr.bf16.mxu0 %v4482
        %5670 = vmatpush1.bf16.msra.mxu0 %v4481
        %5671 = vmatprep.subr.bf16.mxu0 %v4490
        %5672 = vmatpush1.bf16.msra.mxu0 %v4489
        %5673 = vmatprep.subr.bf16.mxu0 %v4498
        %5674 = vmatpush1.bf16.msra.mxu0 %v4497
        %5675 = vmatprep.subr.bf16.mxu0 %v5030
        %5676 = vmatpush1.bf16.msra.mxu0 %v5027
        %5677 = vmatprep.subr.bf16.mxu0 0
        %5678 = vmatpush1.bf16.msra.mxu0 0
        %5679 = vmatprep.mubr.bf16.mxu0 %v5005
        %5680 = vmatmul.mubr.bf16.gmra.mrb[0].mxu0 %v1959
        %v5681 = vpop.f32.mrb[0].mxu0
        %v5682 = vadd.f32 %v5641, %v5681
        %v5683 = vpop.f32.mrb[0].mxu0
        %v5684 = vadd.f32 %v5643, %v5683
        %v5685 = vpop.f32.mrb[0].mxu0
        %v5686 = vpop.f32.mrb[0].mxu0
        %5687 = vdwg.mxu0
        %v5688 = vmax.f32 %v5190, 0.0
        %v5689 = vmax.f32 %v5192, 0.0
        %v5690 = vmax.f32 %v5354, 0.0
        %v5691 = vmax.f32 %v5356, 0.0
        %v5692 = vmax.f32 %v5518, 0.0
        %v5693 = vmax.f32 %v5520, 0.0
        %v5694 = vmax.f32 %v5682, 0.0
        %v5695 = vmax.f32 %v5684, 0.0
        %v5696 = vpack.c.bf16 %v5688, %v5688
        %v5697 = vpack.c.bf16 %v5689, %v5689
        %v5698 = vpack.c.bf16 %v5690, %v5690
        %v5699 = vpack.c.bf16 %v5691, %v5691
        %v5700 = vpack.c.bf16 %v5692, %v5692
        %v5701 = vpack.c.bf16 %v5693, %v5693
        %v5702 = vpack.c.bf16 %v5694, %v5694
        %v5703 = vpack.c.bf16 %v5695, %v5695
        %v5704 = vld [vmem:[%s5] sm:$0xff]
        %v5705 = vld [vmem:[%s5 + $0x8] sm:$0xff]
        %v5706 = vld [vmem:[%s5 + $0x10] sm:$0xff]
        %v5707 = vld [vmem:[%s5 + $0x18] sm:$0xff]
        %v5708 = vld [vmem:[%s5 + $0x20] sm:$0xff]
        %v5709 = vld [vmem:[%s5 + $0x28] sm:$0xff]
        %v5710 = vld [vmem:[%s5 + $0x30] sm:$0xff]
        %v5711 = vld [vmem:[%s5 + $0x38] sm:$0xff]
        %v5712 = vld [vmem:[%s5 + $0x40] sm:$0xff]
        %v5713 = vld [vmem:[%s5 + $0x48] sm:$0xff]
        %v5714 = vld [vmem:[%s5 + $0x50] sm:$0xff]
        %v5715 = vld [vmem:[%s5 + $0x58] sm:$0xff]
        %v5716 = vld [vmem:[%s5 + $0x60] sm:$0xff]
        %v5717 = vld [vmem:[%s5 + $0x68] sm:$0xff]
        %v5718 = vld [vmem:[%s5 + $0x70] sm:$0xff]
        %v5719 = vld [vmem:[%s5 + $0x78] sm:$0xff]
        %v5720 = vld [vmem:[%s5 + $0x80] sm:$0xff]
        %v5721 = vld [vmem:[%s5 + $0x88] sm:$0xff]
        %v5722 = vld [vmem:[%s5 + $0x90] sm:$0xff]
        %v5723 = vld [vmem:[%s5 + $0x98] sm:$0xff]
        %v5724 = vld [vmem:[%s5 + $0xa0] sm:$0xff]
        %v5725 = vld [vmem:[%s5 + $0xa8] sm:$0xff]
        %v5726 = vld [vmem:[%s5 + $0xb0] sm:$0xff]
        %v5727 = vld [vmem:[%s5 + $0xb8] sm:$0xff]
        %v5728 = vld [vmem:[%s5 + $0xc0] sm:$0xff]
        %v5729 = vld [vmem:[%s5 + $0xc8] sm:$0xff]
        %v5730 = vld [vmem:[%s5 + $0xd0] sm:$0xff]
        %v5731 = vld [vmem:[%s5 + $0xd8] sm:$0xff]
        %v5732 = vld [vmem:[%s5 + $0xe0] sm:$0xff]
        %v5733 = vld [vmem:[%s5 + $0xe8] sm:$0xff]
        %v5734 = vld [vmem:[%s5 + $0xf0] sm:$0xff]
        %v5735 = vld [vmem:[%s5 + $0xf8] sm:$0xff]
        %v5736 = vld [vmem:[%s5 + $0x100] sm:$0xff]
        %v5737 = vld [vmem:[%s5 + $0x108] sm:$0xff]
        %v5738 = vld [vmem:[%s5 + $0x110] sm:$0xff]
        %v5739 = vld [vmem:[%s5 + $0x118] sm:$0xff]
        %v5740 = vld [vmem:[%s5 + $0x120] sm:$0xff]
        %v5741 = vld [vmem:[%s5 + $0x128] sm:$0xff]
        %v5742 = vld [vmem:[%s5 + $0x130] sm:$0xff]
        %v5743 = vld [vmem:[%s5 + $0x138] sm:$0xff]
        %v5744 = vld [vmem:[%s5 + $0x140] sm:$0xff]
        %v5745 = vld [vmem:[%s5 + $0x148] sm:$0xff]
        %v5746 = vld [vmem:[%s5 + $0x150] sm:$0xff]
        %v5747 = vld [vmem:[%s5 + $0x158] sm:$0xff]
        %v5748 = vld [vmem:[%s5 + $0x160] sm:$0xff]
        %v5749 = vld [vmem:[%s5 + $0x168] sm:$0xff]
        %v5750 = vld [vmem:[%s5 + $0x170] sm:$0xff]
        %v5751 = vld [vmem:[%s5 + $0x178] sm:$0xff]
        %v5752 = vld [vmem:[%s5 + $0x180] sm:$0xff]
        %v5753 = vld [vmem:[%s5 + $0x188] sm:$0xff]
        %v5754 = vld [vmem:[%s5 + $0x190] sm:$0xff]
        %v5755 = vld [vmem:[%s5 + $0x198] sm:$0xff]
        %v5756 = vld [vmem:[%s5 + $0x1a0] sm:$0xff]
        %v5757 = vld [vmem:[%s5 + $0x1a8] sm:$0xff]
        %v5758 = vld [vmem:[%s5 + $0x1b0] sm:$0xff]
        %v5759 = vld [vmem:[%s5 + $0x1b8] sm:$0xff]
        %v5760 = vld [vmem:[%s5 + $0x1c0] sm:$0xff]
        %v5761 = vld [vmem:[%s5 + $0x1c8] sm:$0xff]
        %v5762 = vld [vmem:[%s5 + $0x1d0] sm:$0xff]
        %v5763 = vld [vmem:[%s5 + $0x1d8] sm:$0xff]
        %v5764 = vld [vmem:[%s5 + $0x1e0] sm:$0xff]
        %v5765 = vld [vmem:[%s5 + $0x1e8] sm:$0xff]
        %v5766 = vld [vmem:[%s5 + $0x1f0] sm:$0xff]
        %v5767 = vld [vmem:[%s5 + $0x1f8] sm:$0xff]
        %v5768 = vld [vmem:[%s5 + $0x200] sm:$0xff]
        %v5769 = vld [vmem:[%s5 + $0x208] sm:$0xff]
        %v5770 = vld [vmem:[%s5 + $0x210] sm:$0xff]
        %v5771 = vld [vmem:[%s5 + $0x218] sm:$0xff]
        %v5772 = vld [vmem:[%s5 + $0x220] sm:$0xff]
        %v5773 = vld [vmem:[%s5 + $0x228] sm:$0xff]
        %v5774 = vld [vmem:[%s5 + $0x230] sm:$0xff]
        %v5775 = vld [vmem:[%s5 + $0x238] sm:$0xff]
        %v5776 = vld [vmem:[%s5 + $0x240] sm:$0xff]
        %v5777 = vld [vmem:[%s5 + $0x248] sm:$0xff]
        %v5778 = vld [vmem:[%s5 + $0x250] sm:$0xff]
        %v5779 = vld [vmem:[%s5 + $0x258] sm:$0xff]
        %v5780 = vld [vmem:[%s5 + $0x260] sm:$0xff]
        %v5781 = vld [vmem:[%s5 + $0x268] sm:$0xff]
        %v5782 = vld [vmem:[%s5 + $0x270] sm:$0xff]
        %v5783 = vld [vmem:[%s5 + $0x278] sm:$0xff]
        %v5784 = vld [vmem:[%s5 + $0x280] sm:$0xff]
        %v5785 = vld [vmem:[%s5 + $0x288] sm:$0xff]
        %v5786 = vld [vmem:[%s5 + $0x290] sm:$0xff]
        %v5787 = vld [vmem:[%s5 + $0x298] sm:$0xff]
        %v5788 = vld [vmem:[%s5 + $0x2a0] sm:$0xff]
        %v5789 = vld [vmem:[%s5 + $0x2a8] sm:$0xff]
        %v5790 = vld [vmem:[%s5 + $0x2b0] sm:$0xff]
        %v5791 = vld [vmem:[%s5 + $0x2b8] sm:$0xff]
        %v5792 = vld [vmem:[%s5 + $0x2c0] sm:$0xff]
        %v5793 = vld [vmem:[%s5 + $0x2c8] sm:$0xff]
        %v5794 = vld [vmem:[%s5 + $0x2d0] sm:$0xff]
        %v5795 = vld [vmem:[%s5 + $0x2d8] sm:$0xff]
        %v5796 = vld [vmem:[%s5 + $0x2e0] sm:$0xff]
        %v5797 = vld [vmem:[%s5 + $0x2e8] sm:$0xff]
        %v5798 = vld [vmem:[%s5 + $0x2f0] sm:$0xff]
        %v5799 = vld [vmem:[%s5 + $0x2f8] sm:$0xff]
        %v5800 = vld [vmem:[%s5 + $0x300] sm:$0xff]
        %v5801 = vld [vmem:[%s5 + $0x308] sm:$0xff]
        %v5802 = vld [vmem:[%s5 + $0x310] sm:$0xff]
        %v5803 = vld [vmem:[%s5 + $0x318] sm:$0xff]
        %v5804 = vld [vmem:[%s5 + $0x320] sm:$0xff]
        %v5805 = vld [vmem:[%s5 + $0x328] sm:$0xff]
        %v5806 = vld [vmem:[%s5 + $0x330] sm:$0xff]
        %v5807 = vld [vmem:[%s5 + $0x338] sm:$0xff]
        %v5808 = vld [vmem:[%s5 + $0x340] sm:$0xff]
        %v5809 = vld [vmem:[%s5 + $0x348] sm:$0xff]
        %v5810 = vld [vmem:[%s5 + $0x350] sm:$0xff]
        %v5811 = vld [vmem:[%s5 + $0x358] sm:$0xff]
        %v5812 = vld [vmem:[%s5 + $0x360] sm:$0xff]
        %v5813 = vld [vmem:[%s5 + $0x368] sm:$0xff]
        %v5814 = vld [vmem:[%s5 + $0x370] sm:$0xff]
        %v5815 = vld [vmem:[%s5 + $0x378] sm:$0xff]
        %v5816 = vld [vmem:[%s5 + $0x380] sm:$0xff]
        %v5817 = vld [vmem:[%s5 + $0x388] sm:$0xff]
        %v5818 = vld [vmem:[%s5 + $0x390] sm:$0xff]
        %v5819 = vld [vmem:[%s5 + $0x398] sm:$0xff]
        %v5820 = vld [vmem:[%s5 + $0x3a0] sm:$0xff]
        %v5821 = vld [vmem:[%s5 + $0x3a8] sm:$0xff]
        %v5822 = vld [vmem:[%s5 + $0x3b0] sm:$0xff]
        %v5823 = vld [vmem:[%s5 + $0x3b8] sm:$0xff]
        %v5824 = vld [vmem:[%s5 + $0x3c0] sm:$0xff]
        %v5825 = vld [vmem:[%s5 + $0x3c8] sm:$0xff]
        %v5826 = vld [vmem:[%s5 + $0x3d0] sm:$0xff]
        %v5827 = vld [vmem:[%s5 + $0x3d8] sm:$0xff]
        %v5828 = vld [vmem:[%s5 + $0x3e0] sm:$0xff]
        %v5829 = vld [vmem:[#allocation11] sm:$0x3]
        %v5831 = vlaneseq
        %v5832 = vshrl.u32 %v5831, 7
        %v5833 = vsub.s32 0, %v5832
        %v5834 = vrot.slane %v5829, %v5833
        %v5835 = vlaneseq
        %v5836 = vshrl.u32 %v5835, 7
        %v5837 = vsub.s32 1, %v5836
        %v5838 = vrot.slane %v5829, %v5837
        %v5966 = vunpack.c.l.b16 %v5704
        %v5967 = vunpack.c.h.b16 %v5704
        %v5968 = vunpack.c.l.b16 %v5705
        %v5969 = vunpack.c.h.b16 %v5705
        %v5970 = vunpack.c.l.b16 %v5706
        %v5971 = vunpack.c.h.b16 %v5706
        %v5972 = vunpack.c.l.b16 %v5707
        %v5973 = vunpack.c.h.b16 %v5707
        %v5974 = vunpack.c.l.b16 %v5708
        %v5975 = vunpack.c.h.b16 %v5708
        %v5976 = vunpack.c.l.b16 %v5709
        %v5977 = vunpack.c.h.b16 %v5709
        %v5978 = vunpack.c.l.b16 %v5710
        %v5979 = vunpack.c.h.b16 %v5710
        %v5980 = vunpack.c.l.b16 %v5711
        %v5981 = vunpack.c.h.b16 %v5711
        %v5982 = vunpack.c.l.b16 %v5712
        %v5983 = vunpack.c.h.b16 %v5712
        %v5984 = vunpack.c.l.b16 %v5713
        %v5985 = vunpack.c.h.b16 %v5713
        %v5986 = vunpack.c.l.b16 %v5714
        %v5987 = vunpack.c.h.b16 %v5714
        %v5988 = vunpack.c.l.b16 %v5715
        %v5989 = vunpack.c.h.b16 %v5715
        %v5990 = vunpack.c.l.b16 %v5716
        %v5991 = vunpack.c.h.b16 %v5716
        %v5992 = vunpack.c.l.b16 %v5717
        %v5993 = vunpack.c.h.b16 %v5717
        %v5994 = vunpack.c.l.b16 %v5718
        %v5995 = vunpack.c.h.b16 %v5718
        %v5996 = vunpack.c.l.b16 %v5719
        %v5997 = vunpack.c.h.b16 %v5719
        %v5998 = vunpack.c.l.b16 %v5720
        %v5999 = vunpack.c.h.b16 %v5720
        %v6000 = vunpack.c.l.b16 %v5721
        %v6001 = vunpack.c.h.b16 %v5721
        %v6002 = vunpack.c.l.b16 %v5722
        %v6003 = vunpack.c.h.b16 %v5722
        %v6004 = vunpack.c.l.b16 %v5723
        %v6005 = vunpack.c.h.b16 %v5723
        %v6006 = vunpack.c.l.b16 %v5724
        %v6007 = vunpack.c.h.b16 %v5724
        %v6008 = vunpack.c.l.b16 %v5725
        %v6009 = vunpack.c.h.b16 %v5725
        %v6010 = vunpack.c.l.b16 %v5726
        %v6011 = vunpack.c.h.b16 %v5726
        %v6012 = vunpack.c.l.b16 %v5727
        %v6013 = vunpack.c.h.b16 %v5727
        %v6014 = vunpack.c.l.b16 %v5728
        %v6015 = vunpack.c.h.b16 %v5728
        %v6016 = vunpack.c.l.b16 %v5729
        %v6017 = vunpack.c.h.b16 %v5729
        %v6018 = vunpack.c.l.b16 %v5730
        %v6019 = vunpack.c.h.b16 %v5730
        %v6020 = vunpack.c.l.b16 %v5731
        %v6021 = vunpack.c.h.b16 %v5731
        %v6022 = vunpack.c.l.b16 %v5732
        %v6023 = vunpack.c.h.b16 %v5732
        %v6024 = vunpack.c.l.b16 %v5733
        %v6025 = vunpack.c.h.b16 %v5733
        %v6026 = vunpack.c.l.b16 %v5734
        %v6027 = vunpack.c.h.b16 %v5734
        %v6028 = vunpack.c.l.b16 %v5735
        %v6029 = vunpack.c.h.b16 %v5735
        %v6030 = vunpack.c.l.b16 %v5736
        %v6031 = vunpack.c.h.b16 %v5736
        %v6032 = vunpack.c.l.b16 %v5737
        %v6033 = vunpack.c.h.b16 %v5737
        %v6034 = vunpack.c.l.b16 %v5738
        %v6035 = vunpack.c.h.b16 %v5738
        %v6036 = vunpack.c.l.b16 %v5739
        %v6037 = vunpack.c.h.b16 %v5739
        %v6038 = vunpack.c.l.b16 %v5740
        %v6039 = vunpack.c.h.b16 %v5740
        %v6040 = vunpack.c.l.b16 %v5741
        %v6041 = vunpack.c.h.b16 %v5741
        %v6042 = vunpack.c.l.b16 %v5742
        %v6043 = vunpack.c.h.b16 %v5742
        %v6044 = vunpack.c.l.b16 %v5743
        %v6045 = vunpack.c.h.b16 %v5743
        %v6046 = vunpack.c.l.b16 %v5744
        %v6047 = vunpack.c.h.b16 %v5744
        %v6048 = vunpack.c.l.b16 %v5745
        %v6049 = vunpack.c.h.b16 %v5745
        %v6050 = vunpack.c.l.b16 %v5746
        %v6051 = vunpack.c.h.b16 %v5746
        %v6052 = vunpack.c.l.b16 %v5747
        %v6053 = vunpack.c.h.b16 %v5747
        %v6054 = vunpack.c.l.b16 %v5748
        %v6055 = vunpack.c.h.b16 %v5748
        %v6056 = vunpack.c.l.b16 %v5749
        %v6057 = vunpack.c.h.b16 %v5749
        %v6058 = vunpack.c.l.b16 %v5750
        %v6059 = vunpack.c.h.b16 %v5750
        %v6060 = vunpack.c.l.b16 %v5751
        %v6061 = vunpack.c.h.b16 %v5751
        %v6062 = vunpack.c.l.b16 %v5752
        %v6063 = vunpack.c.h.b16 %v5752
        %v6064 = vunpack.c.l.b16 %v5753
        %v6065 = vunpack.c.h.b16 %v5753
        %v6066 = vunpack.c.l.b16 %v5754
        %v6067 = vunpack.c.h.b16 %v5754
        %v6068 = vunpack.c.l.b16 %v5755
        %v6069 = vunpack.c.h.b16 %v5755
        %v6070 = vunpack.c.l.b16 %v5756
        %v6071 = vunpack.c.h.b16 %v5756
        %v6072 = vunpack.c.l.b16 %v5757
        %v6073 = vunpack.c.h.b16 %v5757
        %v6074 = vunpack.c.l.b16 %v5758
        %v6075 = vunpack.c.h.b16 %v5758
        %v6076 = vunpack.c.l.b16 %v5759
        %v6077 = vunpack.c.h.b16 %v5759
        %v6078 = vunpack.c.l.b16 %v5760
        %v6079 = vunpack.c.h.b16 %v5760
        %v6080 = vunpack.c.l.b16 %v5761
        %v6081 = vunpack.c.h.b16 %v5761
        %v6082 = vunpack.c.l.b16 %v5762
        %v6083 = vunpack.c.h.b16 %v5762
        %v6084 = vunpack.c.l.b16 %v5763
        %v6085 = vunpack.c.h.b16 %v5763
        %v6086 = vunpack.c.l.b16 %v5764
        %v6087 = vunpack.c.h.b16 %v5764
        %v6088 = vunpack.c.l.b16 %v5765
        %v6089 = vunpack.c.h.b16 %v5765
        %v6090 = vunpack.c.l.b16 %v5766
        %v6091 = vunpack.c.h.b16 %v5766
        %v6092 = vunpack.c.l.b16 %v5767
        %v6093 = vunpack.c.h.b16 %v5767
        %v6094 = vunpack.c.l.b16 %v5768
        %v6095 = vunpack.c.h.b16 %v5768
        %v6096 = vunpack.c.l.b16 %v5769
        %v6097 = vunpack.c.h.b16 %v5769
        %v6098 = vunpack.c.l.b16 %v5770
        %v6099 = vunpack.c.h.b16 %v5770
        %v6100 = vunpack.c.l.b16 %v5771
        %v6101 = vunpack.c.h.b16 %v5771
        %v6102 = vunpack.c.l.b16 %v5772
        %v6103 = vunpack.c.h.b16 %v5772
        %v6104 = vunpack.c.l.b16 %v5773
        %v6105 = vunpack.c.h.b16 %v5773
        %v6106 = vunpack.c.l.b16 %v5774
        %v6107 = vunpack.c.h.b16 %v5774
        %v6108 = vunpack.c.l.b16 %v5775
        %v6109 = vunpack.c.h.b16 %v5775
        %v6110 = vunpack.c.l.b16 %v5776
        %v6111 = vunpack.c.h.b16 %v5776
        %v6112 = vunpack.c.l.b16 %v5777
        %v6113 = vunpack.c.h.b16 %v5777
        %v6114 = vunpack.c.l.b16 %v5778
        %v6115 = vunpack.c.h.b16 %v5778
        %v6116 = vunpack.c.l.b16 %v5779
        %v6117 = vunpack.c.h.b16 %v5779
        %v6118 = vunpack.c.l.b16 %v5780
        %v6119 = vunpack.c.h.b16 %v5780
        %v6120 = vunpack.c.l.b16 %v5781
        %v6121 = vunpack.c.h.b16 %v5781
        %v6122 = vunpack.c.l.b16 %v5782
        %v6123 = vunpack.c.h.b16 %v5782
        %v6124 = vunpack.c.l.b16 %v5783
        %v6125 = vunpack.c.h.b16 %v5783
        %v6126 = vunpack.c.l.b16 %v5784
        %v6127 = vunpack.c.h.b16 %v5784
        %v6128 = vunpack.c.l.b16 %v5785
        %v6129 = vunpack.c.h.b16 %v5785
        %v6130 = vunpack.c.l.b16 %v5786
        %v6131 = vunpack.c.h.b16 %v5786
        %v6132 = vunpack.c.l.b16 %v5787
        %v6133 = vunpack.c.h.b16 %v5787
        %v6134 = vunpack.c.l.b16 %v5788
        %v6135 = vunpack.c.h.b16 %v5788
        %v6136 = vunpack.c.l.b16 %v5789
        %v6137 = vunpack.c.h.b16 %v5789
        %v6138 = vunpack.c.l.b16 %v5790
        %v6139 = vunpack.c.h.b16 %v5790
        %v6140 = vunpack.c.l.b16 %v5791
        %v6141 = vunpack.c.h.b16 %v5791
        %v6142 = vunpack.c.l.b16 %v5792
        %v6143 = vunpack.c.h.b16 %v5792
        %v6144 = vunpack.c.l.b16 %v5793
        %v6145 = vunpack.c.h.b16 %v5793
        %v6146 = vunpack.c.l.b16 %v5794
        %v6147 = vunpack.c.h.b16 %v5794
        %v6148 = vunpack.c.l.b16 %v5795
        %v6149 = vunpack.c.h.b16 %v5795
        %v6150 = vunpack.c.l.b16 %v5796
        %v6151 = vunpack.c.h.b16 %v5796
        %v6152 = vunpack.c.l.b16 %v5797
        %v6153 = vunpack.c.h.b16 %v5797
        %v6154 = vunpack.c.l.b16 %v5798
        %v6155 = vunpack.c.h.b16 %v5798
        %v6156 = vunpack.c.l.b16 %v5799
        %v6157 = vunpack.c.h.b16 %v5799
        %v6158 = vunpack.c.l.b16 %v5800
        %v6159 = vunpack.c.h.b16 %v5800
        %v6160 = vunpack.c.l.b16 %v5801
        %v6161 = vunpack.c.h.b16 %v5801
        %v6162 = vunpack.c.l.b16 %v5802
        %v6163 = vunpack.c.h.b16 %v5802
        %v6164 = vunpack.c.l.b16 %v5803
        %v6165 = vunpack.c.h.b16 %v5803
        %v6166 = vunpack.c.l.b16 %v5804
        %v6167 = vunpack.c.h.b16 %v5804
        %v6168 = vunpack.c.l.b16 %v5805
        %v6169 = vunpack.c.h.b16 %v5805
        %v6170 = vunpack.c.l.b16 %v5806
        %v6171 = vunpack.c.h.b16 %v5806
        %v6172 = vunpack.c.l.b16 %v5807
        %v6173 = vunpack.c.h.b16 %v5807
        %v6174 = vunpack.c.l.b16 %v5808
        %v6175 = vunpack.c.h.b16 %v5808
        %v6176 = vunpack.c.l.b16 %v5809
        %v6177 = vunpack.c.h.b16 %v5809
        %v6178 = vunpack.c.l.b16 %v5810
        %v6179 = vunpack.c.h.b16 %v5810
        %v6180 = vunpack.c.l.b16 %v5811
        %v6181 = vunpack.c.h.b16 %v5811
        %v6182 = vunpack.c.l.b16 %v5812
        %v6183 = vunpack.c.h.b16 %v5812
        %v6184 = vunpack.c.l.b16 %v5813
        %v6185 = vunpack.c.h.b16 %v5813
        %v6186 = vunpack.c.l.b16 %v5814
        %v6187 = vunpack.c.h.b16 %v5814
        %v6188 = vunpack.c.l.b16 %v5815
        %v6189 = vunpack.c.h.b16 %v5815
        %v6190 = vunpack.c.l.b16 %v5816
        %v6191 = vunpack.c.h.b16 %v5816
        %v6192 = vunpack.c.l.b16 %v5817
        %v6193 = vunpack.c.h.b16 %v5817
        %v6194 = vunpack.c.l.b16 %v5818
        %v6195 = vunpack.c.h.b16 %v5818
        %v6196 = vunpack.c.l.b16 %v5819
        %v6197 = vunpack.c.h.b16 %v5819
        %v6198 = vunpack.c.l.b16 %v5820
        %v6199 = vunpack.c.h.b16 %v5820
        %v6200 = vunpack.c.l.b16 %v5821
        %v6201 = vunpack.c.h.b16 %v5821
        %v6202 = vunpack.c.l.b16 %v5822
        %v6203 = vunpack.c.h.b16 %v5822
        %v6204 = vunpack.c.l.b16 %v5823
        %v6205 = vunpack.c.h.b16 %v5823
        %v6206 = vunpack.c.l.b16 %v5824
        %v6207 = vunpack.c.h.b16 %v5824
        %v6208 = vunpack.c.l.b16 %v5825
        %v6209 = vunpack.c.h.b16 %v5825
        %v6210 = vunpack.c.l.b16 %v5826
        %v6211 = vunpack.c.h.b16 %v5826
        %v6212 = vunpack.c.l.b16 %v5827
        %v6213 = vunpack.c.h.b16 %v5827
        %v6214 = vunpack.c.l.b16 %v5828
        %v6215 = vunpack.c.h.b16 %v5828
        %v6216 = vpack.c.b16 %v5968, %v5966
        %v6217 = vpack.c.b16 %v5969, %v5967
        %v6218 = vpack.c.b16 %v5972, %v5970
        %v6219 = vpack.c.b16 %v5973, %v5971
        %v6220 = vpack.c.b16 %v5976, %v5974
        %v6221 = vpack.c.b16 %v5977, %v5975
        %v6222 = vpack.c.b16 %v5980, %v5978
        %v6223 = vpack.c.b16 %v5981, %v5979
        %v6224 = vpack.c.b16 %v5984, %v5982
        %v6225 = vpack.c.b16 %v5985, %v5983
        %v6226 = vpack.c.b16 %v5988, %v5986
        %v6227 = vpack.c.b16 %v5989, %v5987
        %v6228 = vpack.c.b16 %v5992, %v5990
        %v6229 = vpack.c.b16 %v5993, %v5991
        %v6230 = vpack.c.b16 %v5996, %v5994
        %v6231 = vpack.c.b16 %v5997, %v5995
        %v6232 = vpack.c.b16 %v6000, %v5998
        %v6233 = vpack.c.b16 %v6001, %v5999
        %v6234 = vpack.c.b16 %v6004, %v6002
        %v6235 = vpack.c.b16 %v6005, %v6003
        %v6236 = vpack.c.b16 %v6008, %v6006
        %v6237 = vpack.c.b16 %v6009, %v6007
        %v6238 = vpack.c.b16 %v6012, %v6010
        %v6239 = vpack.c.b16 %v6013, %v6011
        %v6240 = vpack.c.b16 %v6016, %v6014
        %v6241 = vpack.c.b16 %v6017, %v6015
        %v6242 = vpack.c.b16 %v6020, %v6018
        %v6243 = vpack.c.b16 %v6021, %v6019
        %v6244 = vpack.c.b16 %v6024, %v6022
        %v6245 = vpack.c.b16 %v6025, %v6023
        %v6246 = vpack.c.b16 %v6028, %v6026
        %v6247 = vpack.c.b16 %v6029, %v6027
        %v6248 = vpack.c.b16 %v6032, %v6030
        %v6249 = vpack.c.b16 %v6033, %v6031
        %v6250 = vpack.c.b16 %v6036, %v6034
        %v6251 = vpack.c.b16 %v6037, %v6035
        %v6252 = vpack.c.b16 %v6040, %v6038
        %v6253 = vpack.c.b16 %v6041, %v6039
        %v6254 = vpack.c.b16 %v6044, %v6042
        %v6255 = vpack.c.b16 %v6045, %v6043
        %v6256 = vpack.c.b16 %v6048, %v6046
        %v6257 = vpack.c.b16 %v6049, %v6047
        %v6258 = vpack.c.b16 %v6052, %v6050
        %v6259 = vpack.c.b16 %v6053, %v6051
        %v6260 = vpack.c.b16 %v6056, %v6054
        %v6261 = vpack.c.b16 %v6057, %v6055
        %v6262 = vpack.c.b16 %v6060, %v6058
        %v6263 = vpack.c.b16 %v6061, %v6059
        %v6264 = vpack.c.b16 %v6064, %v6062
        %v6265 = vpack.c.b16 %v6065, %v6063
        %v6266 = vpack.c.b16 %v6068, %v6066
        %v6267 = vpack.c.b16 %v6069, %v6067
        %v6268 = vpack.c.b16 %v6072, %v6070
        %v6269 = vpack.c.b16 %v6073, %v6071
        %v6270 = vpack.c.b16 %v6076, %v6074
        %v6271 = vpack.c.b16 %v6077, %v6075
        %v6272 = vpack.c.b16 %v6080, %v6078
        %v6273 = vpack.c.b16 %v6081, %v6079
        %v6274 = vpack.c.b16 %v6084, %v6082
        %v6275 = vpack.c.b16 %v6085, %v6083
        %v6276 = vpack.c.b16 %v6088, %v6086
        %v6277 = vpack.c.b16 %v6089, %v6087
        %v6278 = vpack.c.b16 %v6092, %v6090
        %v6279 = vpack.c.b16 %v6093, %v6091
        %v6280 = vpack.c.b16 %v6096, %v6094
        %v6281 = vpack.c.b16 %v6097, %v6095
        %v6282 = vpack.c.b16 %v6100, %v6098
        %v6283 = vpack.c.b16 %v6101, %v6099
        %v6284 = vpack.c.b16 %v6104, %v6102
        %v6285 = vpack.c.b16 %v6105, %v6103
        %v6286 = vpack.c.b16 %v6108, %v6106
        %v6287 = vpack.c.b16 %v6109, %v6107
        %v6288 = vpack.c.b16 %v6112, %v6110
        %v6289 = vpack.c.b16 %v6113, %v6111
        %v6290 = vpack.c.b16 %v6116, %v6114
        %v6291 = vpack.c.b16 %v6117, %v6115
        %v6292 = vpack.c.b16 %v6120, %v6118
        %v6293 = vpack.c.b16 %v6121, %v6119
        %v6294 = vpack.c.b16 %v6124, %v6122
        %v6295 = vpack.c.b16 %v6125, %v6123
        %v6296 = vpack.c.b16 %v6128, %v6126
        %v6297 = vpack.c.b16 %v6129, %v6127
        %v6298 = vpack.c.b16 %v6132, %v6130
        %v6299 = vpack.c.b16 %v6133, %v6131
        %v6300 = vpack.c.b16 %v6136, %v6134
        %v6301 = vpack.c.b16 %v6137, %v6135
        %v6302 = vpack.c.b16 %v6140, %v6138
        %v6303 = vpack.c.b16 %v6141, %v6139
        %v6304 = vpack.c.b16 %v6144, %v6142
        %v6305 = vpack.c.b16 %v6145, %v6143
        %v6306 = vpack.c.b16 %v6148, %v6146
        %v6307 = vpack.c.b16 %v6149, %v6147
        %v6308 = vpack.c.b16 %v6152, %v6150
        %v6309 = vpack.c.b16 %v6153, %v6151
        %v6310 = vpack.c.b16 %v6156, %v6154
        %v6311 = vpack.c.b16 %v6157, %v6155
        %v6312 = vpack.c.b16 %v6160, %v6158
        %v6313 = vpack.c.b16 %v6161, %v6159
        %v6314 = vpack.c.b16 %v6164, %v6162
        %v6315 = vpack.c.b16 %v6165, %v6163
        %v6316 = vpack.c.b16 %v6168, %v6166
        %v6317 = vpack.c.b16 %v6169, %v6167
        %v6318 = vpack.c.b16 %v6172, %v6170
        %v6319 = vpack.c.b16 %v6173, %v6171
        %v6320 = vpack.c.b16 %v6176, %v6174
        %v6321 = vpack.c.b16 %v6177, %v6175
        %v6322 = vpack.c.b16 %v6180, %v6178
        %v6323 = vpack.c.b16 %v6181, %v6179
        %v6324 = vpack.c.b16 %v6184, %v6182
        %v6325 = vpack.c.b16 %v6185, %v6183
        %v6326 = vpack.c.b16 %v6188, %v6186
        %v6327 = vpack.c.b16 %v6189, %v6187
        %v6328 = vpack.c.b16 %v6192, %v6190
        %v6329 = vpack.c.b16 %v6193, %v6191
        %v6330 = vpack.c.b16 %v6196, %v6194
        %v6331 = vpack.c.b16 %v6197, %v6195
        %v6332 = vpack.c.b16 %v6200, %v6198
        %v6333 = vpack.c.b16 %v6201, %v6199
        %v6334 = vpack.c.b16 %v6204, %v6202
        %v6335 = vpack.c.b16 %v6205, %v6203
        %v6336 = vpack.c.b16 %v6208, %v6206
        %v6337 = vpack.c.b16 %v6209, %v6207
        %v6338 = vpack.c.b16 %v6212, %v6210
        %v6339 = vpack.c.b16 %v6213, %v6211
        %v6340 = vpack.c.b16 %v6214, %v6214
        %v6341 = vpack.c.b16 %v6215, %v6215
        %v6467 = vsel %vm5003, %v5703, 0
        %v6470 = vsel %vm5007, %v6340, 0
        %v6473 = vsel %vm5007, %v6341, 0
        %6475 = vmatprep.subr.bf16.mxu0 %v6217
        %6476 = vmatpush1.bf16.msra.mxu0 %v6216
        %6477 = vmatprep.subr.bf16.mxu0 %v6219
        %6478 = vmatpush1.bf16.msra.mxu0 %v6218
        %6479 = vmatprep.subr.bf16.mxu0 %v6221
        %6480 = vmatpush1.bf16.msra.mxu0 %v6220
        %6481 = vmatprep.subr.bf16.mxu0 %v6223
        %6482 = vmatpush1.bf16.msra.mxu0 %v6222
        %6483 = vmatprep.subr.bf16.mxu0 %v6225
        %6484 = vmatpush1.bf16.msra.mxu0 %v6224
        %6485 = vmatprep.subr.bf16.mxu0 %v6227
        %6486 = vmatpush1.bf16.msra.mxu0 %v6226
        %6487 = vmatprep.subr.bf16.mxu0 %v6229
        %6488 = vmatpush1.bf16.msra.mxu0 %v6228
        %6489 = vmatprep.subr.bf16.mxu0 %v6231
        %6490 = vmatpush1.bf16.msra.mxu0 %v6230
        %6491 = vmatprep.subr.bf16.mxu0 %v6233
        %6492 = vmatpush1.bf16.msra.mxu0 %v6232
        %6493 = vmatprep.subr.bf16.mxu0 %v6235
        %6494 = vmatpush1.bf16.msra.mxu0 %v6234
        %6495 = vmatprep.subr.bf16.mxu0 %v6237
        %6496 = vmatpush1.bf16.msra.mxu0 %v6236
        %6497 = vmatprep.subr.bf16.mxu0 %v6239
        %6498 = vmatpush1.bf16.msra.mxu0 %v6238
        %6499 = vmatprep.subr.bf16.mxu0 %v6241
        %6500 = vmatpush1.bf16.msra.mxu0 %v6240
        %6501 = vmatprep.subr.bf16.mxu0 %v6243
        %6502 = vmatpush1.bf16.msra.mxu0 %v6242
        %6503 = vmatprep.subr.bf16.mxu0 %v6245
        %6504 = vmatpush1.bf16.msra.mxu0 %v6244
        %6505 = vmatprep.subr.bf16.mxu0 %v6247
        %6506 = vmatpush1.bf16.msra.mxu0 %v6246
        %6507 = vmatprep.mubr.bf16.mxu0 %v5697
        %6508 = vmatmul.mubr.bf16.gmra.mrb[0].mxu0 %v5696
        %v6509 = vpop.f32.mrb[0].mxu0
        %v6510 = vadd.f32 %v5834, %v6509
        %v6511 = vpop.f32.mrb[0].mxu0
        %v6512 = vadd.f32 %v5838, %v6511
        %v6513 = vpop.f32.mrb[0].mxu0
        %v6514 = vpop.f32.mrb[0].mxu0
        %6515 = vdwg.mxu0
        %6516 = vmatprep.subr.bf16.mxu0 %v6249
        %6517 = vmatpush1.bf16.msra.mxu0 %v6248
        %6518 = vmatprep.subr.bf16.mxu0 %v6251
        %6519 = vmatpush1.bf16.msra.mxu0 %v6250
        %6520 = vmatprep.subr.bf16.mxu0 %v6253
        %6521 = vmatpush1.bf16.msra.mxu0 %v6252
        %6522 = vmatprep.subr.bf16.mxu0 %v6255
        %6523 = vmatpush1.bf16.msra.mxu0 %v6254
        %6524 = vmatprep.subr.bf16.mxu0 %v6257
        %6525 = vmatpush1.bf16.msra.mxu0 %v6256
        %6526 = vmatprep.subr.bf16.mxu0 %v6259
        %6527 = vmatpush1.bf16.msra.mxu0 %v6258
        %6528 = vmatprep.subr.bf16.mxu0 %v6261
        %6529 = vmatpush1.bf16.msra.mxu0 %v6260
        %6530 = vmatprep.subr.bf16.mxu0 %v6263
        %6531 = vmatpush1.bf16.msra.mxu0 %v6262
        %6532 = vmatprep.subr.bf16.mxu0 %v6265
        %6533 = vmatpush1.bf16.msra.mxu0 %v6264
        %6534 = vmatprep.subr.bf16.mxu0 %v6267
        %6535 = vmatpush1.bf16.msra.mxu0 %v6266
        %6536 = vmatprep.subr.bf16.mxu0 %v6269
        %6537 = vmatpush1.bf16.msra.mxu0 %v6268
        %6538 = vmatprep.subr.bf16.mxu0 %v6271
        %6539 = vmatpush1.bf16.msra.mxu0 %v6270
        %6540 = vmatprep.subr.bf16.mxu0 %v6273
        %6541 = vmatpush1.bf16.msra.mxu0 %v6272
        %6542 = vmatprep.subr.bf16.mxu0 %v6275
        %6543 = vmatpush1.bf16.msra.mxu0 %v6274
        %6544 = vmatprep.subr.bf16.mxu0 %v6277
        %6545 = vmatpush1.bf16.msra.mxu0 %v6276
        %6546 = vmatprep.subr.bf16.mxu0 %v6279
        %6547 = vmatpush1.bf16.msra.mxu0 %v6278
        %6548 = vmatprep.mubr.bf16.mxu0 %v5699
        %6549 = vmatmul.mubr.bf16.gmra.mrb[0].mxu0 %v5698
        %v6550 = vpop.f32.mrb[0].mxu0
        %v6551 = vadd.f32 %v6510, %v6550
        %v6552 = vpop.f32.mrb[0].mxu0
        %v6553 = vadd.f32 %v6512, %v6552
        %v6554 = vpop.f32.mrb[0].mxu0
        %v6555 = vpop.f32.mrb[0].mxu0
        %6556 = vdwg.mxu0
        %6557 = vmatprep.subr.bf16.mxu0 %v6281
        %6558 = vmatpush1.bf16.msra.mxu0 %v6280
        %6559 = vmatprep.subr.bf16.mxu0 %v6283
        %6560 = vmatpush1.bf16.msra.mxu0 %v6282
        %6561 = vmatprep.subr.bf16.mxu0 %v6285
        %6562 = vmatpush1.bf16.msra.mxu0 %v6284
        %6563 = vmatprep.subr.bf16.mxu0 %v6287
        %6564 = vmatpush1.bf16.msra.mxu0 %v6286
        %6565 = vmatprep.subr.bf16.mxu0 %v6289
        %6566 = vmatpush1.bf16.msra.mxu0 %v6288
        %6567 = vmatprep.subr.bf16.mxu0 %v6291
        %6568 = vmatpush1.bf16.msra.mxu0 %v6290
        %6569 = vmatprep.subr.bf16.mxu0 %v6293
        %6570 = vmatpush1.bf16.msra.mxu0 %v6292
        %6571 = vmatprep.subr.bf16.mxu0 %v6295
        %6572 = vmatpush1.bf16.msra.mxu0 %v6294
        %6573 = vmatprep.subr.bf16.mxu0 %v6297
        %6574 = vmatpush1.bf16.msra.mxu0 %v6296
        %6575 = vmatprep.subr.bf16.mxu0 %v6299
        %6576 = vmatpush1.bf16.msra.mxu0 %v6298
        %6577 = vmatprep.subr.bf16.mxu0 %v6301
        %6578 = vmatpush1.bf16.msra.mxu0 %v6300
        %6579 = vmatprep.subr.bf16.mxu0 %v6303
        %6580 = vmatpush1.bf16.msra.mxu0 %v6302
        %6581 = vmatprep.subr.bf16.mxu0 %v6305
        %6582 = vmatpush1.bf16.msra.mxu0 %v6304
        %6583 = vmatprep.subr.bf16.mxu0 %v6307
        %6584 = vmatpush1.bf16.msra.mxu0 %v6306
        %6585 = vmatprep.subr.bf16.mxu0 %v6309
        %6586 = vmatpush1.bf16.msra.mxu0 %v6308
        %6587 = vmatprep.subr.bf16.mxu0 %v6311
        %6588 = vmatpush1.bf16.msra.mxu0 %v6310
        %6589 = vmatprep.mubr.bf16.mxu0 %v5701
        %6590 = vmatmul.mubr.bf16.gmra.mrb[0].mxu0 %v5700
        %v6591 = vpop.f32.mrb[0].mxu0
        %v6592 = vadd.f32 %v6551, %v6591
        %v6593 = vpop.f32.mrb[0].mxu0
        %v6594 = vadd.f32 %v6553, %v6593
        %v6595 = vpop.f32.mrb[0].mxu0
        %v6596 = vpop.f32.mrb[0].mxu0
        %6597 = vdwg.mxu0
        %6598 = vmatprep.subr.bf16.mxu0 %v6313
        %6599 = vmatpush1.bf16.msra.mxu0 %v6312
        %6600 = vmatprep.subr.bf16.mxu0 %v6315
        %6601 = vmatpush1.bf16.msra.mxu0 %v6314
        %6602 = vmatprep.subr.bf16.mxu0 %v6317
        %6603 = vmatpush1.bf16.msra.mxu0 %v6316
        %6604 = vmatprep.subr.bf16.mxu0 %v6319
        %6605 = vmatpush1.bf16.msra.mxu0 %v6318
        %6606 = vmatprep.subr.bf16.mxu0 %v6321
        %6607 = vmatpush1.bf16.msra.mxu0 %v6320
        %6608 = vmatprep.subr.bf16.mxu0 %v6323
        %6609 = vmatpush1.bf16.msra.mxu0 %v6322
        %6610 = vmatprep.subr.bf16.mxu0 %v6325
        %6611 = vmatpush1.bf16.msra.mxu0 %v6324
        %6612 = vmatprep.subr.bf16.mxu0 %v6327
        %6613 = vmatpush1.bf16.msra.mxu0 %v6326
        %6614 = vmatprep.subr.bf16.mxu0 %v6329
        %6615 = vmatpush1.bf16.msra.mxu0 %v6328
        %6616 = vmatprep.subr.bf16.mxu0 %v6331
        %6617 = vmatpush1.bf16.msra.mxu0 %v6330
        %6618 = vmatprep.subr.bf16.mxu0 %v6333
        %6619 = vmatpush1.bf16.msra.mxu0 %v6332
        %6620 = vmatprep.subr.bf16.mxu0 %v6335
        %6621 = vmatpush1.bf16.msra.mxu0 %v6334
        %6622 = vmatprep.subr.bf16.mxu0 %v6337
        %6623 = vmatpush1.bf16.msra.mxu0 %v6336
        %6624 = vmatprep.subr.bf16.mxu0 %v6339
        %6625 = vmatpush1.bf16.msra.mxu0 %v6338
        %6626 = vmatprep.subr.bf16.mxu0 %v6473
        %6627 = vmatpush1.bf16.msra.mxu0 %v6470
        %6628 = vmatprep.subr.bf16.mxu0 0
        %6629 = vmatpush1.bf16.msra.mxu0 0
        %6630 = vmatprep.mubr.bf16.mxu0 %v6467
        %6631 = vmatmul.mubr.bf16.gmra.mrb[0].mxu0 %v5702
        %v6632 = vpop.f32.mrb[0].mxu0
        %v6633 = vadd.f32 %v6592, %v6632
        %v6634 = vpop.f32.mrb[0].mxu0
        %v6635 = vadd.f32 %v6594, %v6634
        %v6636 = vpop.f32.mrb[0].mxu0
        %v6637 = vpop.f32.mrb[0].mxu0
        %6638 = vdwg.mxu0
        %vm6639 = vcmask 203776
        %v6640 = vsel %vm6639, %v6633, -inf
        %6641 = vmax.xlane.f32.xlu0 %v6640
        %v6642 = vpop.xlane.xlu0 %6641
        %v6643 = vsub.f32 %v6633, %v6642
        %v6644 = vmul.f32 %v6643, 1.442695
        %v6645 = vpow.pop %v6644
        %v6646 = vsel %vm6639, %v6645, 0.0
        %6647 = vadd.xlane.f32.xlu0 %v6646
        %v6648 = vpop.xlane.xlu0 %6647
        %v6649 = vrcp.pop %v6648
        %v6650 = vmul.f32 %v6645, %v6649
        %6651 = vst.msk [vmem:[%s361] sm:$0xff] %vm6639, %v6650
        %vm6652 = vcmask 408776
        %v6653 = vsel %vm6652, %v6633, -inf
        %6654 = vmax.xlane.f32.xlu0 %v6653
        %v6655 = vpop.xlane.xlu0 %6654
        %v6656 = vsub.f32 %v6633, %v6655
        %v6657 = vmul.f32 %v6656, 1.442695
        %v6658 = vpow.pop %v6657
        %6660 = vrot.lane.b32.xlu0 %v6658, 103
        %v6661 = vpop.permute.xlu0 %6660
        %v6663 = vsel %vm6639, %v6661, 0.0
        %6664 = vadd.xlane.f32.xlu0 %v6663
        %v6665 = vpop.xlane.xlu0 %6664
        %v6666 = vrcp.pop %v6665
        %v6667 = vmul.f32 %v6658, %v6666
        %6668 = vst.msk [vmem:[%s361] sm:$0xff] %vm6652, %v6667
        %vm6669 = vcmask 613776
        %v6670 = vsel %vm6669, %v6633, -inf
        %6671 = vmax.xlane.f32.xlu0 %v6670
        %v6672 = vpop.xlane.xlu0 %6671
        %v6673 = vsub.f32 %v6633, %v6672
        %v6674 = vmul.f32 %v6673, 1.442695
        %v6675 = vpow.pop %v6674
        %6677 = vrot.lane.b32.xlu0 %v6675, 78
        %v6678 = vpop.permute.xlu0 %6677
        %v6680 = vsel %vm6639, %v6678, 0.0
        %6681 = vadd.xlane.f32.xlu0 %v6680
        %v6682 = vpop.xlane.xlu0 %6681
        %v6683 = vrcp.pop %v6682
        %v6684 = vmul.f32 %v6675, %v6683
        %6685 = vst.msk [vmem:[%s361] sm:$0xff] %vm6669, %v6684
        %vm6686 = vcmask 818776
        %v6687 = vsel %vm6686, %v6633, -inf
        %6688 = vmax.xlane.f32.xlu0 %v6687
        %v6689 = vpop.xlane.xlu0 %6688
        %v6690 = vsub.f32 %v6633, %v6689
        %v6691 = vmul.f32 %v6690, 1.442695
        %v6692 = vpow.pop %v6691
        %6694 = vrot.lane.b32.xlu0 %v6692, 53
        %v6695 = vpop.permute.xlu0 %6694
        %v6697 = vsel %vm6639, %v6695, 0.0
        %6698 = vadd.xlane.f32.xlu0 %v6697
        %v6699 = vpop.xlane.xlu0 %6698
        %v6700 = vrcp.pop %v6699
        %v6701 = vmul.f32 %v6692, %v6700
        %6702 = vst.msk [vmem:[%s361] sm:$0xff] %vm6686, %v6701
        %vm6703 = vcmask 1023776
        %v6704 = vsel %vm6703, %v6633, -inf
        %6705 = vmax.xlane.f32.xlu0 %v6704
        %v6706 = vpop.xlane.xlu0 %6705
        %v6707 = vsub.f32 %v6633, %v6706
        %v6708 = vmul.f32 %v6707, 1.442695
        %v6709 = vpow.pop %v6708
        %6711 = vrot.lane.b32.xlu0 %v6709, 28
        %v6712 = vpop.permute.xlu0 %6711
        %v6714 = vsel %vm6639, %v6712, 0.0
        %6715 = vadd.xlane.f32.xlu0 %v6714
        %v6716 = vpop.xlane.xlu0 %6715
        %v6717 = vrcp.pop %v6716
        %v6718 = vmul.f32 %v6709, %v6717
        %6719 = vst.msk [vmem:[%s361] sm:$0xff] %vm6703, %v6718
        %vm6720 = vcmask 1048552
        %v6721 = vsel %vm6720, %v6633, -inf
        %vm6722 = vcmask 179200
        %v6723 = vsel %vm6722, %v6635, -inf
        %v6724 = vmax.f32 %v6721, %v6723
        %6725 = vmax.xlane.f32.xlu0 %v6724
        %v6726 = vpop.xlane.xlu0 %6725
        %v6727 = vsub.f32 %v6633, %v6726
        %v6728 = vsub.f32 %v6635, %v6726
        %v6729 = vmul.f32 %v6727, 1.442695
        %v6730 = vpow.pop %v6729
        %v6731 = vmul.f32 %v6728, 1.442695
        %v6732 = vpow.pop %v6731
        %6735 = vrot.lane.b32.xlu0 %v6730, 3
        %v6736 = vpop.permute.xlu0 %6735
        %6737 = vrot.lane.b32.xlu0 %v6732, 3
        %v6738 = vpop.permute.xlu0 %6737
        %vm6739 = vcmask 23552
        %v6740 = vsel %vm6739, %v6736, %v6738
        %v6742 = vsel %vm6639, %v6740, 0.0
        %6743 = vadd.xlane.f32.xlu0 %v6742
        %v6744 = vpop.xlane.xlu0 %6743
        %v6745 = vrcp.pop %v6744
        %v6746 = vmul.f32 %v6730, %v6745
        %v6747 = vmul.f32 %v6732, %v6745
        %6748 = vst.msk [vmem:[%s361] sm:$0xff] %vm6720, %v6746
        %6749 = vst.msk [vmem:[%s361 + $0x8] sm:$0xff] %vm6722, %v6747
        %vm6750 = vcmask 384176
        %v6751 = vsel %vm6750, %v6635, -inf
        %6752 = vmax.xlane.f32.xlu0 %v6751
        %v6753 = vpop.xlane.xlu0 %6752
        %v6754 = vsub.f32 %v6635, %v6753
        %v6755 = vmul.f32 %v6754, 1.442695
        %v6756 = vpow.pop %v6755
        %6758 = vrot.lane.b32.xlu0 %v6756, 106
        %v6759 = vpop.permute.xlu0 %6758
        %v6761 = vsel %vm6639, %v6759, 0.0
        %6762 = vadd.xlane.f32.xlu0 %v6761
        %v6763 = vpop.xlane.xlu0 %6762
        %v6764 = vrcp.pop %v6763
        %v6765 = vmul.f32 %v6756, %v6764
        %6766 = vst.msk [vmem:[%s361 + $0x8] sm:$0xff] %vm6750, %v6765
        %vm6767 = vcmask 589176
        %v6768 = vsel %vm6767, %v6635, -inf
        %6769 = vmax.xlane.f32.xlu0 %v6768
        %v6770 = vpop.xlane.xlu0 %6769
        %v6771 = vsub.f32 %v6635, %v6770
        %v6772 = vmul.f32 %v6771, 1.442695
        %v6773 = vpow.pop %v6772
        %6775 = vrot.lane.b32.xlu0 %v6773, 81
        %v6776 = vpop.permute.xlu0 %6775
        %v6778 = vsel %vm6639, %v6776, 0.0
        %6779 = vadd.xlane.f32.xlu0 %v6778
        %v6780 = vpop.xlane.xlu0 %6779
        %v6781 = vrcp.pop %v6780
        %v6782 = vmul.f32 %v6773, %v6781
        %6783 = vst.msk [vmem:[%s361 + $0x8] sm:$0xff] %vm6767, %v6782
        %s6784 = sand.u32 %s187, 1
        %s6785 = scalar_lea.sflag [#allocation4], %s6784
        %s6786 = sand.u32 %s187, 1
        %s6787 = smul.addr %s6786, 16
        %s6788 = scalar_lea.vmem [#allocation13], %s6787
        // Predicated region
        $region73: #{tpu_custom_call.1} parent=47 // pred_check
          %p6789 = pneg %p197
        $region74: #{tpu_custom_call.1} parent=47 // pred_check_branch
          %6791 = sbr.rel (%p6789) target = $region76
        $region75: #{tpu_custom_call.1} parent=47 // pred_region
          %s6793 = ssub.s32 256, 256
          %6794 = vsyncadd %s6785, %s6793
          %s6795 = smul.addr %s27, 2
          %s6796 = smul.addr %s6795, 128
          %s6797 = scalar_lea.hbm %s7, %s6796
          %s6799 = sshll.u32 %s6788, 4
          %s6800 = int_to_ptr.vmem [resolvable:$true] %s6799
          %6802 = dma.vmem_to_hbm [thread:$0]  %s6800, 256, %s6797, %s6785
        $region76: #{tpu_custom_call.1} parent=47 // pred_fallthru
          _
      $region48: #{tpu_custom_call.1} parent=5 // pred_fallthru
        _
      %p6803 = scmp.le.s32.totalorder 2, %s22
      // Predicated region
      $region77: #{tpu_custom_call.1} parent=5 // pred_check
        %p6804 = pneg %p6803
      $region78: #{tpu_custom_call.1} parent=5 // pred_check_branch
        %6806 = sbr.rel (%p6804) target = $region80
      $region79: #{tpu_custom_call.1} parent=5 // pred_region
        %s6807 = ssub.s32 %s22, 2
        // Predicated region
        $region81: #{tpu_custom_call.1} parent=79 // pred_check
          %p6808 = pneg %p203
        $region82: #{tpu_custom_call.1} parent=79 // pred_check_branch
          %6810 = sbr.rel (%p6808) target = $region84
        $region83: #{tpu_custom_call.1} parent=79 // pred_region
          %s6811 = sand.u32 %s188, 1
          %s6812 = scalar_lea.sflag [#allocation4], %s6811
          %s6813 = sand.u32 %s188, 1
          %s6814 = smul.addr %s6813, 16
          %s6815 = scalar_lea.vmem [#allocation13], %s6814
          %6816 = dma.done %s6812, 256
        $region84: #{tpu_custom_call.1} parent=79 // pred_fallthru
          _
      $region80: #{tpu_custom_call.1} parent=5 // pred_fallthru
        _
    $region6: #{tpu_custom_call.1} parent=1 // loop_footer
      %s26 = sadd.s32 1, %s22
    $region7: #{tpu_custom_call.1} parent=1 // loop_footer_branch
      %21 = sbr.rel target = $region3
    $region8: #{tpu_custom_call.1} parent=1 // loop_exit
      _
    %6817 = vsyncpa [#allocation3], 1
    %s6818 = scalar_lea.sflag [#allocation3], 1
    %6819 = vsyncpa %s6818, 1
    %6820 = vsyncpa [#allocation6], 1
    %6821 = vsyncpa [#allocation9], 1
    %6822 = vsyncpa [#allocation12], 1
    %6823 = vsyncpa [#allocation4], 1
    %s6824 = scalar_lea.sflag [#allocation4], 1
    %6825 = vsyncpa %s6824, 1

</llo_original>
